<compile_context>
chip_gen: v5e
topology: v5e:2x2
jax: 0.10.0
libtpu: 0.0.40
codegen_flags: <defaults>
</compile_context>

<pallas_src>
import jax
import jax.numpy as jnp
from jax.experimental import pallas as pl
from jax.experimental.pallas import tpu as pltpu

_LANES = 128                     # lane (fast) axis width of a vreg
_SUBLANE_MULT = 32               # dtype-aware sublane rounding (covers f32/bf16/int8)
_TR_MAX_ROWS = 8192              # 8192 rows = 4 MiB f32 / 2 MiB bf16 per operand block
_PALLAS_MIN_ELEMS = 128 * 1024   # below this, fused XLA beats a kernel launch
_VMEM_LIMIT = 40 * 1024 * 1024   # explicit scoped-VMEM budget (safe on v5e/v6e/v7x)


def _make_kernel(tr, steps_per_shard, total_rows, pair_rows):
    """Fused list-MSE kernel over a (total_rows, 128) slab pair.

    pair_rows: static tuple of (start_row, end_row, 1/numel) per list pair.
    Accumulates scale * (x - y)^2 into the output-resident (8, 128) f32 block.
    """

    def kernel(x_ref, y_ref, out_ref):
        k = pl.program_id(1)

        @pl.when(k == 0)
        def _init():
            out_ref[...] = jnp.zeros_like(out_ref)

        # Global row indices of this tile (shard-major, then inner step).
        tile = pl.program_id(0) * steps_per_shard + k
        rows = tile * tr + jax.lax.broadcasted_iota(jnp.int32, (tr, 1), 0)

        # Static per-pair scale table -> per-row weight (pure VPU selects).
        w = jnp.zeros((tr, 1), jnp.float32)
        for start, end, scale in pair_rows:
            w = jnp.where((rows >= start) & (rows < end),
                          jnp.float32(scale), w)

        # Cast in-kernel (HBM traffic stays in native dtype), subtract, square.
        d = x_ref[...].astype(jnp.float32) - y_ref[...].astype(jnp.float32)

        # Rows >= total_rows (ragged last tile / clamped empty shard tiles) are
        # masked; per-pair lane padding is zero in BOTH slabs, so d == 0 there.
        contrib = jnp.where(rows < total_rows, w * (d * d), 0.0)

        # vreg-shaped accumulation: sum over the leading dim is pure VPU adds
        # (no per-step XLU reduce, no scalar RMW dependency).
        out_ref[...] += contrib.reshape(tr // 8, 8, _LANES).sum(axis=0)

    return kernel


def _list_mse_pallas(input_list, target_list, numels, slab_dtype):
    """One fused pallas_call computing sum_p mean((x_p - y_p)^2)."""
    # Static row layout of the slab.
    pair_rows = []
    row = 0
    for n in numels:
        r = -(-n // _LANES)                       # rows owned by this pair
        pair_rows.append((row, row + r, 1.0 / float(n)))
        row += r
    total_rows = row

    def build_slab(arrs):
        pieces = []
        for a, n in zip(arrs, numels):
            pieces.append(jnp.ravel(a).astype(slab_dtype))
            pad = -(-n // _LANES) * _LANES - n    # <= 127 elements per pair
            if pad:
                pieces.append(jnp.zeros((pad,), slab_dtype))
        flat = pieces[0] if len(pieces) == 1 else jnp.concatenate(pieces)
        return flat.reshape(total_rows, _LANES)   # lane-dense layout

    x2 = build_slab(input_list)
    y2 = build_slab(target_list)

    # Tile rows: as big as the VMEM budget allows, never exceeding the slab.
    tr = max(_SUBLANE_MULT,
             min(_TR_MAX_ROWS, (total_rows // _SUBLANE_MULT) * _SUBLANE_MULT))
    total_steps = -(-total_rows // tr)
    num_shards = 2 if total_steps >= 2 else 1     # v7x: one shard per TensorCore
    steps_per_shard = -(-total_steps // num_shards)
    max_tile = total_steps - 1

    def xy_map(s, k):
        # Clamp so fully-empty shard tiles re-read a valid tile (masked in-kernel).
        return (jnp.minimum(s * steps_per_shard + k, max_tile), 0)

    out = pl.pallas_call(
        _make_kernel(tr, steps_per_shard, total_rows, tuple(pair_rows)),
        out_shape=jax.ShapeDtypeStruct((num_shards * 8, _LANES), jnp.float32),
        grid=(num_shards, steps_per_shard),
        in_specs=[
            pl.BlockSpec((tr, _LANES), xy_map),
            pl.BlockSpec((tr, _LANES), xy_map),
        ],
        out_specs=pl.BlockSpec((8, _LANES), lambda s, k: (s, 0)),
        compiler_params=pltpu.CompilerParams(
            dimension_semantics=("parallel", "arbitrary"),
            vmem_limit_bytes=_VMEM_LIMIT,
        ),
    )(x2, y2)

    # Single tiny cross-lane reduce of the per-shard partial sums.
    return jnp.sum(out)


def list_mse_loss(input_list, target_list):
    """Sum of per-pair mean-squared errors, shape (1,) like the torch module."""
    if len(input_list) == 0:
        return jnp.zeros((1,), jnp.float32)
    assert len(input_list) == len(target_list)

    out_dtype = target_list[0].dtype
    if not jnp.issubdtype(out_dtype, jnp.floating):
        out_dtype = jnp.float32

    numels = [int(x.size) for x in input_list]
    total_elems = sum(numels)

    if total_elems < _PALLAS_MIN_ELEMS:
        # Launch overhead dominates at this size; let XLA fuse it.
        total = jnp.zeros((), jnp.float32)
        for x, y in zip(input_list, target_list):
            xf = jnp.asarray(x, jnp.float32)
            yf = jnp.asarray(y, jnp.float32)
            total = total + jnp.mean((xf - yf) ** 2)
        return total.astype(out_dtype).reshape(1)

    slab_dtype = jnp.result_type(*input_list, *target_list)
    if not jnp.issubdtype(slab_dtype, jnp.floating):
        slab_dtype = jnp.float32

    total = _list_mse_pallas(input_list, target_list, numels, slab_dtype)
    return total.astype(out_dtype).reshape(1)


def _reference(input_list, target_list):
    total = jnp.zeros((), jnp.float32)
    for x, y in zip(input_list, target_list):
        xf = jnp.asarray(x, jnp.float32)
        yf = jnp.asarray(y, jnp.float32)
        total = total + jnp.mean((xf - yf) ** 2)
    return total


if __name__ == "__main__":
    key = jax.random.PRNGKey(0)
    ks = jax.random.split(key, 6)

    # One image-sized pair large enough to take the fused Pallas path
    # (>= 128K elements, per the review's dispatch threshold), plus two small
    # pairs that ride along in the same slab / same launch.
    x1 = jax.random.normal(ks[0], (2, 4, 128, 128), dtype=jnp.float32)
    t1 = jax.random.normal(ks[1], (2, 4, 128, 128), dtype=jnp.float32)
    x2 = jax.random.normal(ks[2], (2, 8, 32), dtype=jnp.float32)
    t2 = jax.random.normal(ks[3], (2, 8, 32), dtype=jnp.float32)
    x3 = jax.random.normal(ks[4], (3, 5), dtype=jnp.float32)
    t3 = jax.random.normal(ks[5], (3, 5), dtype=jnp.float32)

    inputs = [x1, x2, x3]
    targets = [t1, t2, t3]

    # Fused multi-pair Pallas path.
    loss = jax.block_until_ready(list_mse_loss(inputs, targets))
    ref = _reference(inputs, targets)
    assert loss.shape == (1,), loss.shape
    assert jnp.allclose(loss[0], ref, atol=1e-4, rtol=1e-4), (loss, ref)

    # Single large pair (Pallas, zero-copy slab since numel % 128 == 0).
    loss_single = jax.block_until_ready(list_mse_loss([x1], [t1]))
    ref_single = _reference([x1], [t1])
    assert jnp.allclose(loss_single[0], ref_single, atol=1e-4, rtol=1e-4), (
        loss_single, ref_single)

    # Small list -> fused XLA fallback path.
    loss_small = jax.block_until_ready(list_mse_loss([x2, x3], [t2, t3]))
    ref_small = _reference([x2, x3], [t2, t3])
    assert jnp.allclose(loss_small[0], ref_small, atol=1e-5, rtol=1e-5), (
        loss_small, ref_small)

    print("KERNEL_OK")
</pallas_src>

<mosaic_0001>
module attributes {stable_mosaic.version = 11 : i64} {
  func.func @kernel(%arg0: i32, %arg1: i32, %arg2: memref<1024x128xf32, #tpu.memory_space<vmem>>, %arg3: memref<1024x128xf32, #tpu.memory_space<vmem>>, %arg4: memref<8x128xf32, #tpu.memory_space<vmem>>) attributes {dimension_semantics = [#tpu.dimension_semantics<parallel>, #tpu.dimension_semantics<arbitrary>], iteration_bounds = array<i64: 2, 1>, scalar_prefetch = 0 : i64, scratch_operands = 0 : i64, tpu.core_type = #tpu.core_type<tc>, window_params = [{transform_indices = @transform_0, window_bounds = array<i64: 1024, 128>}, {transform_indices = @transform_1, window_bounds = array<i64: 1024, 128>}, {transform_indices = @transform_2, window_bounds = array<i64: 8, 128>}]} {
    %c0_i32 = arith.constant 0 : i32
    %0 = arith.cmpi eq, %arg1, %c0_i32 : i32
    %1 = arith.extui %0 : i1 to i32
    %c0_i32_0 = arith.constant 0 : i32
    %2 = arith.cmpi ne, %1, %c0_i32_0 : i32
    scf.if %2 {
      %cst_18 = arith.constant 0.000000e+00 : f32
      %48 = vector.broadcast %cst_18 : f32 to vector<8x128xf32>
      %c0_19 = arith.constant 0 : index
      %c0_20 = arith.constant 0 : index
      %49 = vector.load %arg4[%c0_19, %c0_20] : memref<8x128xf32, #tpu.memory_space<vmem>>, vector<8x128xf32>
      tpu.vector_store %arg4[%c0_19, %c0_20], %48 {strides = array<i32>} : memref<8x128xf32, #tpu.memory_space<vmem>>, vector<8x128xf32>,
    } else {
    }
    %c1_i32 = arith.constant 1 : i32
    %3 = arith.muli %arg0, %c1_i32 : i32
    %4 = arith.addi %3, %arg1 : i32
    %c1024_i32 = arith.constant 1024 : i32
    %5 = arith.muli %4, %c1024_i32 : i32
    %6 = tpu.iota {dimensions = array<i32: 0>} : vector<1024x1xi32>
    %7 = vector.broadcast %5 : i32 to vector<1024x1xi32>
    %8 = arith.addi %7, %6 : vector<1024x1xi32>
    %cst = arith.constant 0.000000e+00 : f32
    %9 = vector.broadcast %cst : f32 to vector<1024x1xf32>
    %c0_i32_1 = arith.constant 0 : i32
    %10 = vector.broadcast %c0_i32_1 : i32 to vector<1024x1xi32>
    %11 = arith.cmpi sge, %8, %10 : vector<1024x1xi32>
    %c1024_i32_2 = arith.constant 1024 : i32
    %12 = vector.broadcast %c1024_i32_2 : i32 to vector<1024x1xi32>
    %13 = arith.cmpi slt, %8, %12 : vector<1024x1xi32>
    %14 = arith.andi %11, %13 : vector<1024x1xi1>
    %cst_3 = arith.constant 7.62939453E-6 : f32
    %15 = vector.broadcast %cst_3 : f32 to vector<1024x1xf32>
    %16 = arith.select %14, %15, %9 : vector<1024x1xi1>, vector<1024x1xf32>
    %c1024_i32_4 = arith.constant 1024 : i32
    %17 = vector.broadcast %c1024_i32_4 : i32 to vector<1024x1xi32>
    %18 = arith.cmpi sge, %8, %17 : vector<1024x1xi32>
    %c1028_i32 = arith.constant 1028 : i32
    %19 = vector.broadcast %c1028_i32 : i32 to vector<1024x1xi32>
    %20 = arith.cmpi slt, %8, %19 : vector<1024x1xi32>
    %21 = arith.andi %18, %20 : vector<1024x1xi1>
    %cst_5 = arith.constant 0.001953125 : f32
    %22 = vector.broadcast %cst_5 : f32 to vector<1024x1xf32>
    %23 = arith.select %21, %22, %16 : vector<1024x1xi1>, vector<1024x1xf32>
    %c1028_i32_6 = arith.constant 1028 : i32
    %24 = vector.broadcast %c1028_i32_6 : i32 to vector<1024x1xi32>
    %25 = arith.cmpi sge, %8, %24 : vector<1024x1xi32>
    %c1029_i32 = arith.constant 1029 : i32
    %26 = vector.broadcast %c1029_i32 : i32 to vector<1024x1xi32>
    %27 = arith.cmpi slt, %8, %26 : vector<1024x1xi32>
    %28 = arith.andi %25, %27 : vector<1024x1xi1>
    %cst_7 = arith.constant 0.0666666701 : f32
    %29 = vector.broadcast %cst_7 : f32 to vector<1024x1xf32>
    %30 = arith.select %28, %29, %23 : vector<1024x1xi1>, vector<1024x1xf32>
    %c0 = arith.constant 0 : index
    %c0_8 = arith.constant 0 : index
    %31 = vector.load %arg2[%c0, %c0_8] : memref<1024x128xf32, #tpu.memory_space<vmem>>, vector<1024x128xf32>
    %c0_9 = arith.constant 0 : index
    %c0_10 = arith.constant 0 : index
    %32 = vector.load %arg3[%c0_9, %c0_10] : memref<1024x128xf32, #tpu.memory_space<vmem>>, vector<1024x128xf32>
    %33 = arith.subf %31, %32 : vector<1024x128xf32>
    %c1029_i32_11 = arith.constant 1029 : i32
    %34 = vector.broadcast %c1029_i32_11 : i32 to vector<1024x1xi32>
    %35 = arith.cmpi slt, %8, %34 : vector<1024x1xi32>
    %36 = arith.mulf %33, %33 : vector<1024x128xf32>
    %37 = vector.broadcast %30 : vector<1024x1xf32> to vector<1024x128xf32>
    %38 = arith.mulf %37, %36 : vector<1024x128xf32>
    %cst_12 = arith.constant 0.000000e+00 : f32
    %39 = vector.shape_cast %35 : vector<1024x1xi1> to vector<1024x1xi1>
    %40 = vector.broadcast %39 : vector<1024x1xi1> to vector<1024x128xi1>
    %41 = vector.broadcast %cst_12 : f32 to vector<1024x128xf32>
    %42 = arith.select %40, %38, %41 : vector<1024x128xi1>, vector<1024x128xf32>
    %c0_13 = arith.constant 0 : index
    %c0_14 = arith.constant 0 : index
    %43 = vector.load %arg4[%c0_13, %c0_14] : memref<8x128xf32, #tpu.memory_space<vmem>>, vector<8x128xf32>
    %44 = vector.shape_cast %42 : vector<1024x128xf32> to vector<128x8x128xf32>
    %cst_15 = arith.constant dense<0.000000e+00> : vector<8x128xf32>
    %45 = vector.multi_reduction <add>, %44, %cst_15 [0] : vector<128x8x128xf32> to vector<8x128xf32>
    %46 = arith.addf %43, %45 : vector<8x128xf32>
    %c0_16 = arith.constant 0 : index
    %c0_17 = arith.constant 0 : index
    %47 = vector.load %arg4[%c0_16, %c0_17] : memref<8x128xf32, #tpu.memory_space<vmem>>, vector<8x128xf32>
    tpu.vector_store %arg4[%c0_16, %c0_17], %46 {strides = array<i32>} : memref<8x128xf32, #tpu.memory_space<vmem>>, vector<8x128xf32>,
    return
  }
  func.func @transform_0(%arg0: i32, %arg1: i32) -> (i32, i32) {
    %c1_i32 = arith.constant 1 : i32
    %0 = arith.muli %arg0, %c1_i32 : i32
    %1 = arith.addi %0, %arg1 : i32
    %c1_i32_0 = arith.constant 1 : i32
    %2 = arith.minsi %1, %c1_i32_0 : i32
    %c0_i32 = arith.constant 0 : i32
    %c0_i32_1 = arith.constant 0 : i32
    return %2, %c0_i32 : i32, i32
  }
  func.func @transform_1(%arg0: i32, %arg1: i32) -> (i32, i32) {
    %c1_i32 = arith.constant 1 : i32
    %0 = arith.muli %arg0, %c1_i32 : i32
    %1 = arith.addi %0, %arg1 : i32
    %c1_i32_0 = arith.constant 1 : i32
    %2 = arith.minsi %1, %c1_i32_0 : i32
    %c0_i32 = arith.constant 0 : i32
    %c0_i32_1 = arith.constant 0 : i32
    return %2, %c0_i32 : i32, i32
  }
  func.func @transform_2(%arg0: i32, %arg1: i32) -> (i32, i32) {
    %c0_i32 = arith.constant 0 : i32
    %c0_i32_0 = arith.constant 0 : i32
    return %arg0, %c0_i32 : i32, i32
  }
}

</mosaic_0001>

<llo_original>
// kernel: tpu_custom_call.1
$region0: #{tpu_custom_call.1}
  #allocation0 [shape = 'u32[]', space=smem, size = 0x4, offset = 0x4, fixed_abs, tag = 'smem constant byte address 0x4 - core index']
  #allocation1 [shape = 'u32[72,128]{1,0:T(1,128)}', space=vmem, size = 0x9000, scoped, tag = 'internal scratch']
  %s0 = inlined_call_operand.hbm [shape: f32[1029,128], index: 0, kind: input, shape index: {}]
  %s1 = inlined_call_operand.hbm [shape: f32[1029,128], index: 1, kind: input, shape index: {}]
  %s2 = inlined_call_operand.hbm [shape: f32[16,128], index: 2, kind: output, shape index: {}]
  %s3 = sld [smem:[#allocation0]]
  $region53: #{tpu_custom_call.1} parent=0
    _
  %s5 = ssub.s32 1, %s3
  %s6 = scalar_select 0, %s5, %s3
  $region1: #{tpu_custom_call.1} parent=0
    #allocation2 [shape = 'u8[1048576]{0}', space=vmem, size = 0x100000, scoped, tag = 'input window, operand 0']
    #allocation3 [shape = 's32[2]{0}', space=sflag, size = 0x8, scoped, tag = 'scoped memory for tpu_custom_call.1']
    #allocation4 [shape = 's32[2]{0}', space=sflag, size = 0x8, scoped, tag = 'scoped memory for tpu_custom_call.1']
    #allocation5 [shape = 'u8[1048576]{0}', space=vmem, size = 0x100000, scoped, tag = 'input window, operand 1']
    #allocation6 [shape = 's32[2]{0}', space=sflag, size = 0x8, scoped, tag = 'scoped memory for tpu_custom_call.1']
    #allocation7 [shape = 'u8[8192]{0}', space=vmem, size = 0x2000, scoped, tag = 'output window, operand 0']
    %7 = vsyncpa [#allocation3], 0
    %s8 = scalar_lea.sflag [#allocation3], 1
    %9 = vsyncpa %s8, 0
    %10 = vsyncpa [#allocation6], 0
    %s11 = scalar_lea.sflag [#allocation6], 1
    %12 = vsyncpa %s11, 0
    %13 = vsyncpa [#allocation4], 0
    %s14 = scalar_lea.sflag [#allocation4], 1
    %15 = vsyncpa %s14, 0
    loop: start=0, step=1, limit=4
    $region2: #{tpu_custom_call.1} parent=1 // loop_pre_header
      _
    $region3: #{tpu_custom_call.1} parent=1 // loop_header
      %s17 = sphi 0, %s21
      %p18 = scmp.ge.s32.totalorder %s17, 4
      %s24 = sphi 0, %s36
      %s25 = sphi 0, %s32
      %s26 = sphi 0, %s24
      %s27 = sphi 0, %s25
      %s28 = sphi 0, %s26
      %s29 = sphi 0, %s27
      %s45 = sphi 0, %s47
      %s48 = sphi 0, %s45
      %s49 = sphi 0, %s48
      %s65 = sphi 0, %s49
      %s77 = sphi 0, %s79
      %s80 = sphi 0, %s77
      %s81 = sphi 0, %s80
      %s97 = sphi 0, %s81
      %s103 = sphi 0, %s105
      %s106 = sphi 0, %s103
      %s107 = sphi 0, %s106
      %s123 = sphi 0, %s107
    $region4: #{tpu_custom_call.1} parent=1 // loop_header_branch
      %20 = sbr.rel (%p18) target = $region8
    $region5: #{tpu_custom_call.1} parent=1 // loop_body
      %s22 = ssub.s32 %s17, 1
      %s23 = ssub.s32 %s17, 2
      %s30 = sadd.s32 1, %s25
      %p31 = scmp.ge.s32.totalorder %s30, 1
      %s32 = scalar_select %p31, 0, %s30
      %s33 = sadd.s32 1, %s24
      %s34 = scalar_select %p31, %s33, %s24
      %p35 = scmp.ge.s32.totalorder %s34, 2
      %s36 = scalar_select %p35, 0, %s34
      %s37 = sadd.s32 %s24, %s25
      %p38 = scmp.lt.s32.totalorder %s37, 1
      %s39 = scalar_select %p38, %s37, 1
      %s40 = sadd.s32 %s36, %s32
      %p41 = scmp.lt.s32.totalorder %s40, 1
      %s42 = scalar_select %p41, %s40, 1
      %s43 = ssub.s32 %s39, %s42
      %p44 = scmp.eq.s32.totalorder %s43, 0
      %s46 = sadd.s32 %s45, 1
      %s47 = scalar_select %p44, %s45, %s46
      %p50 = pneg %p44
      %p51 = scmp.eq.s32.totalorder %s17, 1
      %p52 = por %p50, %p51
      %p53 = scmp.ne.s32.totalorder %s45, %s48
      %p54 = scmp.eq.s32.totalorder %s17, 0
      %p55 = por %p53, %p54
      %p56 = scmp.ne.s32.totalorder %s45, %s48
      %p57 = scmp.eq.s32.totalorder %s22, 1
      %p58 = por %p56, %p57
      %p59 = scmp.ne.s32.totalorder %s48, %s49
      %p60 = scmp.eq.s32.totalorder %s22, 0
      %p61 = por %p59, %p60
      %p62 = scmp.ne.s32.totalorder %s48, %s49
      %p63 = scmp.eq.s32.totalorder %s23, 1
      %p64 = por %p62, %p63
      %p66 = scmp.ne.s32.totalorder %s49, %s65
      %p67 = scmp.eq.s32.totalorder %s23, 0
      %p68 = por %p66, %p67
      %s69 = sadd.s32 %s24, %s25
      %p70 = scmp.lt.s32.totalorder %s69, 1
      %s71 = scalar_select %p70, %s69, 1
      %s72 = sadd.s32 %s36, %s32
      %p73 = scmp.lt.s32.totalorder %s72, 1
      %s74 = scalar_select %p73, %s72, 1
      %s75 = ssub.s32 %s71, %s74
      %p76 = scmp.eq.s32.totalorder %s75, 0
      %s78 = sadd.s32 %s77, 1
      %s79 = scalar_select %p76, %s77, %s78
      %p82 = pneg %p76
      %p83 = scmp.eq.s32.totalorder %s17, 1
      %p84 = por %p82, %p83
      %p85 = scmp.ne.s32.totalorder %s77, %s80
      %p86 = scmp.eq.s32.totalorder %s17, 0
      %p87 = por %p85, %p86
      %p88 = scmp.ne.s32.totalorder %s77, %s80
      %p89 = scmp.eq.s32.totalorder %s22, 1
      %p90 = por %p88, %p89
      %p91 = scmp.ne.s32.totalorder %s80, %s81
      %p92 = scmp.eq.s32.totalorder %s22, 0
      %p93 = por %p91, %p92
      %p94 = scmp.ne.s32.totalorder %s80, %s81
      %p95 = scmp.eq.s32.totalorder %s23, 1
      %p96 = por %p94, %p95
      %p98 = scmp.ne.s32.totalorder %s81, %s97
      %p99 = scmp.eq.s32.totalorder %s23, 0
      %p100 = por %p98, %p99
      %s101 = ssub.s32 %s24, %s36
      %p102 = scmp.eq.s32.totalorder %s101, 0
      %s104 = sadd.s32 %s103, 1
      %s105 = scalar_select %p102, %s103, %s104
      %p108 = pneg %p102
      %p109 = scmp.eq.s32.totalorder %s17, 1
      %p110 = por %p108, %p109
      %p111 = scmp.ne.s32.totalorder %s103, %s106
      %p112 = scmp.eq.s32.totalorder %s17, 0
      %p113 = por %p111, %p112
      %p114 = scmp.ne.s32.totalorder %s103, %s106
      %p115 = scmp.eq.s32.totalorder %s22, 1
      %p116 = por %p114, %p115
      %p117 = scmp.ne.s32.totalorder %s106, %s107
      %p118 = scmp.eq.s32.totalorder %s22, 0
      %p119 = por %p117, %p118
      %p120 = scmp.ne.s32.totalorder %s106, %s107
      %p121 = scmp.eq.s32.totalorder %s23, 1
      %p122 = por %p120, %p121
      %p124 = scmp.ne.s32.totalorder %s107, %s123
      %p125 = scmp.eq.s32.totalorder %s23, 0
      %p126 = por %p124, %p125
      %p127 = scmp.le.s32.totalorder 1, %s17
      %p128 = scmp.lt.s32.totalorder %s17, 3
      %p129 = pnand %p127, %p128
      %p130 = pneg %p129
      // Predicated region
      $region9: #{tpu_custom_call.1} parent=5 // pred_check
        _
      $region10: #{tpu_custom_call.1} parent=5 // pred_check_branch
        %132 = sbr.rel (%p129) target = $region12
      $region11: #{tpu_custom_call.1} parent=5 // pred_region
        %s133 = ssub.s32 %s17, 1
      $region12: #{tpu_custom_call.1} parent=5 // pred_fallthru
        _
      %p134 = scmp.lt.s32.totalorder %s17, 2
      // Predicated region
      $region13: #{tpu_custom_call.1} parent=5 // pred_check
        %p135 = pneg %p134
      $region14: #{tpu_custom_call.1} parent=5 // pred_check_branch
        %137 = sbr.rel (%p135) target = $region16
      $region15: #{tpu_custom_call.1} parent=5 // pred_region
        // Predicated region
        $region17: #{tpu_custom_call.1} parent=15 // pred_check
          %p138 = pneg %p55
        $region18: #{tpu_custom_call.1} parent=15 // pred_check_branch
          %140 = sbr.rel (%p138) target = $region20
        $region19: #{tpu_custom_call.1} parent=15 // pred_region
          %s141 = sand.u32 %s45, 1
          %s142 = scalar_lea.sflag [#allocation3], %s141
          %s143 = sand.u32 %s45, 1
          %s144 = smul.addr %s143, 1024
          %s145 = scalar_lea.vmem [#allocation2], %s144
          %s146 = sadd.s32 %s24, %s25
          %p147 = scmp.lt.s32.totalorder %s146, 1
          %s148 = scalar_select %p147, %s146, 1
          %s149 = smul.u32 128, %s148
          %s150 = ssub.s32 129, %s149
          %p151 = scmp.lt.s32.totalorder %s150, 128
          %s152 = scalar_select %p151, %s150, 128
          %s153 = smul.u32 8, %s152
          %s154 = ssub.s32 1024, %s153
          %s155 = sshll.u32 %s154, 4
          %156 = vsyncadd %s142, %s155
          %p157 = scmp.ne.s32.totalorder 0, %s153
          %s158 = smul.addr %s149, 8
          %s159 = scalar_lea.hbm %s0, %s158
          %s160 = smul.u32 8, %s152
          %s161 = sshll.u32 %s159, 4
          %s162 = int_to_ptr.hbm [resolvable:$true] %s161
          %s163 = sshll.u32 %s145, 4
          %s164 = int_to_ptr.vmem [resolvable:$true] %s163
          %s165 = sshll.u32 %s160, 4
          %169 = dma.hbm_to_vmem [thread:$0]  (%p157), %s162, %s165, %s164, %s142, 128, 128, 8
        $region20: #{tpu_custom_call.1} parent=15 // pred_fallthru
          _
        // Predicated region
        $region21: #{tpu_custom_call.1} parent=15 // pred_check
          %p170 = pneg %p87
        $region22: #{tpu_custom_call.1} parent=15 // pred_check_branch
          %172 = sbr.rel (%p170) target = $region24
        $region23: #{tpu_custom_call.1} parent=15 // pred_region
          %s173 = sand.u32 %s77, 1
          %s174 = scalar_lea.sflag [#allocation6], %s173
          %s175 = sand.u32 %s77, 1
          %s176 = smul.addr %s175, 1024
          %s177 = scalar_lea.vmem [#allocation5], %s176
          %s178 = sadd.s32 %s24, %s25
          %p179 = scmp.lt.s32.totalorder %s178, 1
          %s180 = scalar_select %p179, %s178, 1
          %s181 = smul.u32 128, %s180
          %s182 = ssub.s32 129, %s181
          %p183 = scmp.lt.s32.totalorder %s182, 128
          %s184 = scalar_select %p183, %s182, 128
          %s185 = smul.u32 8, %s184
          %s186 = ssub.s32 1024, %s185
          %s187 = sshll.u32 %s186, 4
          %188 = vsyncadd %s174, %s187
          %p189 = scmp.ne.s32.totalorder 0, %s185
          %s190 = smul.addr %s181, 8
          %s191 = scalar_lea.hbm %s1, %s190
          %s192 = smul.u32 8, %s184
          %s193 = sshll.u32 %s191, 4
          %s194 = int_to_ptr.hbm [resolvable:$true] %s193
          %s195 = sshll.u32 %s177, 4
          %s196 = int_to_ptr.vmem [resolvable:$true] %s195
          %s197 = sshll.u32 %s192, 4
          %201 = dma.hbm_to_vmem [thread:$0]  (%p189), %s194, %s197, %s196, %s174, 128, 128, 8
        $region24: #{tpu_custom_call.1} parent=15 // pred_fallthru
          _
      $region16: #{tpu_custom_call.1} parent=5 // pred_fallthru
        _
      %p202 = scmp.le.s32.totalorder 1, %s17
      %p203 = scmp.lt.s32.totalorder %s17, 3
      %p204 = pnand %p202, %p203
      %p205 = pneg %p204
      // Predicated region
      $region25: #{tpu_custom_call.1} parent=5 // pred_check
        _
      $region26: #{tpu_custom_call.1} parent=5 // pred_check_branch
        %207 = sbr.rel (%p204) target = $region28
      $region27: #{tpu_custom_call.1} parent=5 // pred_region
        %s208 = ssub.s32 %s17, 1
        %s209 = sand.u32 %s48, 1
        %s210 = scalar_lea.sflag [#allocation3], %s209
        %s211 = sand.u32 %s48, 1
        %s212 = smul.addr %s211, 1024
        %s213 = scalar_lea.vmem [#allocation2], %s212
        // Predicated region
        $region29: #{tpu_custom_call.1} parent=27 // pred_check
          %p214 = pneg %p61
        $region30: #{tpu_custom_call.1} parent=27 // pred_check_branch
          %216 = sbr.rel (%p214) target = $region32
        $region31: #{tpu_custom_call.1} parent=27 // pred_region
          %218 = dma.done %s210, 16384
        $region32: #{tpu_custom_call.1} parent=27 // pred_fallthru
          _
        %s219 = sand.u32 %s80, 1
        %s220 = scalar_lea.sflag [#allocation6], %s219
        %s221 = sand.u32 %s80, 1
        %s222 = smul.addr %s221, 1024
        %s223 = scalar_lea.vmem [#allocation5], %s222
        // Predicated region
        $region33: #{tpu_custom_call.1} parent=27 // pred_check
          %p224 = pneg %p93
        $region34: #{tpu_custom_call.1} parent=27 // pred_check_branch
          %226 = sbr.rel (%p224) target = $region36
        $region35: #{tpu_custom_call.1} parent=27 // pred_region
          %228 = dma.done %s220, 16384
        $region36: #{tpu_custom_call.1} parent=27 // pred_fallthru
          _
        %s229 = sand.u32 %s48, 1
        %s230 = scalar_lea.sflag [#allocation3], %s229
        %s231 = sand.u32 %s48, 1
        %s232 = smul.addr %s231, 1024
        %s233 = scalar_lea.vmem [#allocation2], %s232
        %p234 = pneg %p61
        %p235 = pneg %p58
        %s236 = sand.u32 %s80, 1
        %s237 = scalar_lea.sflag [#allocation6], %s236
        %s238 = sand.u32 %s80, 1
        %s239 = smul.addr %s238, 1024
        %s240 = scalar_lea.vmem [#allocation5], %s239
        %p241 = pneg %p93
        %p242 = pneg %p90
        %p243 = pneg %p119
        %p244 = pneg %p116
        %s245 = sand.u32 %s106, 1
        %s246 = scalar_lea.sflag [#allocation4], %s245
        %s247 = sand.u32 %s106, 1
        %s248 = smul.addr %s247, 8
        %s249 = scalar_lea.vmem [#allocation7], %s248
        %s250 = sadd.s32 %s26, %s27
        %p251 = scmp.lt.s32.totalorder %s250, 1
        %s252 = scalar_select %p251, %s250, 1
        %s253 = smul.u32 128, %s252
        %s254 = ssub.s32 129, %s253
        %p255 = scmp.lt.s32.totalorder %s254, 128
        %s256 = scalar_select %p255, %s254, 128
        %s257 = smul.u32 8, %s256
        %s258 = sadd.s32 %s26, %s27
        %p259 = scmp.lt.s32.totalorder %s258, 1
        %s260 = scalar_select %p259, %s258, 1
        %s261 = smul.u32 128, %s260
        %s262 = ssub.s32 129, %s261
        %p263 = scmp.lt.s32.totalorder %s262, 128
        %s264 = scalar_select %p263, %s262, 128
        %s265 = smul.u32 8, %s264
        %p266 = scmp.eq.s32.totalorder %s27, 0
        // Predicated region
        $region37: #{tpu_custom_call.1} parent=27 // pred_check
          %p267 = pneg %p266
        $region38: #{tpu_custom_call.1} parent=27 // pred_check_branch
          %269 = sbr.rel (%p267) target = $region40
        $region39: #{tpu_custom_call.1} parent=27 // pred_region
          %270 = vst [vmem:[%s249] sm:$0xff] 0.0
        $region40: #{tpu_custom_call.1} parent=27 // pred_fallthru
          _
        %s271 = sadd.s32 %s26, %s27
        %s272 = smul.u32 %s271, 1024
        %v273 = vlaneseq
        %v274 = vshrl.u32 %v273, 7
        %v275 = vadd.s32 %v274, 8
        %v276 = vadd.s32 %v274, 16
        %v277 = vadd.s32 %v274, 24
        %v278 = vadd.s32 %v274, 32
        %v279 = vadd.s32 %v274, 40
        %v280 = vadd.s32 %v274, 48
        %v281 = vadd.s32 %v274, 56
        %v282 = vadd.s32 %v274, 64
        %v283 = vadd.s32 %v274, 72
        %v284 = vadd.s32 %v274, 80
        %v285 = vadd.s32 %v274, 88
        %v286 = vadd.s32 %v274, 96
        %v287 = vadd.s32 %v274, 104
        %v288 = vadd.s32 %v274, 112
        %v289 = vadd.s32 %v274, 120
        %v290 = vadd.s32 %v274, 128
        %v291 = vadd.s32 %v274, 136
        %v292 = vadd.s32 %v274, 144
        %v293 = vadd.s32 %v274, 152
        %v294 = vadd.s32 %v274, 160
        %v295 = vadd.s32 %v274, 168
        %v296 = vadd.s32 %v274, 176
        %v297 = vadd.s32 %v274, 184
        %v298 = vadd.s32 %v274, 192
        %v299 = vadd.s32 %v274, 200
        %v300 = vadd.s32 %v274, 208
        %v301 = vadd.s32 %v274, 216
        %v302 = vadd.s32 %v274, 224
        %v303 = vadd.s32 %v274, 232
        %v304 = vadd.s32 %v274, 240
        %v305 = vadd.s32 %v274, 248
        %v306 = vadd.s32 %v274, 256
        %v307 = vadd.s32 %v274, 264
        %v308 = vadd.s32 %v274, 272
        %v309 = vadd.s32 %v274, 280
        %v310 = vadd.s32 %v274, 288
        %v311 = vadd.s32 %v274, 296
        %v312 = vadd.s32 %v274, 304
        %v313 = vadd.s32 %v274, 312
        %v314 = vadd.s32 %v274, 320
        %v315 = vadd.s32 %v274, 328
        %v316 = vadd.s32 %v274, 336
        %v317 = vadd.s32 %v274, 344
        %v318 = vadd.s32 %v274, 352
        %v319 = vadd.s32 %v274, 360
        %v320 = vadd.s32 %v274, 368
        %v321 = vadd.s32 %v274, 376
        %v322 = vadd.s32 %v274, 384
        %v323 = vadd.s32 %v274, 392
        %v324 = vadd.s32 %v274, 400
        %v325 = vadd.s32 %v274, 408
        %v326 = vadd.s32 %v274, 416
        %v327 = vadd.s32 %v274, 424
        %v328 = vadd.s32 %v274, 432
        %v329 = vadd.s32 %v274, 440
        %v330 = vadd.s32 %v274, 448
        %v331 = vadd.s32 %v274, 456
        %v332 = vadd.s32 %v274, 464
        %v333 = vadd.s32 %v274, 472
        %v334 = vadd.s32 %v274, 480
        %v335 = vadd.s32 %v274, 488
        %v336 = vadd.s32 %v274, 496
        %v337 = vadd.s32 %v274, 504
        %v338 = vadd.s32 %v274, 512
        %v339 = vadd.s32 %v274, 520
        %v340 = vadd.s32 %v274, 528
        %v341 = vadd.s32 %v274, 536
        %v342 = vadd.s32 %v274, 544
        %v343 = vadd.s32 %v274, 552
        %v344 = vadd.s32 %v274, 560
        %v345 = vadd.s32 %v274, 568
        %v346 = vadd.s32 %v274, 576
        %v347 = vadd.s32 %v274, 584
        %v348 = vadd.s32 %v274, 592
        %v349 = vadd.s32 %v274, 600
        %v350 = vadd.s32 %v274, 608
        %v351 = vadd.s32 %v274, 616
        %v352 = vadd.s32 %v274, 624
        %v353 = vadd.s32 %v274, 632
        %v354 = vadd.s32 %v274, 640
        %v355 = vadd.s32 %v274, 648
        %v356 = vadd.s32 %v274, 656
        %v357 = vadd.s32 %v274, 664
        %v358 = vadd.s32 %v274, 672
        %v359 = vadd.s32 %v274, 680
        %v360 = vadd.s32 %v274, 688
        %v361 = vadd.s32 %v274, 696
        %v362 = vadd.s32 %v274, 704
        %v363 = vadd.s32 %v274, 712
        %v364 = vadd.s32 %v274, 720
        %v365 = vadd.s32 %v274, 728
        %v366 = vadd.s32 %v274, 736
        %v367 = vadd.s32 %v274, 744
        %v368 = vadd.s32 %v274, 752
        %v369 = vadd.s32 %v274, 760
        %v370 = vadd.s32 %v274, 768
        %v371 = vadd.s32 %v274, 776
        %v372 = vadd.s32 %v274, 784
        %v373 = vadd.s32 %v274, 792
        %v374 = vadd.s32 %v274, 800
        %v375 = vadd.s32 %v274, 808
        %v376 = vadd.s32 %v274, 816
        %v377 = vadd.s32 %v274, 824
        %v378 = vadd.s32 %v274, 832
        %v379 = vadd.s32 %v274, 840
        %v380 = vadd.s32 %v274, 848
        %v381 = vadd.s32 %v274, 856
        %v382 = vadd.s32 %v274, 864
        %v383 = vadd.s32 %v274, 872
        %v384 = vadd.s32 %v274, 880
        %v385 = vadd.s32 %v274, 888
        %v386 = vadd.s32 %v274, 896
        %v387 = vadd.s32 %v274, 904
        %v388 = vadd.s32 %v274, 912
        %v389 = vadd.s32 %v274, 920
        %v390 = vadd.s32 %v274, 928
        %v391 = vadd.s32 %v274, 936
        %v392 = vadd.s32 %v274, 944
        %v393 = vadd.s32 %v274, 952
        %v394 = vadd.s32 %v274, 960
        %v395 = vadd.s32 %v274, 968
        %v396 = vadd.s32 %v274, 976
        %v397 = vadd.s32 %v274, 984
        %v398 = vadd.s32 %v274, 992
        %v399 = vadd.s32 %v274, 1000
        %v400 = vadd.s32 %v274, 1008
        %v401 = vadd.s32 %v274, 1016
        %v402 = vstv %s272
        %v403 = vadd.s32 %v402, %v274
        %v404 = vadd.s32 %v402, %v275
        %v405 = vadd.s32 %v402, %v276
        %v406 = vadd.s32 %v402, %v277
        %v407 = vadd.s32 %v402, %v278
        %v408 = vadd.s32 %v402, %v279
        %v409 = vadd.s32 %v402, %v280
        %v410 = vadd.s32 %v402, %v281
        %v411 = vadd.s32 %v402, %v282
        %v412 = vadd.s32 %v402, %v283
        %v413 = vadd.s32 %v402, %v284
        %v414 = vadd.s32 %v402, %v285
        %v415 = vadd.s32 %v402, %v286
        %v416 = vadd.s32 %v402, %v287
        %v417 = vadd.s32 %v402, %v288
        %v418 = vadd.s32 %v402, %v289
        %v419 = vadd.s32 %v402, %v290
        %v420 = vadd.s32 %v402, %v291
        %v421 = vadd.s32 %v402, %v292
        %v422 = vadd.s32 %v402, %v293
        %v423 = vadd.s32 %v402, %v294
        %v424 = vadd.s32 %v402, %v295
        %v425 = vadd.s32 %v402, %v296
        %v426 = vadd.s32 %v402, %v297
        %v427 = vadd.s32 %v402, %v298
        %v428 = vadd.s32 %v402, %v299
        %v429 = vadd.s32 %v402, %v300
        %v430 = vadd.s32 %v402, %v301
        %v431 = vadd.s32 %v402, %v302
        %v432 = vadd.s32 %v402, %v303
        %v433 = vadd.s32 %v402, %v304
        %v434 = vadd.s32 %v402, %v305
        %v435 = vadd.s32 %v402, %v306
        %v436 = vadd.s32 %v402, %v307
        %v437 = vadd.s32 %v402, %v308
        %v438 = vadd.s32 %v402, %v309
        %v439 = vadd.s32 %v402, %v310
        %v440 = vadd.s32 %v402, %v311
        %v441 = vadd.s32 %v402, %v312
        %v442 = vadd.s32 %v402, %v313
        %v443 = vadd.s32 %v402, %v314
        %v444 = vadd.s32 %v402, %v315
        %v445 = vadd.s32 %v402, %v316
        %v446 = vadd.s32 %v402, %v317
        %v447 = vadd.s32 %v402, %v318
        %v448 = vadd.s32 %v402, %v319
        %v449 = vadd.s32 %v402, %v320
        %v450 = vadd.s32 %v402, %v321
        %v451 = vadd.s32 %v402, %v322
        %v452 = vadd.s32 %v402, %v323
        %v453 = vadd.s32 %v402, %v324
        %v454 = vadd.s32 %v402, %v325
        %v455 = vadd.s32 %v402, %v326
        %v456 = vadd.s32 %v402, %v327
        %v457 = vadd.s32 %v402, %v328
        %v458 = vadd.s32 %v402, %v329
        %v459 = vadd.s32 %v402, %v330
        %v460 = vadd.s32 %v402, %v331
        %v461 = vadd.s32 %v402, %v332
        %v462 = vadd.s32 %v402, %v333
        %v463 = vadd.s32 %v402, %v334
        %v464 = vadd.s32 %v402, %v335
        %v465 = vadd.s32 %v402, %v336
        %v466 = vadd.s32 %v402, %v337
        %v467 = vadd.s32 %v402, %v338
        %v468 = vadd.s32 %v402, %v339
        %v469 = vadd.s32 %v402, %v340
        %v470 = vadd.s32 %v402, %v341
        %v471 = vadd.s32 %v402, %v342
        %v472 = vadd.s32 %v402, %v343
        %v473 = vadd.s32 %v402, %v344
        %v474 = vadd.s32 %v402, %v345
        %v475 = vadd.s32 %v402, %v346
        %v476 = vadd.s32 %v402, %v347
        %v477 = vadd.s32 %v402, %v348
        %v478 = vadd.s32 %v402, %v349
        %v479 = vadd.s32 %v402, %v350
        %v480 = vadd.s32 %v402, %v351
        %v481 = vadd.s32 %v402, %v352
        %v482 = vadd.s32 %v402, %v353
        %v483 = vadd.s32 %v402, %v354
        %v484 = vadd.s32 %v402, %v355
        %v485 = vadd.s32 %v402, %v356
        %v486 = vadd.s32 %v402, %v357
        %v487 = vadd.s32 %v402, %v358
        %v488 = vadd.s32 %v402, %v359
        %v489 = vadd.s32 %v402, %v360
        %v490 = vadd.s32 %v402, %v361
        %v491 = vadd.s32 %v402, %v362
        %v492 = vadd.s32 %v402, %v363
        %v493 = vadd.s32 %v402, %v364
        %v494 = vadd.s32 %v402, %v365
        %v495 = vadd.s32 %v402, %v366
        %v496 = vadd.s32 %v402, %v367
        %v497 = vadd.s32 %v402, %v368
        %v498 = vadd.s32 %v402, %v369
        %v499 = vadd.s32 %v402, %v370
        %v500 = vadd.s32 %v402, %v371
        %v501 = vadd.s32 %v402, %v372
        %v502 = vadd.s32 %v402, %v373
        %v503 = vadd.s32 %v402, %v374
        %v504 = vadd.s32 %v402, %v375
        %v505 = vadd.s32 %v402, %v376
        %v506 = vadd.s32 %v402, %v377
        %v507 = vadd.s32 %v402, %v378
        %v508 = vadd.s32 %v402, %v379
        %v509 = vadd.s32 %v402, %v380
        %v510 = vadd.s32 %v402, %v381
        %v511 = vadd.s32 %v402, %v382
        %v512 = vadd.s32 %v402, %v383
        %v513 = vadd.s32 %v402, %v384
        %v514 = vadd.s32 %v402, %v385
        %v515 = vadd.s32 %v402, %v386
        %v516 = vadd.s32 %v402, %v387
        %v517 = vadd.s32 %v402, %v388
        %v518 = vadd.s32 %v402, %v389
        %v519 = vadd.s32 %v402, %v390
        %v520 = vadd.s32 %v402, %v391
        %v521 = vadd.s32 %v402, %v392
        %v522 = vadd.s32 %v402, %v393
        %v523 = vadd.s32 %v402, %v394
        %v524 = vadd.s32 %v402, %v395
        %v525 = vadd.s32 %v402, %v396
        %v526 = vadd.s32 %v402, %v397
        %v527 = vadd.s32 %v402, %v398
        %v528 = vadd.s32 %v402, %v399
        %v529 = vadd.s32 %v402, %v400
        %v530 = vadd.s32 %v402, %v401
        %vm531 = vcmp.ge.s32.totalorder %v403, 0
        %vm532 = vcmp.ge.s32.totalorder %v404, 0
        %vm533 = vcmp.ge.s32.totalorder %v405, 0
        %vm534 = vcmp.ge.s32.totalorder %v406, 0
        %vm535 = vcmp.ge.s32.totalorder %v407, 0
        %vm536 = vcmp.ge.s32.totalorder %v408, 0
        %vm537 = vcmp.ge.s32.totalorder %v409, 0
        %vm538 = vcmp.ge.s32.totalorder %v410, 0
        %vm539 = vcmp.ge.s32.totalorder %v411, 0
        %vm540 = vcmp.ge.s32.totalorder %v412, 0
        %vm541 = vcmp.ge.s32.totalorder %v413, 0
        %vm542 = vcmp.ge.s32.totalorder %v414, 0
        %vm543 = vcmp.ge.s32.totalorder %v415, 0
        %vm544 = vcmp.ge.s32.totalorder %v416, 0
        %vm545 = vcmp.ge.s32.totalorder %v417, 0
        %vm546 = vcmp.ge.s32.totalorder %v418, 0
        %vm547 = vcmp.ge.s32.totalorder %v419, 0
        %vm548 = vcmp.ge.s32.totalorder %v420, 0
        %vm549 = vcmp.ge.s32.totalorder %v421, 0
        %vm550 = vcmp.ge.s32.totalorder %v422, 0
        %vm551 = vcmp.ge.s32.totalorder %v423, 0
        %vm552 = vcmp.ge.s32.totalorder %v424, 0
        %vm553 = vcmp.ge.s32.totalorder %v425, 0
        %vm554 = vcmp.ge.s32.totalorder %v426, 0
        %vm555 = vcmp.ge.s32.totalorder %v427, 0
        %vm556 = vcmp.ge.s32.totalorder %v428, 0
        %vm557 = vcmp.ge.s32.totalorder %v429, 0
        %vm558 = vcmp.ge.s32.totalorder %v430, 0
        %vm559 = vcmp.ge.s32.totalorder %v431, 0
        %vm560 = vcmp.ge.s32.totalorder %v432, 0
        %vm561 = vcmp.ge.s32.totalorder %v433, 0
        %vm562 = vcmp.ge.s32.totalorder %v434, 0
        %vm563 = vcmp.ge.s32.totalorder %v435, 0
        %vm564 = vcmp.ge.s32.totalorder %v436, 0
        %vm565 = vcmp.ge.s32.totalorder %v437, 0
        %vm566 = vcmp.ge.s32.totalorder %v438, 0
        %vm567 = vcmp.ge.s32.totalorder %v439, 0
        %vm568 = vcmp.ge.s32.totalorder %v440, 0
        %vm569 = vcmp.ge.s32.totalorder %v441, 0
        %vm570 = vcmp.ge.s32.totalorder %v442, 0
        %vm571 = vcmp.ge.s32.totalorder %v443, 0
        %vm572 = vcmp.ge.s32.totalorder %v444, 0
        %vm573 = vcmp.ge.s32.totalorder %v445, 0
        %vm574 = vcmp.ge.s32.totalorder %v446, 0
        %vm575 = vcmp.ge.s32.totalorder %v447, 0
        %vm576 = vcmp.ge.s32.totalorder %v448, 0
        %vm577 = vcmp.ge.s32.totalorder %v449, 0
        %vm578 = vcmp.ge.s32.totalorder %v450, 0
        %vm579 = vcmp.ge.s32.totalorder %v451, 0
        %vm580 = vcmp.ge.s32.totalorder %v452, 0
        %vm581 = vcmp.ge.s32.totalorder %v453, 0
        %vm582 = vcmp.ge.s32.totalorder %v454, 0
        %vm583 = vcmp.ge.s32.totalorder %v455, 0
        %vm584 = vcmp.ge.s32.totalorder %v456, 0
        %vm585 = vcmp.ge.s32.totalorder %v457, 0
        %vm586 = vcmp.ge.s32.totalorder %v458, 0
        %vm587 = vcmp.ge.s32.totalorder %v459, 0
        %vm588 = vcmp.ge.s32.totalorder %v460, 0
        %vm589 = vcmp.ge.s32.totalorder %v461, 0
        %vm590 = vcmp.ge.s32.totalorder %v462, 0
        %vm591 = vcmp.ge.s32.totalorder %v463, 0
        %vm592 = vcmp.ge.s32.totalorder %v464, 0
        %vm593 = vcmp.ge.s32.totalorder %v465, 0
        %vm594 = vcmp.ge.s32.totalorder %v466, 0
        %vm595 = vcmp.ge.s32.totalorder %v467, 0
        %vm596 = vcmp.ge.s32.totalorder %v468, 0
        %vm597 = vcmp.ge.s32.totalorder %v469, 0
        %vm598 = vcmp.ge.s32.totalorder %v470, 0
        %vm599 = vcmp.ge.s32.totalorder %v471, 0
        %vm600 = vcmp.ge.s32.totalorder %v472, 0
        %vm601 = vcmp.ge.s32.totalorder %v473, 0
        %vm602 = vcmp.ge.s32.totalorder %v474, 0
        %vm603 = vcmp.ge.s32.totalorder %v475, 0
        %vm604 = vcmp.ge.s32.totalorder %v476, 0
        %vm605 = vcmp.ge.s32.totalorder %v477, 0
        %vm606 = vcmp.ge.s32.totalorder %v478, 0
        %vm607 = vcmp.ge.s32.totalorder %v479, 0
        %vm608 = vcmp.ge.s32.totalorder %v480, 0
        %vm609 = vcmp.ge.s32.totalorder %v481, 0
        %vm610 = vcmp.ge.s32.totalorder %v482, 0
        %vm611 = vcmp.ge.s32.totalorder %v483, 0
        %vm612 = vcmp.ge.s32.totalorder %v484, 0
        %vm613 = vcmp.ge.s32.totalorder %v485, 0
        %vm614 = vcmp.ge.s32.totalorder %v486, 0
        %vm615 = vcmp.ge.s32.totalorder %v487, 0
        %vm616 = vcmp.ge.s32.totalorder %v488, 0
        %vm617 = vcmp.ge.s32.totalorder %v489, 0
        %vm618 = vcmp.ge.s32.totalorder %v490, 0
        %vm619 = vcmp.ge.s32.totalorder %v491, 0
        %vm620 = vcmp.ge.s32.totalorder %v492, 0
        %vm621 = vcmp.ge.s32.totalorder %v493, 0
        %vm622 = vcmp.ge.s32.totalorder %v494, 0
        %vm623 = vcmp.ge.s32.totalorder %v495, 0
        %vm624 = vcmp.ge.s32.totalorder %v496, 0
        %vm625 = vcmp.ge.s32.totalorder %v497, 0
        %vm626 = vcmp.ge.s32.totalorder %v498, 0
        %vm627 = vcmp.ge.s32.totalorder %v499, 0
        %vm628 = vcmp.ge.s32.totalorder %v500, 0
        %vm629 = vcmp.ge.s32.totalorder %v501, 0
        %vm630 = vcmp.ge.s32.totalorder %v502, 0
        %vm631 = vcmp.ge.s32.totalorder %v503, 0
        %vm632 = vcmp.ge.s32.totalorder %v504, 0
        %vm633 = vcmp.ge.s32.totalorder %v505, 0
        %vm634 = vcmp.ge.s32.totalorder %v506, 0
        %vm635 = vcmp.ge.s32.totalorder %v507, 0
        %vm636 = vcmp.ge.s32.totalorder %v508, 0
        %vm637 = vcmp.ge.s32.totalorder %v509, 0
        %vm638 = vcmp.ge.s32.totalorder %v510, 0
        %vm639 = vcmp.ge.s32.totalorder %v511, 0
        %vm640 = vcmp.ge.s32.totalorder %v512, 0
        %vm641 = vcmp.ge.s32.totalorder %v513, 0
        %vm642 = vcmp.ge.s32.totalorder %v514, 0
        %vm643 = vcmp.ge.s32.totalorder %v515, 0
        %vm644 = vcmp.ge.s32.totalorder %v516, 0
        %vm645 = vcmp.ge.s32.totalorder %v517, 0
        %vm646 = vcmp.ge.s32.totalorder %v518, 0
        %vm647 = vcmp.ge.s32.totalorder %v519, 0
        %vm648 = vcmp.ge.s32.totalorder %v520, 0
        %vm649 = vcmp.ge.s32.totalorder %v521, 0
        %vm650 = vcmp.ge.s32.totalorder %v522, 0
        %vm651 = vcmp.ge.s32.totalorder %v523, 0
        %vm652 = vcmp.ge.s32.totalorder %v524, 0
        %vm653 = vcmp.ge.s32.totalorder %v525, 0
        %vm654 = vcmp.ge.s32.totalorder %v526, 0
        %vm655 = vcmp.ge.s32.totalorder %v527, 0
        %vm656 = vcmp.ge.s32.totalorder %v528, 0
        %vm657 = vcmp.ge.s32.totalorder %v529, 0
        %vm658 = vcmp.ge.s32.totalorder %v530, 0
        %vm659 = vcmp.lt.s32.totalorder %v403, 1024
        %vm660 = vcmp.lt.s32.totalorder %v404, 1024
        %vm661 = vcmp.lt.s32.totalorder %v405, 1024
        %vm662 = vcmp.lt.s32.totalorder %v406, 1024
        %vm663 = vcmp.lt.s32.totalorder %v407, 1024
        %vm664 = vcmp.lt.s32.totalorder %v408, 1024
        %vm665 = vcmp.lt.s32.totalorder %v409, 1024
        %vm666 = vcmp.lt.s32.totalorder %v410, 1024
        %vm667 = vcmp.lt.s32.totalorder %v411, 1024
        %vm668 = vcmp.lt.s32.totalorder %v412, 1024
        %vm669 = vcmp.lt.s32.totalorder %v413, 1024
        %vm670 = vcmp.lt.s32.totalorder %v414, 1024
        %vm671 = vcmp.lt.s32.totalorder %v415, 1024
        %vm672 = vcmp.lt.s32.totalorder %v416, 1024
        %vm673 = vcmp.lt.s32.totalorder %v417, 1024
        %vm674 = vcmp.lt.s32.totalorder %v418, 1024
        %vm675 = vcmp.lt.s32.totalorder %v419, 1024
        %vm676 = vcmp.lt.s32.totalorder %v420, 1024
        %vm677 = vcmp.lt.s32.totalorder %v421, 1024
        %vm678 = vcmp.lt.s32.totalorder %v422, 1024
        %vm679 = vcmp.lt.s32.totalorder %v423, 1024
        %vm680 = vcmp.lt.s32.totalorder %v424, 1024
        %vm681 = vcmp.lt.s32.totalorder %v425, 1024
        %vm682 = vcmp.lt.s32.totalorder %v426, 1024
        %vm683 = vcmp.lt.s32.totalorder %v427, 1024
        %vm684 = vcmp.lt.s32.totalorder %v428, 1024
        %vm685 = vcmp.lt.s32.totalorder %v429, 1024
        %vm686 = vcmp.lt.s32.totalorder %v430, 1024
        %vm687 = vcmp.lt.s32.totalorder %v431, 1024
        %vm688 = vcmp.lt.s32.totalorder %v432, 1024
        %vm689 = vcmp.lt.s32.totalorder %v433, 1024
        %vm690 = vcmp.lt.s32.totalorder %v434, 1024
        %vm691 = vcmp.lt.s32.totalorder %v435, 1024
        %vm692 = vcmp.lt.s32.totalorder %v436, 1024
        %vm693 = vcmp.lt.s32.totalorder %v437, 1024
        %vm694 = vcmp.lt.s32.totalorder %v438, 1024
        %vm695 = vcmp.lt.s32.totalorder %v439, 1024
        %vm696 = vcmp.lt.s32.totalorder %v440, 1024
        %vm697 = vcmp.lt.s32.totalorder %v441, 1024
        %vm698 = vcmp.lt.s32.totalorder %v442, 1024
        %vm699 = vcmp.lt.s32.totalorder %v443, 1024
        %vm700 = vcmp.lt.s32.totalorder %v444, 1024
        %vm701 = vcmp.lt.s32.totalorder %v445, 1024
        %vm702 = vcmp.lt.s32.totalorder %v446, 1024
        %vm703 = vcmp.lt.s32.totalorder %v447, 1024
        %vm704 = vcmp.lt.s32.totalorder %v448, 1024
        %vm705 = vcmp.lt.s32.totalorder %v449, 1024
        %vm706 = vcmp.lt.s32.totalorder %v450, 1024
        %vm707 = vcmp.lt.s32.totalorder %v451, 1024
        %vm708 = vcmp.lt.s32.totalorder %v452, 1024
        %vm709 = vcmp.lt.s32.totalorder %v453, 1024
        %vm710 = vcmp.lt.s32.totalorder %v454, 1024
        %vm711 = vcmp.lt.s32.totalorder %v455, 1024
        %vm712 = vcmp.lt.s32.totalorder %v456, 1024
        %vm713 = vcmp.lt.s32.totalorder %v457, 1024
        %vm714 = vcmp.lt.s32.totalorder %v458, 1024
        %vm715 = vcmp.lt.s32.totalorder %v459, 1024
        %vm716 = vcmp.lt.s32.totalorder %v460, 1024
        %vm717 = vcmp.lt.s32.totalorder %v461, 1024
        %vm718 = vcmp.lt.s32.totalorder %v462, 1024
        %vm719 = vcmp.lt.s32.totalorder %v463, 1024
        %vm720 = vcmp.lt.s32.totalorder %v464, 1024
        %vm721 = vcmp.lt.s32.totalorder %v465, 1024
        %vm722 = vcmp.lt.s32.totalorder %v466, 1024
        %vm723 = vcmp.lt.s32.totalorder %v467, 1024
        %vm724 = vcmp.lt.s32.totalorder %v468, 1024
        %vm725 = vcmp.lt.s32.totalorder %v469, 1024
        %vm726 = vcmp.lt.s32.totalorder %v470, 1024
        %vm727 = vcmp.lt.s32.totalorder %v471, 1024
        %vm728 = vcmp.lt.s32.totalorder %v472, 1024
        %vm729 = vcmp.lt.s32.totalorder %v473, 1024
        %vm730 = vcmp.lt.s32.totalorder %v474, 1024
        %vm731 = vcmp.lt.s32.totalorder %v475, 1024
        %vm732 = vcmp.lt.s32.totalorder %v476, 1024
        %vm733 = vcmp.lt.s32.totalorder %v477, 1024
        %vm734 = vcmp.lt.s32.totalorder %v478, 1024
        %vm735 = vcmp.lt.s32.totalorder %v479, 1024
        %vm736 = vcmp.lt.s32.totalorder %v480, 1024
        %vm737 = vcmp.lt.s32.totalorder %v481, 1024
        %vm738 = vcmp.lt.s32.totalorder %v482, 1024
        %vm739 = vcmp.lt.s32.totalorder %v483, 1024
        %vm740 = vcmp.lt.s32.totalorder %v484, 1024
        %vm741 = vcmp.lt.s32.totalorder %v485, 1024
        %vm742 = vcmp.lt.s32.totalorder %v486, 1024
        %vm743 = vcmp.lt.s32.totalorder %v487, 1024
        %vm744 = vcmp.lt.s32.totalorder %v488, 1024
        %vm745 = vcmp.lt.s32.totalorder %v489, 1024
        %vm746 = vcmp.lt.s32.totalorder %v490, 1024
        %vm747 = vcmp.lt.s32.totalorder %v491, 1024
        %vm748 = vcmp.lt.s32.totalorder %v492, 1024
        %vm749 = vcmp.lt.s32.totalorder %v493, 1024
        %vm750 = vcmp.lt.s32.totalorder %v494, 1024
        %vm751 = vcmp.lt.s32.totalorder %v495, 1024
        %vm752 = vcmp.lt.s32.totalorder %v496, 1024
        %vm753 = vcmp.lt.s32.totalorder %v497, 1024
        %vm754 = vcmp.lt.s32.totalorder %v498, 1024
        %vm755 = vcmp.lt.s32.totalorder %v499, 1024
        %vm756 = vcmp.lt.s32.totalorder %v500, 1024
        %vm757 = vcmp.lt.s32.totalorder %v501, 1024
        %vm758 = vcmp.lt.s32.totalorder %v502, 1024
        %vm759 = vcmp.lt.s32.totalorder %v503, 1024
        %vm760 = vcmp.lt.s32.totalorder %v504, 1024
        %vm761 = vcmp.lt.s32.totalorder %v505, 1024
        %vm762 = vcmp.lt.s32.totalorder %v506, 1024
        %vm763 = vcmp.lt.s32.totalorder %v507, 1024
        %vm764 = vcmp.lt.s32.totalorder %v508, 1024
        %vm765 = vcmp.lt.s32.totalorder %v509, 1024
        %vm766 = vcmp.lt.s32.totalorder %v510, 1024
        %vm767 = vcmp.lt.s32.totalorder %v511, 1024
        %vm768 = vcmp.lt.s32.totalorder %v512, 1024
        %vm769 = vcmp.lt.s32.totalorder %v513, 1024
        %vm770 = vcmp.lt.s32.totalorder %v514, 1024
        %vm771 = vcmp.lt.s32.totalorder %v515, 1024
        %vm772 = vcmp.lt.s32.totalorder %v516, 1024
        %vm773 = vcmp.lt.s32.totalorder %v517, 1024
        %vm774 = vcmp.lt.s32.totalorder %v518, 1024
        %vm775 = vcmp.lt.s32.totalorder %v519, 1024
        %vm776 = vcmp.lt.s32.totalorder %v520, 1024
        %vm777 = vcmp.lt.s32.totalorder %v521, 1024
        %vm778 = vcmp.lt.s32.totalorder %v522, 1024
        %vm779 = vcmp.lt.s32.totalorder %v523, 1024
        %vm780 = vcmp.lt.s32.totalorder %v524, 1024
        %vm781 = vcmp.lt.s32.totalorder %v525, 1024
        %vm782 = vcmp.lt.s32.totalorder %v526, 1024
        %vm783 = vcmp.lt.s32.totalorder %v527, 1024
        %vm784 = vcmp.lt.s32.totalorder %v528, 1024
        %vm785 = vcmp.lt.s32.totalorder %v529, 1024
        %vm786 = vcmp.lt.s32.totalorder %v530, 1024
        %vm787 = vmand %vm531, %vm659
        %vm788 = vmand %vm532, %vm660
        %vm789 = vmand %vm533, %vm661
        %vm790 = vmand %vm534, %vm662
        %vm791 = vmand %vm535, %vm663
        %vm792 = vmand %vm536, %vm664
        %vm793 = vmand %vm537, %vm665
        %vm794 = vmand %vm538, %vm666
        %vm795 = vmand %vm539, %vm667
        %vm796 = vmand %vm540, %vm668
        %vm797 = vmand %vm541, %vm669
        %vm798 = vmand %vm542, %vm670
        %vm799 = vmand %vm543, %vm671
        %vm800 = vmand %vm544, %vm672
        %vm801 = vmand %vm545, %vm673
        %vm802 = vmand %vm546, %vm674
        %vm803 = vmand %vm547, %vm675
        %vm804 = vmand %vm548, %vm676
        %vm805 = vmand %vm549, %vm677
        %vm806 = vmand %vm550, %vm678
        %vm807 = vmand %vm551, %vm679
        %vm808 = vmand %vm552, %vm680
        %vm809 = vmand %vm553, %vm681
        %vm810 = vmand %vm554, %vm682
        %vm811 = vmand %vm555, %vm683
        %vm812 = vmand %vm556, %vm684
        %vm813 = vmand %vm557, %vm685
        %vm814 = vmand %vm558, %vm686
        %vm815 = vmand %vm559, %vm687
        %vm816 = vmand %vm560, %vm688
        %vm817 = vmand %vm561, %vm689
        %vm818 = vmand %vm562, %vm690
        %vm819 = vmand %vm563, %vm691
        %vm820 = vmand %vm564, %vm692
        %vm821 = vmand %vm565, %vm693
        %vm822 = vmand %vm566, %vm694
        %vm823 = vmand %vm567, %vm695
        %vm824 = vmand %vm568, %vm696
        %vm825 = vmand %vm569, %vm697
        %vm826 = vmand %vm570, %vm698
        %vm827 = vmand %vm571, %vm699
        %vm828 = vmand %vm572, %vm700
        %vm829 = vmand %vm573, %vm701
        %vm830 = vmand %vm574, %vm702
        %vm831 = vmand %vm575, %vm703
        %vm832 = vmand %vm576, %vm704
        %vm833 = vmand %vm577, %vm705
        %vm834 = vmand %vm578, %vm706
        %vm835 = vmand %vm579, %vm707
        %vm836 = vmand %vm580, %vm708
        %vm837 = vmand %vm581, %vm709
        %vm838 = vmand %vm582, %vm710
        %vm839 = vmand %vm583, %vm711
        %vm840 = vmand %vm584, %vm712
        %vm841 = vmand %vm585, %vm713
        %vm842 = vmand %vm586, %vm714
        %vm843 = vmand %vm587, %vm715
        %vm844 = vmand %vm588, %vm716
        %vm845 = vmand %vm589, %vm717
        %vm846 = vmand %vm590, %vm718
        %vm847 = vmand %vm591, %vm719
        %vm848 = vmand %vm592, %vm720
        %vm849 = vmand %vm593, %vm721
        %vm850 = vmand %vm594, %vm722
        %vm851 = vmand %vm595, %vm723
        %vm852 = vmand %vm596, %vm724
        %vm853 = vmand %vm597, %vm725
        %vm854 = vmand %vm598, %vm726
        %vm855 = vmand %vm599, %vm727
        %vm856 = vmand %vm600, %vm728
        %vm857 = vmand %vm601, %vm729
        %vm858 = vmand %vm602, %vm730
        %vm859 = vmand %vm603, %vm731
        %vm860 = vmand %vm604, %vm732
        %vm861 = vmand %vm605, %vm733
        %vm862 = vmand %vm606, %vm734
        %vm863 = vmand %vm607, %vm735
        %vm864 = vmand %vm608, %vm736
        %vm865 = vmand %vm609, %vm737
        %vm866 = vmand %vm610, %vm738
        %vm867 = vmand %vm611, %vm739
        %vm868 = vmand %vm612, %vm740
        %vm869 = vmand %vm613, %vm741
        %vm870 = vmand %vm614, %vm742
        %vm871 = vmand %vm615, %vm743
        %vm872 = vmand %vm616, %vm744
        %vm873 = vmand %vm617, %vm745
        %vm874 = vmand %vm618, %vm746
        %vm875 = vmand %vm619, %vm747
        %vm876 = vmand %vm620, %vm748
        %vm877 = vmand %vm621, %vm749
        %vm878 = vmand %vm622, %vm750
        %vm879 = vmand %vm623, %vm751
        %vm880 = vmand %vm624, %vm752
        %vm881 = vmand %vm625, %vm753
        %vm882 = vmand %vm626, %vm754
        %vm883 = vmand %vm627, %vm755
        %vm884 = vmand %vm628, %vm756
        %vm885 = vmand %vm629, %vm757
        %vm886 = vmand %vm630, %vm758
        %vm887 = vmand %vm631, %vm759
        %vm888 = vmand %vm632, %vm760
        %vm889 = vmand %vm633, %vm761
        %vm890 = vmand %vm634, %vm762
        %vm891 = vmand %vm635, %vm763
        %vm892 = vmand %vm636, %vm764
        %vm893 = vmand %vm637, %vm765
        %vm894 = vmand %vm638, %vm766
        %vm895 = vmand %vm639, %vm767
        %vm896 = vmand %vm640, %vm768
        %vm897 = vmand %vm641, %vm769
        %vm898 = vmand %vm642, %vm770
        %vm899 = vmand %vm643, %vm771
        %vm900 = vmand %vm644, %vm772
        %vm901 = vmand %vm645, %vm773
        %vm902 = vmand %vm646, %vm774
        %vm903 = vmand %vm647, %vm775
        %vm904 = vmand %vm648, %vm776
        %vm905 = vmand %vm649, %vm777
        %vm906 = vmand %vm650, %vm778
        %vm907 = vmand %vm651, %vm779
        %vm908 = vmand %vm652, %vm780
        %vm909 = vmand %vm653, %vm781
        %vm910 = vmand %vm654, %vm782
        %vm911 = vmand %vm655, %vm783
        %vm912 = vmand %vm656, %vm784
        %vm913 = vmand %vm657, %vm785
        %vm914 = vmand %vm658, %vm786
        %v915 = vsel %vm787, 7.6293945e-06, 0.0
        %v916 = vsel %vm788, 7.6293945e-06, 0.0
        %v917 = vsel %vm789, 7.6293945e-06, 0.0
        %v918 = vsel %vm790, 7.6293945e-06, 0.0
        %v919 = vsel %vm791, 7.6293945e-06, 0.0
        %v920 = vsel %vm792, 7.6293945e-06, 0.0
        %v921 = vsel %vm793, 7.6293945e-06, 0.0
        %v922 = vsel %vm794, 7.6293945e-06, 0.0
        %v923 = vsel %vm795, 7.6293945e-06, 0.0
        %v924 = vsel %vm796, 7.6293945e-06, 0.0
        %v925 = vsel %vm797, 7.6293945e-06, 0.0
        %v926 = vsel %vm798, 7.6293945e-06, 0.0
        %v927 = vsel %vm799, 7.6293945e-06, 0.0
        %v928 = vsel %vm800, 7.6293945e-06, 0.0
        %v929 = vsel %vm801, 7.6293945e-06, 0.0
        %v930 = vsel %vm802, 7.6293945e-06, 0.0
        %v931 = vsel %vm803, 7.6293945e-06, 0.0
        %v932 = vsel %vm804, 7.6293945e-06, 0.0
        %v933 = vsel %vm805, 7.6293945e-06, 0.0
        %v934 = vsel %vm806, 7.6293945e-06, 0.0
        %v935 = vsel %vm807, 7.6293945e-06, 0.0
        %v936 = vsel %vm808, 7.6293945e-06, 0.0
        %v937 = vsel %vm809, 7.6293945e-06, 0.0
        %v938 = vsel %vm810, 7.6293945e-06, 0.0
        %v939 = vsel %vm811, 7.6293945e-06, 0.0
        %v940 = vsel %vm812, 7.6293945e-06, 0.0
        %v941 = vsel %vm813, 7.6293945e-06, 0.0
        %v942 = vsel %vm814, 7.6293945e-06, 0.0
        %v943 = vsel %vm815, 7.6293945e-06, 0.0
        %v944 = vsel %vm816, 7.6293945e-06, 0.0
        %v945 = vsel %vm817, 7.6293945e-06, 0.0
        %v946 = vsel %vm818, 7.6293945e-06, 0.0
        %v947 = vsel %vm819, 7.6293945e-06, 0.0
        %v948 = vsel %vm820, 7.6293945e-06, 0.0
        %v949 = vsel %vm821, 7.6293945e-06, 0.0
        %v950 = vsel %vm822, 7.6293945e-06, 0.0
        %v951 = vsel %vm823, 7.6293945e-06, 0.0
        %v952 = vsel %vm824, 7.6293945e-06, 0.0
        %v953 = vsel %vm825, 7.6293945e-06, 0.0
        %v954 = vsel %vm826, 7.6293945e-06, 0.0
        %v955 = vsel %vm827, 7.6293945e-06, 0.0
        %v956 = vsel %vm828, 7.6293945e-06, 0.0
        %v957 = vsel %vm829, 7.6293945e-06, 0.0
        %v958 = vsel %vm830, 7.6293945e-06, 0.0
        %v959 = vsel %vm831, 7.6293945e-06, 0.0
        %v960 = vsel %vm832, 7.6293945e-06, 0.0
        %v961 = vsel %vm833, 7.6293945e-06, 0.0
        %v962 = vsel %vm834, 7.6293945e-06, 0.0
        %v963 = vsel %vm835, 7.6293945e-06, 0.0
        %v964 = vsel %vm836, 7.6293945e-06, 0.0
        %v965 = vsel %vm837, 7.6293945e-06, 0.0
        %v966 = vsel %vm838, 7.6293945e-06, 0.0
        %v967 = vsel %vm839, 7.6293945e-06, 0.0
        %v968 = vsel %vm840, 7.6293945e-06, 0.0
        %v969 = vsel %vm841, 7.6293945e-06, 0.0
        %v970 = vsel %vm842, 7.6293945e-06, 0.0
        %v971 = vsel %vm843, 7.6293945e-06, 0.0
        %v972 = vsel %vm844, 7.6293945e-06, 0.0
        %v973 = vsel %vm845, 7.6293945e-06, 0.0
        %v974 = vsel %vm846, 7.6293945e-06, 0.0
        %v975 = vsel %vm847, 7.6293945e-06, 0.0
        %v976 = vsel %vm848, 7.6293945e-06, 0.0
        %v977 = vsel %vm849, 7.6293945e-06, 0.0
        %v978 = vsel %vm850, 7.6293945e-06, 0.0
        %v979 = vsel %vm851, 7.6293945e-06, 0.0
        %v980 = vsel %vm852, 7.6293945e-06, 0.0
        %v981 = vsel %vm853, 7.6293945e-06, 0.0
        %v982 = vsel %vm854, 7.6293945e-06, 0.0
        %v983 = vsel %vm855, 7.6293945e-06, 0.0
        %v984 = vsel %vm856, 7.6293945e-06, 0.0
        %v985 = vsel %vm857, 7.6293945e-06, 0.0
        %v986 = vsel %vm858, 7.6293945e-06, 0.0
        %v987 = vsel %vm859, 7.6293945e-06, 0.0
        %v988 = vsel %vm860, 7.6293945e-06, 0.0
        %v989 = vsel %vm861, 7.6293945e-06, 0.0
        %v990 = vsel %vm862, 7.6293945e-06, 0.0
        %v991 = vsel %vm863, 7.6293945e-06, 0.0
        %v992 = vsel %vm864, 7.6293945e-06, 0.0
        %v993 = vsel %vm865, 7.6293945e-06, 0.0
        %v994 = vsel %vm866, 7.6293945e-06, 0.0
        %v995 = vsel %vm867, 7.6293945e-06, 0.0
        %v996 = vsel %vm868, 7.6293945e-06, 0.0
        %v997 = vsel %vm869, 7.6293945e-06, 0.0
        %v998 = vsel %vm870, 7.6293945e-06, 0.0
        %v999 = vsel %vm871, 7.6293945e-06, 0.0
        %v1000 = vsel %vm872, 7.6293945e-06, 0.0
        %v1001 = vsel %vm873, 7.6293945e-06, 0.0
        %v1002 = vsel %vm874, 7.6293945e-06, 0.0
        %v1003 = vsel %vm875, 7.6293945e-06, 0.0
        %v1004 = vsel %vm876, 7.6293945e-06, 0.0
        %v1005 = vsel %vm877, 7.6293945e-06, 0.0
        %v1006 = vsel %vm878, 7.6293945e-06, 0.0
        %v1007 = vsel %vm879, 7.6293945e-06, 0.0
        %v1008 = vsel %vm880, 7.6293945e-06, 0.0
        %v1009 = vsel %vm881, 7.6293945e-06, 0.0
        %v1010 = vsel %vm882, 7.6293945e-06, 0.0
        %v1011 = vsel %vm883, 7.6293945e-06, 0.0
        %v1012 = vsel %vm884, 7.6293945e-06, 0.0
        %v1013 = vsel %vm885, 7.6293945e-06, 0.0
        %v1014 = vsel %vm886, 7.6293945e-06, 0.0
        %v1015 = vsel %vm887, 7.6293945e-06, 0.0
        %v1016 = vsel %vm888, 7.6293945e-06, 0.0
        %v1017 = vsel %vm889, 7.6293945e-06, 0.0
        %v1018 = vsel %vm890, 7.6293945e-06, 0.0
        %v1019 = vsel %vm891, 7.6293945e-06, 0.0
        %v1020 = vsel %vm892, 7.6293945e-06, 0.0
        %v1021 = vsel %vm893, 7.6293945e-06, 0.0
        %v1022 = vsel %vm894, 7.6293945e-06, 0.0
        %v1023 = vsel %vm895, 7.6293945e-06, 0.0
        %v1024 = vsel %vm896, 7.6293945e-06, 0.0
        %v1025 = vsel %vm897, 7.6293945e-06, 0.0
        %v1026 = vsel %vm898, 7.6293945e-06, 0.0
        %v1027 = vsel %vm899, 7.6293945e-06, 0.0
        %v1028 = vsel %vm900, 7.6293945e-06, 0.0
        %v1029 = vsel %vm901, 7.6293945e-06, 0.0
        %v1030 = vsel %vm902, 7.6293945e-06, 0.0
        %v1031 = vsel %vm903, 7.6293945e-06, 0.0
        %v1032 = vsel %vm904, 7.6293945e-06, 0.0
        %v1033 = vsel %vm905, 7.6293945e-06, 0.0
        %v1034 = vsel %vm906, 7.6293945e-06, 0.0
        %v1035 = vsel %vm907, 7.6293945e-06, 0.0
        %v1036 = vsel %vm908, 7.6293945e-06, 0.0
        %v1037 = vsel %vm909, 7.6293945e-06, 0.0
        %v1038 = vsel %vm910, 7.6293945e-06, 0.0
        %v1039 = vsel %vm911, 7.6293945e-06, 0.0
        %v1040 = vsel %vm912, 7.6293945e-06, 0.0
        %v1041 = vsel %vm913, 7.6293945e-06, 0.0
        %v1042 = vsel %vm914, 7.6293945e-06, 0.0
        %vm1043 = vcmp.ge.s32.totalorder %v403, 1024
        %vm1044 = vcmp.ge.s32.totalorder %v404, 1024
        %vm1045 = vcmp.ge.s32.totalorder %v405, 1024
        %vm1046 = vcmp.ge.s32.totalorder %v406, 1024
        %vm1047 = vcmp.ge.s32.totalorder %v407, 1024
        %vm1048 = vcmp.ge.s32.totalorder %v408, 1024
        %vm1049 = vcmp.ge.s32.totalorder %v409, 1024
        %vm1050 = vcmp.ge.s32.totalorder %v410, 1024
        %vm1051 = vcmp.ge.s32.totalorder %v411, 1024
        %vm1052 = vcmp.ge.s32.totalorder %v412, 1024
        %vm1053 = vcmp.ge.s32.totalorder %v413, 1024
        %vm1054 = vcmp.ge.s32.totalorder %v414, 1024
        %vm1055 = vcmp.ge.s32.totalorder %v415, 1024
        %vm1056 = vcmp.ge.s32.totalorder %v416, 1024
        %vm1057 = vcmp.ge.s32.totalorder %v417, 1024
        %vm1058 = vcmp.ge.s32.totalorder %v418, 1024
        %vm1059 = vcmp.ge.s32.totalorder %v419, 1024
        %vm1060 = vcmp.ge.s32.totalorder %v420, 1024
        %vm1061 = vcmp.ge.s32.totalorder %v421, 1024
        %vm1062 = vcmp.ge.s32.totalorder %v422, 1024
        %vm1063 = vcmp.ge.s32.totalorder %v423, 1024
        %vm1064 = vcmp.ge.s32.totalorder %v424, 1024
        %vm1065 = vcmp.ge.s32.totalorder %v425, 1024
        %vm1066 = vcmp.ge.s32.totalorder %v426, 1024
        %vm1067 = vcmp.ge.s32.totalorder %v427, 1024
        %vm1068 = vcmp.ge.s32.totalorder %v428, 1024
        %vm1069 = vcmp.ge.s32.totalorder %v429, 1024
        %vm1070 = vcmp.ge.s32.totalorder %v430, 1024
        %vm1071 = vcmp.ge.s32.totalorder %v431, 1024
        %vm1072 = vcmp.ge.s32.totalorder %v432, 1024
        %vm1073 = vcmp.ge.s32.totalorder %v433, 1024
        %vm1074 = vcmp.ge.s32.totalorder %v434, 1024
        %vm1075 = vcmp.ge.s32.totalorder %v435, 1024
        %vm1076 = vcmp.ge.s32.totalorder %v436, 1024
        %vm1077 = vcmp.ge.s32.totalorder %v437, 1024
        %vm1078 = vcmp.ge.s32.totalorder %v438, 1024
        %vm1079 = vcmp.ge.s32.totalorder %v439, 1024
        %vm1080 = vcmp.ge.s32.totalorder %v440, 1024
        %vm1081 = vcmp.ge.s32.totalorder %v441, 1024
        %vm1082 = vcmp.ge.s32.totalorder %v442, 1024
        %vm1083 = vcmp.ge.s32.totalorder %v443, 1024
        %vm1084 = vcmp.ge.s32.totalorder %v444, 1024
        %vm1085 = vcmp.ge.s32.totalorder %v445, 1024
        %vm1086 = vcmp.ge.s32.totalorder %v446, 1024
        %vm1087 = vcmp.ge.s32.totalorder %v447, 1024
        %vm1088 = vcmp.ge.s32.totalorder %v448, 1024
        %vm1089 = vcmp.ge.s32.totalorder %v449, 1024
        %vm1090 = vcmp.ge.s32.totalorder %v450, 1024
        %vm1091 = vcmp.ge.s32.totalorder %v451, 1024
        %vm1092 = vcmp.ge.s32.totalorder %v452, 1024
        %vm1093 = vcmp.ge.s32.totalorder %v453, 1024
        %vm1094 = vcmp.ge.s32.totalorder %v454, 1024
        %vm1095 = vcmp.ge.s32.totalorder %v455, 1024
        %vm1096 = vcmp.ge.s32.totalorder %v456, 1024
        %vm1097 = vcmp.ge.s32.totalorder %v457, 1024
        %vm1098 = vcmp.ge.s32.totalorder %v458, 1024
        %vm1099 = vcmp.ge.s32.totalorder %v459, 1024
        %vm1100 = vcmp.ge.s32.totalorder %v460, 1024
        %vm1101 = vcmp.ge.s32.totalorder %v461, 1024
        %vm1102 = vcmp.ge.s32.totalorder %v462, 1024
        %vm1103 = vcmp.ge.s32.totalorder %v463, 1024
        %vm1104 = vcmp.ge.s32.totalorder %v464, 1024
        %vm1105 = vcmp.ge.s32.totalorder %v465, 1024
        %vm1106 = vcmp.ge.s32.totalorder %v466, 1024
        %vm1107 = vcmp.ge.s32.totalorder %v467, 1024
        %vm1108 = vcmp.ge.s32.totalorder %v468, 1024
        %vm1109 = vcmp.ge.s32.totalorder %v469, 1024
        %vm1110 = vcmp.ge.s32.totalorder %v470, 1024
        %vm1111 = vcmp.ge.s32.totalorder %v471, 1024
        %vm1112 = vcmp.ge.s32.totalorder %v472, 1024
        %vm1113 = vcmp.ge.s32.totalorder %v473, 1024
        %vm1114 = vcmp.ge.s32.totalorder %v474, 1024
        %vm1115 = vcmp.ge.s32.totalorder %v475, 1024
        %vm1116 = vcmp.ge.s32.totalorder %v476, 1024
        %vm1117 = vcmp.ge.s32.totalorder %v477, 1024
        %vm1118 = vcmp.ge.s32.totalorder %v478, 1024
        %vm1119 = vcmp.ge.s32.totalorder %v479, 1024
        %vm1120 = vcmp.ge.s32.totalorder %v480, 1024
        %vm1121 = vcmp.ge.s32.totalorder %v481, 1024
        %vm1122 = vcmp.ge.s32.totalorder %v482, 1024
        %vm1123 = vcmp.ge.s32.totalorder %v483, 1024
        %vm1124 = vcmp.ge.s32.totalorder %v484, 1024
        %vm1125 = vcmp.ge.s32.totalorder %v485, 1024
        %vm1126 = vcmp.ge.s32.totalorder %v486, 1024
        %vm1127 = vcmp.ge.s32.totalorder %v487, 1024
        %vm1128 = vcmp.ge.s32.totalorder %v488, 1024
        %vm1129 = vcmp.ge.s32.totalorder %v489, 1024
        %vm1130 = vcmp.ge.s32.totalorder %v490, 1024
        %vm1131 = vcmp.ge.s32.totalorder %v491, 1024
        %vm1132 = vcmp.ge.s32.totalorder %v492, 1024
        %vm1133 = vcmp.ge.s32.totalorder %v493, 1024
        %vm1134 = vcmp.ge.s32.totalorder %v494, 1024
        %vm1135 = vcmp.ge.s32.totalorder %v495, 1024
        %vm1136 = vcmp.ge.s32.totalorder %v496, 1024
        %vm1137 = vcmp.ge.s32.totalorder %v497, 1024
        %vm1138 = vcmp.ge.s32.totalorder %v498, 1024
        %vm1139 = vcmp.ge.s32.totalorder %v499, 1024
        %vm1140 = vcmp.ge.s32.totalorder %v500, 1024
        %vm1141 = vcmp.ge.s32.totalorder %v501, 1024
        %vm1142 = vcmp.ge.s32.totalorder %v502, 1024
        %vm1143 = vcmp.ge.s32.totalorder %v503, 1024
        %vm1144 = vcmp.ge.s32.totalorder %v504, 1024
        %vm1145 = vcmp.ge.s32.totalorder %v505, 1024
        %vm1146 = vcmp.ge.s32.totalorder %v506, 1024
        %vm1147 = vcmp.ge.s32.totalorder %v507, 1024
        %vm1148 = vcmp.ge.s32.totalorder %v508, 1024
        %vm1149 = vcmp.ge.s32.totalorder %v509, 1024
        %vm1150 = vcmp.ge.s32.totalorder %v510, 1024
        %vm1151 = vcmp.ge.s32.totalorder %v511, 1024
        %vm1152 = vcmp.ge.s32.totalorder %v512, 1024
        %vm1153 = vcmp.ge.s32.totalorder %v513, 1024
        %vm1154 = vcmp.ge.s32.totalorder %v514, 1024
        %vm1155 = vcmp.ge.s32.totalorder %v515, 1024
        %vm1156 = vcmp.ge.s32.totalorder %v516, 1024
        %vm1157 = vcmp.ge.s32.totalorder %v517, 1024
        %vm1158 = vcmp.ge.s32.totalorder %v518, 1024
        %vm1159 = vcmp.ge.s32.totalorder %v519, 1024
        %vm1160 = vcmp.ge.s32.totalorder %v520, 1024
        %vm1161 = vcmp.ge.s32.totalorder %v521, 1024
        %vm1162 = vcmp.ge.s32.totalorder %v522, 1024
        %vm1163 = vcmp.ge.s32.totalorder %v523, 1024
        %vm1164 = vcmp.ge.s32.totalorder %v524, 1024
        %vm1165 = vcmp.ge.s32.totalorder %v525, 1024
        %vm1166 = vcmp.ge.s32.totalorder %v526, 1024
        %vm1167 = vcmp.ge.s32.totalorder %v527, 1024
        %vm1168 = vcmp.ge.s32.totalorder %v528, 1024
        %vm1169 = vcmp.ge.s32.totalorder %v529, 1024
        %vm1170 = vcmp.ge.s32.totalorder %v530, 1024
        %vm1171 = vcmp.lt.s32.totalorder %v403, 1028
        %vm1172 = vcmp.lt.s32.totalorder %v404, 1028
        %vm1173 = vcmp.lt.s32.totalorder %v405, 1028
        %vm1174 = vcmp.lt.s32.totalorder %v406, 1028
        %vm1175 = vcmp.lt.s32.totalorder %v407, 1028
        %vm1176 = vcmp.lt.s32.totalorder %v408, 1028
        %vm1177 = vcmp.lt.s32.totalorder %v409, 1028
        %vm1178 = vcmp.lt.s32.totalorder %v410, 1028
        %vm1179 = vcmp.lt.s32.totalorder %v411, 1028
        %vm1180 = vcmp.lt.s32.totalorder %v412, 1028
        %vm1181 = vcmp.lt.s32.totalorder %v413, 1028
        %vm1182 = vcmp.lt.s32.totalorder %v414, 1028
        %vm1183 = vcmp.lt.s32.totalorder %v415, 1028
        %vm1184 = vcmp.lt.s32.totalorder %v416, 1028
        %vm1185 = vcmp.lt.s32.totalorder %v417, 1028
        %vm1186 = vcmp.lt.s32.totalorder %v418, 1028
        %vm1187 = vcmp.lt.s32.totalorder %v419, 1028
        %vm1188 = vcmp.lt.s32.totalorder %v420, 1028
        %vm1189 = vcmp.lt.s32.totalorder %v421, 1028
        %vm1190 = vcmp.lt.s32.totalorder %v422, 1028
        %vm1191 = vcmp.lt.s32.totalorder %v423, 1028
        %vm1192 = vcmp.lt.s32.totalorder %v424, 1028
        %vm1193 = vcmp.lt.s32.totalorder %v425, 1028
        %vm1194 = vcmp.lt.s32.totalorder %v426, 1028
        %vm1195 = vcmp.lt.s32.totalorder %v427, 1028
        %vm1196 = vcmp.lt.s32.totalorder %v428, 1028
        %vm1197 = vcmp.lt.s32.totalorder %v429, 1028
        %vm1198 = vcmp.lt.s32.totalorder %v430, 1028
        %vm1199 = vcmp.lt.s32.totalorder %v431, 1028
        %vm1200 = vcmp.lt.s32.totalorder %v432, 1028
        %vm1201 = vcmp.lt.s32.totalorder %v433, 1028
        %vm1202 = vcmp.lt.s32.totalorder %v434, 1028
        %vm1203 = vcmp.lt.s32.totalorder %v435, 1028
        %vm1204 = vcmp.lt.s32.totalorder %v436, 1028
        %vm1205 = vcmp.lt.s32.totalorder %v437, 1028
        %vm1206 = vcmp.lt.s32.totalorder %v438, 1028
        %vm1207 = vcmp.lt.s32.totalorder %v439, 1028
        %vm1208 = vcmp.lt.s32.totalorder %v440, 1028
        %vm1209 = vcmp.lt.s32.totalorder %v441, 1028
        %vm1210 = vcmp.lt.s32.totalorder %v442, 1028
        %vm1211 = vcmp.lt.s32.totalorder %v443, 1028
        %vm1212 = vcmp.lt.s32.totalorder %v444, 1028
        %vm1213 = vcmp.lt.s32.totalorder %v445, 1028
        %vm1214 = vcmp.lt.s32.totalorder %v446, 1028
        %vm1215 = vcmp.lt.s32.totalorder %v447, 1028
        %vm1216 = vcmp.lt.s32.totalorder %v448, 1028
        %vm1217 = vcmp.lt.s32.totalorder %v449, 1028
        %vm1218 = vcmp.lt.s32.totalorder %v450, 1028
        %vm1219 = vcmp.lt.s32.totalorder %v451, 1028
        %vm1220 = vcmp.lt.s32.totalorder %v452, 1028
        %vm1221 = vcmp.lt.s32.totalorder %v453, 1028
        %vm1222 = vcmp.lt.s32.totalorder %v454, 1028
        %vm1223 = vcmp.lt.s32.totalorder %v455, 1028
        %vm1224 = vcmp.lt.s32.totalorder %v456, 1028
        %vm1225 = vcmp.lt.s32.totalorder %v457, 1028
        %vm1226 = vcmp.lt.s32.totalorder %v458, 1028
        %vm1227 = vcmp.lt.s32.totalorder %v459, 1028
        %vm1228 = vcmp.lt.s32.totalorder %v460, 1028
        %vm1229 = vcmp.lt.s32.totalorder %v461, 1028
        %vm1230 = vcmp.lt.s32.totalorder %v462, 1028
        %vm1231 = vcmp.lt.s32.totalorder %v463, 1028
        %vm1232 = vcmp.lt.s32.totalorder %v464, 1028
        %vm1233 = vcmp.lt.s32.totalorder %v465, 1028
        %vm1234 = vcmp.lt.s32.totalorder %v466, 1028
        %vm1235 = vcmp.lt.s32.totalorder %v467, 1028
        %vm1236 = vcmp.lt.s32.totalorder %v468, 1028
        %vm1237 = vcmp.lt.s32.totalorder %v469, 1028
        %vm1238 = vcmp.lt.s32.totalorder %v470, 1028
        %vm1239 = vcmp.lt.s32.totalorder %v471, 1028
        %vm1240 = vcmp.lt.s32.totalorder %v472, 1028
        %vm1241 = vcmp.lt.s32.totalorder %v473, 1028
        %vm1242 = vcmp.lt.s32.totalorder %v474, 1028
        %vm1243 = vcmp.lt.s32.totalorder %v475, 1028
        %vm1244 = vcmp.lt.s32.totalorder %v476, 1028
        %vm1245 = vcmp.lt.s32.totalorder %v477, 1028
        %vm1246 = vcmp.lt.s32.totalorder %v478, 1028
        %vm1247 = vcmp.lt.s32.totalorder %v479, 1028
        %vm1248 = vcmp.lt.s32.totalorder %v480, 1028
        %vm1249 = vcmp.lt.s32.totalorder %v481, 1028
        %vm1250 = vcmp.lt.s32.totalorder %v482, 1028
        %vm1251 = vcmp.lt.s32.totalorder %v483, 1028
        %vm1252 = vcmp.lt.s32.totalorder %v484, 1028
        %vm1253 = vcmp.lt.s32.totalorder %v485, 1028
        %vm1254 = vcmp.lt.s32.totalorder %v486, 1028
        %vm1255 = vcmp.lt.s32.totalorder %v487, 1028
        %vm1256 = vcmp.lt.s32.totalorder %v488, 1028
        %vm1257 = vcmp.lt.s32.totalorder %v489, 1028
        %vm1258 = vcmp.lt.s32.totalorder %v490, 1028
        %vm1259 = vcmp.lt.s32.totalorder %v491, 1028
        %vm1260 = vcmp.lt.s32.totalorder %v492, 1028
        %vm1261 = vcmp.lt.s32.totalorder %v493, 1028
        %vm1262 = vcmp.lt.s32.totalorder %v494, 1028
        %vm1263 = vcmp.lt.s32.totalorder %v495, 1028
        %vm1264 = vcmp.lt.s32.totalorder %v496, 1028
        %vm1265 = vcmp.lt.s32.totalorder %v497, 1028
        %vm1266 = vcmp.lt.s32.totalorder %v498, 1028
        %vm1267 = vcmp.lt.s32.totalorder %v499, 1028
        %vm1268 = vcmp.lt.s32.totalorder %v500, 1028
        %vm1269 = vcmp.lt.s32.totalorder %v501, 1028
        %vm1270 = vcmp.lt.s32.totalorder %v502, 1028
        %vm1271 = vcmp.lt.s32.totalorder %v503, 1028
        %vm1272 = vcmp.lt.s32.totalorder %v504, 1028
        %vm1273 = vcmp.lt.s32.totalorder %v505, 1028
        %vm1274 = vcmp.lt.s32.totalorder %v506, 1028
        %vm1275 = vcmp.lt.s32.totalorder %v507, 1028
        %vm1276 = vcmp.lt.s32.totalorder %v508, 1028
        %vm1277 = vcmp.lt.s32.totalorder %v509, 1028
        %vm1278 = vcmp.lt.s32.totalorder %v510, 1028
        %vm1279 = vcmp.lt.s32.totalorder %v511, 1028
        %vm1280 = vcmp.lt.s32.totalorder %v512, 1028
        %vm1281 = vcmp.lt.s32.totalorder %v513, 1028
        %vm1282 = vcmp.lt.s32.totalorder %v514, 1028
        %vm1283 = vcmp.lt.s32.totalorder %v515, 1028
        %vm1284 = vcmp.lt.s32.totalorder %v516, 1028
        %vm1285 = vcmp.lt.s32.totalorder %v517, 1028
        %vm1286 = vcmp.lt.s32.totalorder %v518, 1028
        %vm1287 = vcmp.lt.s32.totalorder %v519, 1028
        %vm1288 = vcmp.lt.s32.totalorder %v520, 1028
        %vm1289 = vcmp.lt.s32.totalorder %v521, 1028
        %vm1290 = vcmp.lt.s32.totalorder %v522, 1028
        %vm1291 = vcmp.lt.s32.totalorder %v523, 1028
        %vm1292 = vcmp.lt.s32.totalorder %v524, 1028
        %vm1293 = vcmp.lt.s32.totalorder %v525, 1028
        %vm1294 = vcmp.lt.s32.totalorder %v526, 1028
        %vm1295 = vcmp.lt.s32.totalorder %v527, 1028
        %vm1296 = vcmp.lt.s32.totalorder %v528, 1028
        %vm1297 = vcmp.lt.s32.totalorder %v529, 1028
        %vm1298 = vcmp.lt.s32.totalorder %v530, 1028
        %vm1299 = vmand %vm1043, %vm1171
        %vm1300 = vmand %vm1044, %vm1172
        %vm1301 = vmand %vm1045, %vm1173
        %vm1302 = vmand %vm1046, %vm1174
        %vm1303 = vmand %vm1047, %vm1175
        %vm1304 = vmand %vm1048, %vm1176
        %vm1305 = vmand %vm1049, %vm1177
        %vm1306 = vmand %vm1050, %vm1178
        %vm1307 = vmand %vm1051, %vm1179
        %vm1308 = vmand %vm1052, %vm1180
        %vm1309 = vmand %vm1053, %vm1181
        %vm1310 = vmand %vm1054, %vm1182
        %vm1311 = vmand %vm1055, %vm1183
        %vm1312 = vmand %vm1056, %vm1184
        %vm1313 = vmand %vm1057, %vm1185
        %vm1314 = vmand %vm1058, %vm1186
        %vm1315 = vmand %vm1059, %vm1187
        %vm1316 = vmand %vm1060, %vm1188
        %vm1317 = vmand %vm1061, %vm1189
        %vm1318 = vmand %vm1062, %vm1190
        %vm1319 = vmand %vm1063, %vm1191
        %vm1320 = vmand %vm1064, %vm1192
        %vm1321 = vmand %vm1065, %vm1193
        %vm1322 = vmand %vm1066, %vm1194
        %vm1323 = vmand %vm1067, %vm1195
        %vm1324 = vmand %vm1068, %vm1196
        %vm1325 = vmand %vm1069, %vm1197
        %vm1326 = vmand %vm1070, %vm1198
        %vm1327 = vmand %vm1071, %vm1199
        %vm1328 = vmand %vm1072, %vm1200
        %vm1329 = vmand %vm1073, %vm1201
        %vm1330 = vmand %vm1074, %vm1202
        %vm1331 = vmand %vm1075, %vm1203
        %vm1332 = vmand %vm1076, %vm1204
        %vm1333 = vmand %vm1077, %vm1205
        %vm1334 = vmand %vm1078, %vm1206
        %vm1335 = vmand %vm1079, %vm1207
        %vm1336 = vmand %vm1080, %vm1208
        %vm1337 = vmand %vm1081, %vm1209
        %vm1338 = vmand %vm1082, %vm1210
        %vm1339 = vmand %vm1083, %vm1211
        %vm1340 = vmand %vm1084, %vm1212
        %vm1341 = vmand %vm1085, %vm1213
        %vm1342 = vmand %vm1086, %vm1214
        %vm1343 = vmand %vm1087, %vm1215
        %vm1344 = vmand %vm1088, %vm1216
        %vm1345 = vmand %vm1089, %vm1217
        %vm1346 = vmand %vm1090, %vm1218
        %vm1347 = vmand %vm1091, %vm1219
        %vm1348 = vmand %vm1092, %vm1220
        %vm1349 = vmand %vm1093, %vm1221
        %vm1350 = vmand %vm1094, %vm1222
        %vm1351 = vmand %vm1095, %vm1223
        %vm1352 = vmand %vm1096, %vm1224
        %vm1353 = vmand %vm1097, %vm1225
        %vm1354 = vmand %vm1098, %vm1226
        %vm1355 = vmand %vm1099, %vm1227
        %vm1356 = vmand %vm1100, %vm1228
        %vm1357 = vmand %vm1101, %vm1229
        %vm1358 = vmand %vm1102, %vm1230
        %vm1359 = vmand %vm1103, %vm1231
        %vm1360 = vmand %vm1104, %vm1232
        %vm1361 = vmand %vm1105, %vm1233
        %vm1362 = vmand %vm1106, %vm1234
        %vm1363 = vmand %vm1107, %vm1235
        %vm1364 = vmand %vm1108, %vm1236
        %vm1365 = vmand %vm1109, %vm1237
        %vm1366 = vmand %vm1110, %vm1238
        %vm1367 = vmand %vm1111, %vm1239
        %vm1368 = vmand %vm1112, %vm1240
        %vm1369 = vmand %vm1113, %vm1241
        %vm1370 = vmand %vm1114, %vm1242
        %vm1371 = vmand %vm1115, %vm1243
        %vm1372 = vmand %vm1116, %vm1244
        %vm1373 = vmand %vm1117, %vm1245
        %vm1374 = vmand %vm1118, %vm1246
        %vm1375 = vmand %vm1119, %vm1247
        %vm1376 = vmand %vm1120, %vm1248
        %vm1377 = vmand %vm1121, %vm1249
        %vm1378 = vmand %vm1122, %vm1250
        %vm1379 = vmand %vm1123, %vm1251
        %vm1380 = vmand %vm1124, %vm1252
        %vm1381 = vmand %vm1125, %vm1253
        %vm1382 = vmand %vm1126, %vm1254
        %vm1383 = vmand %vm1127, %vm1255
        %vm1384 = vmand %vm1128, %vm1256
        %vm1385 = vmand %vm1129, %vm1257
        %vm1386 = vmand %vm1130, %vm1258
        %vm1387 = vmand %vm1131, %vm1259
        %vm1388 = vmand %vm1132, %vm1260
        %vm1389 = vmand %vm1133, %vm1261
        %vm1390 = vmand %vm1134, %vm1262
        %vm1391 = vmand %vm1135, %vm1263
        %vm1392 = vmand %vm1136, %vm1264
        %vm1393 = vmand %vm1137, %vm1265
        %vm1394 = vmand %vm1138, %vm1266
        %vm1395 = vmand %vm1139, %vm1267
        %vm1396 = vmand %vm1140, %vm1268
        %vm1397 = vmand %vm1141, %vm1269
        %vm1398 = vmand %vm1142, %vm1270
        %vm1399 = vmand %vm1143, %vm1271
        %vm1400 = vmand %vm1144, %vm1272
        %vm1401 = vmand %vm1145, %vm1273
        %vm1402 = vmand %vm1146, %vm1274
        %vm1403 = vmand %vm1147, %vm1275
        %vm1404 = vmand %vm1148, %vm1276
        %vm1405 = vmand %vm1149, %vm1277
        %vm1406 = vmand %vm1150, %vm1278
        %vm1407 = vmand %vm1151, %vm1279
        %vm1408 = vmand %vm1152, %vm1280
        %vm1409 = vmand %vm1153, %vm1281
        %vm1410 = vmand %vm1154, %vm1282
        %vm1411 = vmand %vm1155, %vm1283
        %vm1412 = vmand %vm1156, %vm1284
        %vm1413 = vmand %vm1157, %vm1285
        %vm1414 = vmand %vm1158, %vm1286
        %vm1415 = vmand %vm1159, %vm1287
        %vm1416 = vmand %vm1160, %vm1288
        %vm1417 = vmand %vm1161, %vm1289
        %vm1418 = vmand %vm1162, %vm1290
        %vm1419 = vmand %vm1163, %vm1291
        %vm1420 = vmand %vm1164, %vm1292
        %vm1421 = vmand %vm1165, %vm1293
        %vm1422 = vmand %vm1166, %vm1294
        %vm1423 = vmand %vm1167, %vm1295
        %vm1424 = vmand %vm1168, %vm1296
        %vm1425 = vmand %vm1169, %vm1297
        %vm1426 = vmand %vm1170, %vm1298
        %v1427 = vsel %vm1299, 0.001953125, %v915
        %v1428 = vsel %vm1300, 0.001953125, %v916
        %v1429 = vsel %vm1301, 0.001953125, %v917
        %v1430 = vsel %vm1302, 0.001953125, %v918
        %v1431 = vsel %vm1303, 0.001953125, %v919
        %v1432 = vsel %vm1304, 0.001953125, %v920
        %v1433 = vsel %vm1305, 0.001953125, %v921
        %v1434 = vsel %vm1306, 0.001953125, %v922
        %v1435 = vsel %vm1307, 0.001953125, %v923
        %v1436 = vsel %vm1308, 0.001953125, %v924
        %v1437 = vsel %vm1309, 0.001953125, %v925
        %v1438 = vsel %vm1310, 0.001953125, %v926
        %v1439 = vsel %vm1311, 0.001953125, %v927
        %v1440 = vsel %vm1312, 0.001953125, %v928
        %v1441 = vsel %vm1313, 0.001953125, %v929
        %v1442 = vsel %vm1314, 0.001953125, %v930
        %v1443 = vsel %vm1315, 0.001953125, %v931
        %v1444 = vsel %vm1316, 0.001953125, %v932
        %v1445 = vsel %vm1317, 0.001953125, %v933
        %v1446 = vsel %vm1318, 0.001953125, %v934
        %v1447 = vsel %vm1319, 0.001953125, %v935
        %v1448 = vsel %vm1320, 0.001953125, %v936
        %v1449 = vsel %vm1321, 0.001953125, %v937
        %v1450 = vsel %vm1322, 0.001953125, %v938
        %v1451 = vsel %vm1323, 0.001953125, %v939
        %v1452 = vsel %vm1324, 0.001953125, %v940
        %v1453 = vsel %vm1325, 0.001953125, %v941
        %v1454 = vsel %vm1326, 0.001953125, %v942
        %v1455 = vsel %vm1327, 0.001953125, %v943
        %v1456 = vsel %vm1328, 0.001953125, %v944
        %v1457 = vsel %vm1329, 0.001953125, %v945
        %v1458 = vsel %vm1330, 0.001953125, %v946
        %v1459 = vsel %vm1331, 0.001953125, %v947
        %v1460 = vsel %vm1332, 0.001953125, %v948
        %v1461 = vsel %vm1333, 0.001953125, %v949
        %v1462 = vsel %vm1334, 0.001953125, %v950
        %v1463 = vsel %vm1335, 0.001953125, %v951
        %v1464 = vsel %vm1336, 0.001953125, %v952
        %v1465 = vsel %vm1337, 0.001953125, %v953
        %v1466 = vsel %vm1338, 0.001953125, %v954
        %v1467 = vsel %vm1339, 0.001953125, %v955
        %v1468 = vsel %vm1340, 0.001953125, %v956
        %v1469 = vsel %vm1341, 0.001953125, %v957
        %v1470 = vsel %vm1342, 0.001953125, %v958
        %v1471 = vsel %vm1343, 0.001953125, %v959
        %v1472 = vsel %vm1344, 0.001953125, %v960
        %v1473 = vsel %vm1345, 0.001953125, %v961
        %v1474 = vsel %vm1346, 0.001953125, %v962
        %v1475 = vsel %vm1347, 0.001953125, %v963
        %v1476 = vsel %vm1348, 0.001953125, %v964
        %v1477 = vsel %vm1349, 0.001953125, %v965
        %v1478 = vsel %vm1350, 0.001953125, %v966
        %v1479 = vsel %vm1351, 0.001953125, %v967
        %v1480 = vsel %vm1352, 0.001953125, %v968
        %v1481 = vsel %vm1353, 0.001953125, %v969
        %v1482 = vsel %vm1354, 0.001953125, %v970
        %v1483 = vsel %vm1355, 0.001953125, %v971
        %v1484 = vsel %vm1356, 0.001953125, %v972
        %v1485 = vsel %vm1357, 0.001953125, %v973
        %v1486 = vsel %vm1358, 0.001953125, %v974
        %v1487 = vsel %vm1359, 0.001953125, %v975
        %v1488 = vsel %vm1360, 0.001953125, %v976
        %v1489 = vsel %vm1361, 0.001953125, %v977
        %v1490 = vsel %vm1362, 0.001953125, %v978
        %v1491 = vsel %vm1363, 0.001953125, %v979
        %v1492 = vsel %vm1364, 0.001953125, %v980
        %v1493 = vsel %vm1365, 0.001953125, %v981
        %v1494 = vsel %vm1366, 0.001953125, %v982
        %v1495 = vsel %vm1367, 0.001953125, %v983
        %v1496 = vsel %vm1368, 0.001953125, %v984
        %v1497 = vsel %vm1369, 0.001953125, %v985
        %v1498 = vsel %vm1370, 0.001953125, %v986
        %v1499 = vsel %vm1371, 0.001953125, %v987
        %v1500 = vsel %vm1372, 0.001953125, %v988
        %v1501 = vsel %vm1373, 0.001953125, %v989
        %v1502 = vsel %vm1374, 0.001953125, %v990
        %v1503 = vsel %vm1375, 0.001953125, %v991
        %v1504 = vsel %vm1376, 0.001953125, %v992
        %v1505 = vsel %vm1377, 0.001953125, %v993
        %v1506 = vsel %vm1378, 0.001953125, %v994
        %v1507 = vsel %vm1379, 0.001953125, %v995
        %v1508 = vsel %vm1380, 0.001953125, %v996
        %v1509 = vsel %vm1381, 0.001953125, %v997
        %v1510 = vsel %vm1382, 0.001953125, %v998
        %v1511 = vsel %vm1383, 0.001953125, %v999
        %v1512 = vsel %vm1384, 0.001953125, %v1000
        %v1513 = vsel %vm1385, 0.001953125, %v1001
        %v1514 = vsel %vm1386, 0.001953125, %v1002
        %v1515 = vsel %vm1387, 0.001953125, %v1003
        %v1516 = vsel %vm1388, 0.001953125, %v1004
        %v1517 = vsel %vm1389, 0.001953125, %v1005
        %v1518 = vsel %vm1390, 0.001953125, %v1006
        %v1519 = vsel %vm1391, 0.001953125, %v1007
        %v1520 = vsel %vm1392, 0.001953125, %v1008
        %v1521 = vsel %vm1393, 0.001953125, %v1009
        %v1522 = vsel %vm1394, 0.001953125, %v1010
        %v1523 = vsel %vm1395, 0.001953125, %v1011
        %v1524 = vsel %vm1396, 0.001953125, %v1012
        %v1525 = vsel %vm1397, 0.001953125, %v1013
        %v1526 = vsel %vm1398, 0.001953125, %v1014
        %v1527 = vsel %vm1399, 0.001953125, %v1015
        %v1528 = vsel %vm1400, 0.001953125, %v1016
        %v1529 = vsel %vm1401, 0.001953125, %v1017
        %v1530 = vsel %vm1402, 0.001953125, %v1018
        %v1531 = vsel %vm1403, 0.001953125, %v1019
        %v1532 = vsel %vm1404, 0.001953125, %v1020
        %v1533 = vsel %vm1405, 0.001953125, %v1021
        %v1534 = vsel %vm1406, 0.001953125, %v1022
        %v1535 = vsel %vm1407, 0.001953125, %v1023
        %v1536 = vsel %vm1408, 0.001953125, %v1024
        %v1537 = vsel %vm1409, 0.001953125, %v1025
        %v1538 = vsel %vm1410, 0.001953125, %v1026
        %v1539 = vsel %vm1411, 0.001953125, %v1027
        %v1540 = vsel %vm1412, 0.001953125, %v1028
        %v1541 = vsel %vm1413, 0.001953125, %v1029
        %v1542 = vsel %vm1414, 0.001953125, %v1030
        %v1543 = vsel %vm1415, 0.001953125, %v1031
        %v1544 = vsel %vm1416, 0.001953125, %v1032
        %v1545 = vsel %vm1417, 0.001953125, %v1033
        %v1546 = vsel %vm1418, 0.001953125, %v1034
        %v1547 = vsel %vm1419, 0.001953125, %v1035
        %v1548 = vsel %vm1420, 0.001953125, %v1036
        %v1549 = vsel %vm1421, 0.001953125, %v1037
        %v1550 = vsel %vm1422, 0.001953125, %v1038
        %v1551 = vsel %vm1423, 0.001953125, %v1039
        %v1552 = vsel %vm1424, 0.001953125, %v1040
        %v1553 = vsel %vm1425, 0.001953125, %v1041
        %v1554 = vsel %vm1426, 0.001953125, %v1042
        %vm1555 = vcmp.ge.s32.totalorder %v403, 1028
        %vm1556 = vcmp.ge.s32.totalorder %v404, 1028
        %vm1557 = vcmp.ge.s32.totalorder %v405, 1028
        %vm1558 = vcmp.ge.s32.totalorder %v406, 1028
        %vm1559 = vcmp.ge.s32.totalorder %v407, 1028
        %vm1560 = vcmp.ge.s32.totalorder %v408, 1028
        %vm1561 = vcmp.ge.s32.totalorder %v409, 1028
        %vm1562 = vcmp.ge.s32.totalorder %v410, 1028
        %vm1563 = vcmp.ge.s32.totalorder %v411, 1028
        %vm1564 = vcmp.ge.s32.totalorder %v412, 1028
        %vm1565 = vcmp.ge.s32.totalorder %v413, 1028
        %vm1566 = vcmp.ge.s32.totalorder %v414, 1028
        %vm1567 = vcmp.ge.s32.totalorder %v415, 1028
        %vm1568 = vcmp.ge.s32.totalorder %v416, 1028
        %vm1569 = vcmp.ge.s32.totalorder %v417, 1028
        %vm1570 = vcmp.ge.s32.totalorder %v418, 1028
        %vm1571 = vcmp.ge.s32.totalorder %v419, 1028
        %vm1572 = vcmp.ge.s32.totalorder %v420, 1028
        %vm1573 = vcmp.ge.s32.totalorder %v421, 1028
        %vm1574 = vcmp.ge.s32.totalorder %v422, 1028
        %vm1575 = vcmp.ge.s32.totalorder %v423, 1028
        %vm1576 = vcmp.ge.s32.totalorder %v424, 1028
        %vm1577 = vcmp.ge.s32.totalorder %v425, 1028
        %vm1578 = vcmp.ge.s32.totalorder %v426, 1028
        %vm1579 = vcmp.ge.s32.totalorder %v427, 1028
        %vm1580 = vcmp.ge.s32.totalorder %v428, 1028
        %vm1581 = vcmp.ge.s32.totalorder %v429, 1028
        %vm1582 = vcmp.ge.s32.totalorder %v430, 1028
        %vm1583 = vcmp.ge.s32.totalorder %v431, 1028
        %vm1584 = vcmp.ge.s32.totalorder %v432, 1028
        %vm1585 = vcmp.ge.s32.totalorder %v433, 1028
        %vm1586 = vcmp.ge.s32.totalorder %v434, 1028
        %vm1587 = vcmp.ge.s32.totalorder %v435, 1028
        %vm1588 = vcmp.ge.s32.totalorder %v436, 1028
        %vm1589 = vcmp.ge.s32.totalorder %v437, 1028
        %vm1590 = vcmp.ge.s32.totalorder %v438, 1028
        %vm1591 = vcmp.ge.s32.totalorder %v439, 1028
        %vm1592 = vcmp.ge.s32.totalorder %v440, 1028
        %vm1593 = vcmp.ge.s32.totalorder %v441, 1028
        %vm1594 = vcmp.ge.s32.totalorder %v442, 1028
        %vm1595 = vcmp.ge.s32.totalorder %v443, 1028
        %vm1596 = vcmp.ge.s32.totalorder %v444, 1028
        %vm1597 = vcmp.ge.s32.totalorder %v445, 1028
        %vm1598 = vcmp.ge.s32.totalorder %v446, 1028
        %vm1599 = vcmp.ge.s32.totalorder %v447, 1028
        %vm1600 = vcmp.ge.s32.totalorder %v448, 1028
        %vm1601 = vcmp.ge.s32.totalorder %v449, 1028
        %vm1602 = vcmp.ge.s32.totalorder %v450, 1028
        %vm1603 = vcmp.ge.s32.totalorder %v451, 1028
        %vm1604 = vcmp.ge.s32.totalorder %v452, 1028
        %vm1605 = vcmp.ge.s32.totalorder %v453, 1028
        %vm1606 = vcmp.ge.s32.totalorder %v454, 1028
        %vm1607 = vcmp.ge.s32.totalorder %v455, 1028
        %vm1608 = vcmp.ge.s32.totalorder %v456, 1028
        %vm1609 = vcmp.ge.s32.totalorder %v457, 1028
        %vm1610 = vcmp.ge.s32.totalorder %v458, 1028
        %vm1611 = vcmp.ge.s32.totalorder %v459, 1028
        %vm1612 = vcmp.ge.s32.totalorder %v460, 1028
        %vm1613 = vcmp.ge.s32.totalorder %v461, 1028
        %vm1614 = vcmp.ge.s32.totalorder %v462, 1028
        %vm1615 = vcmp.ge.s32.totalorder %v463, 1028
        %vm1616 = vcmp.ge.s32.totalorder %v464, 1028
        %vm1617 = vcmp.ge.s32.totalorder %v465, 1028
        %vm1618 = vcmp.ge.s32.totalorder %v466, 1028
        %vm1619 = vcmp.ge.s32.totalorder %v467, 1028
        %vm1620 = vcmp.ge.s32.totalorder %v468, 1028
        %vm1621 = vcmp.ge.s32.totalorder %v469, 1028
        %vm1622 = vcmp.ge.s32.totalorder %v470, 1028
        %vm1623 = vcmp.ge.s32.totalorder %v471, 1028
        %vm1624 = vcmp.ge.s32.totalorder %v472, 1028
        %vm1625 = vcmp.ge.s32.totalorder %v473, 1028
        %vm1626 = vcmp.ge.s32.totalorder %v474, 1028
        %vm1627 = vcmp.ge.s32.totalorder %v475, 1028
        %vm1628 = vcmp.ge.s32.totalorder %v476, 1028
        %vm1629 = vcmp.ge.s32.totalorder %v477, 1028
        %vm1630 = vcmp.ge.s32.totalorder %v478, 1028
        %vm1631 = vcmp.ge.s32.totalorder %v479, 1028
        %vm1632 = vcmp.ge.s32.totalorder %v480, 1028
        %vm1633 = vcmp.ge.s32.totalorder %v481, 1028
        %vm1634 = vcmp.ge.s32.totalorder %v482, 1028
        %vm1635 = vcmp.ge.s32.totalorder %v483, 1028
        %vm1636 = vcmp.ge.s32.totalorder %v484, 1028
        %vm1637 = vcmp.ge.s32.totalorder %v485, 1028
        %vm1638 = vcmp.ge.s32.totalorder %v486, 1028
        %vm1639 = vcmp.ge.s32.totalorder %v487, 1028
        %vm1640 = vcmp.ge.s32.totalorder %v488, 1028
        %vm1641 = vcmp.ge.s32.totalorder %v489, 1028
        %vm1642 = vcmp.ge.s32.totalorder %v490, 1028
        %vm1643 = vcmp.ge.s32.totalorder %v491, 1028
        %vm1644 = vcmp.ge.s32.totalorder %v492, 1028
        %vm1645 = vcmp.ge.s32.totalorder %v493, 1028
        %vm1646 = vcmp.ge.s32.totalorder %v494, 1028
        %vm1647 = vcmp.ge.s32.totalorder %v495, 1028
        %vm1648 = vcmp.ge.s32.totalorder %v496, 1028
        %vm1649 = vcmp.ge.s32.totalorder %v497, 1028
        %vm1650 = vcmp.ge.s32.totalorder %v498, 1028
        %vm1651 = vcmp.ge.s32.totalorder %v499, 1028
        %vm1652 = vcmp.ge.s32.totalorder %v500, 1028
        %vm1653 = vcmp.ge.s32.totalorder %v501, 1028
        %vm1654 = vcmp.ge.s32.totalorder %v502, 1028
        %vm1655 = vcmp.ge.s32.totalorder %v503, 1028
        %vm1656 = vcmp.ge.s32.totalorder %v504, 1028
        %vm1657 = vcmp.ge.s32.totalorder %v505, 1028
        %vm1658 = vcmp.ge.s32.totalorder %v506, 1028
        %vm1659 = vcmp.ge.s32.totalorder %v507, 1028
        %vm1660 = vcmp.ge.s32.totalorder %v508, 1028
        %vm1661 = vcmp.ge.s32.totalorder %v509, 1028
        %vm1662 = vcmp.ge.s32.totalorder %v510, 1028
        %vm1663 = vcmp.ge.s32.totalorder %v511, 1028
        %vm1664 = vcmp.ge.s32.totalorder %v512, 1028
        %vm1665 = vcmp.ge.s32.totalorder %v513, 1028
        %vm1666 = vcmp.ge.s32.totalorder %v514, 1028
        %vm1667 = vcmp.ge.s32.totalorder %v515, 1028
        %vm1668 = vcmp.ge.s32.totalorder %v516, 1028
        %vm1669 = vcmp.ge.s32.totalorder %v517, 1028
        %vm1670 = vcmp.ge.s32.totalorder %v518, 1028
        %vm1671 = vcmp.ge.s32.totalorder %v519, 1028
        %vm1672 = vcmp.ge.s32.totalorder %v520, 1028
        %vm1673 = vcmp.ge.s32.totalorder %v521, 1028
        %vm1674 = vcmp.ge.s32.totalorder %v522, 1028
        %vm1675 = vcmp.ge.s32.totalorder %v523, 1028
        %vm1676 = vcmp.ge.s32.totalorder %v524, 1028
        %vm1677 = vcmp.ge.s32.totalorder %v525, 1028
        %vm1678 = vcmp.ge.s32.totalorder %v526, 1028
        %vm1679 = vcmp.ge.s32.totalorder %v527, 1028
        %vm1680 = vcmp.ge.s32.totalorder %v528, 1028
        %vm1681 = vcmp.ge.s32.totalorder %v529, 1028
        %vm1682 = vcmp.ge.s32.totalorder %v530, 1028
        %vm1683 = vcmp.lt.s32.totalorder %v403, 1029
        %vm1684 = vcmp.lt.s32.totalorder %v404, 1029
        %vm1685 = vcmp.lt.s32.totalorder %v405, 1029
        %vm1686 = vcmp.lt.s32.totalorder %v406, 1029
        %vm1687 = vcmp.lt.s32.totalorder %v407, 1029
        %vm1688 = vcmp.lt.s32.totalorder %v408, 1029
        %vm1689 = vcmp.lt.s32.totalorder %v409, 1029
        %vm1690 = vcmp.lt.s32.totalorder %v410, 1029
        %vm1691 = vcmp.lt.s32.totalorder %v411, 1029
        %vm1692 = vcmp.lt.s32.totalorder %v412, 1029
        %vm1693 = vcmp.lt.s32.totalorder %v413, 1029
        %vm1694 = vcmp.lt.s32.totalorder %v414, 1029
        %vm1695 = vcmp.lt.s32.totalorder %v415, 1029
        %vm1696 = vcmp.lt.s32.totalorder %v416, 1029
        %vm1697 = vcmp.lt.s32.totalorder %v417, 1029
        %vm1698 = vcmp.lt.s32.totalorder %v418, 1029
        %vm1699 = vcmp.lt.s32.totalorder %v419, 1029
        %vm1700 = vcmp.lt.s32.totalorder %v420, 1029
        %vm1701 = vcmp.lt.s32.totalorder %v421, 1029
        %vm1702 = vcmp.lt.s32.totalorder %v422, 1029
        %vm1703 = vcmp.lt.s32.totalorder %v423, 1029
        %vm1704 = vcmp.lt.s32.totalorder %v424, 1029
        %vm1705 = vcmp.lt.s32.totalorder %v425, 1029
        %vm1706 = vcmp.lt.s32.totalorder %v426, 1029
        %vm1707 = vcmp.lt.s32.totalorder %v427, 1029
        %vm1708 = vcmp.lt.s32.totalorder %v428, 1029
        %vm1709 = vcmp.lt.s32.totalorder %v429, 1029
        %vm1710 = vcmp.lt.s32.totalorder %v430, 1029
        %vm1711 = vcmp.lt.s32.totalorder %v431, 1029
        %vm1712 = vcmp.lt.s32.totalorder %v432, 1029
        %vm1713 = vcmp.lt.s32.totalorder %v433, 1029
        %vm1714 = vcmp.lt.s32.totalorder %v434, 1029
        %vm1715 = vcmp.lt.s32.totalorder %v435, 1029
        %vm1716 = vcmp.lt.s32.totalorder %v436, 1029
        %vm1717 = vcmp.lt.s32.totalorder %v437, 1029
        %vm1718 = vcmp.lt.s32.totalorder %v438, 1029
        %vm1719 = vcmp.lt.s32.totalorder %v439, 1029
        %vm1720 = vcmp.lt.s32.totalorder %v440, 1029
        %vm1721 = vcmp.lt.s32.totalorder %v441, 1029
        %vm1722 = vcmp.lt.s32.totalorder %v442, 1029
        %vm1723 = vcmp.lt.s32.totalorder %v443, 1029
        %vm1724 = vcmp.lt.s32.totalorder %v444, 1029
        %vm1725 = vcmp.lt.s32.totalorder %v445, 1029
        %vm1726 = vcmp.lt.s32.totalorder %v446, 1029
        %vm1727 = vcmp.lt.s32.totalorder %v447, 1029
        %vm1728 = vcmp.lt.s32.totalorder %v448, 1029
        %vm1729 = vcmp.lt.s32.totalorder %v449, 1029
        %vm1730 = vcmp.lt.s32.totalorder %v450, 1029
        %vm1731 = vcmp.lt.s32.totalorder %v451, 1029
        %vm1732 = vcmp.lt.s32.totalorder %v452, 1029
        %vm1733 = vcmp.lt.s32.totalorder %v453, 1029
        %vm1734 = vcmp.lt.s32.totalorder %v454, 1029
        %vm1735 = vcmp.lt.s32.totalorder %v455, 1029
        %vm1736 = vcmp.lt.s32.totalorder %v456, 1029
        %vm1737 = vcmp.lt.s32.totalorder %v457, 1029
        %vm1738 = vcmp.lt.s32.totalorder %v458, 1029
        %vm1739 = vcmp.lt.s32.totalorder %v459, 1029
        %vm1740 = vcmp.lt.s32.totalorder %v460, 1029
        %vm1741 = vcmp.lt.s32.totalorder %v461, 1029
        %vm1742 = vcmp.lt.s32.totalorder %v462, 1029
        %vm1743 = vcmp.lt.s32.totalorder %v463, 1029
        %vm1744 = vcmp.lt.s32.totalorder %v464, 1029
        %vm1745 = vcmp.lt.s32.totalorder %v465, 1029
        %vm1746 = vcmp.lt.s32.totalorder %v466, 1029
        %vm1747 = vcmp.lt.s32.totalorder %v467, 1029
        %vm1748 = vcmp.lt.s32.totalorder %v468, 1029
        %vm1749 = vcmp.lt.s32.totalorder %v469, 1029
        %vm1750 = vcmp.lt.s32.totalorder %v470, 1029
        %vm1751 = vcmp.lt.s32.totalorder %v471, 1029
        %vm1752 = vcmp.lt.s32.totalorder %v472, 1029
        %vm1753 = vcmp.lt.s32.totalorder %v473, 1029
        %vm1754 = vcmp.lt.s32.totalorder %v474, 1029
        %vm1755 = vcmp.lt.s32.totalorder %v475, 1029
        %vm1756 = vcmp.lt.s32.totalorder %v476, 1029
        %vm1757 = vcmp.lt.s32.totalorder %v477, 1029
        %vm1758 = vcmp.lt.s32.totalorder %v478, 1029
        %vm1759 = vcmp.lt.s32.totalorder %v479, 1029
        %vm1760 = vcmp.lt.s32.totalorder %v480, 1029
        %vm1761 = vcmp.lt.s32.totalorder %v481, 1029
        %vm1762 = vcmp.lt.s32.totalorder %v482, 1029
        %vm1763 = vcmp.lt.s32.totalorder %v483, 1029
        %vm1764 = vcmp.lt.s32.totalorder %v484, 1029
        %vm1765 = vcmp.lt.s32.totalorder %v485, 1029
        %vm1766 = vcmp.lt.s32.totalorder %v486, 1029
        %vm1767 = vcmp.lt.s32.totalorder %v487, 1029
        %vm1768 = vcmp.lt.s32.totalorder %v488, 1029
        %vm1769 = vcmp.lt.s32.totalorder %v489, 1029
        %vm1770 = vcmp.lt.s32.totalorder %v490, 1029
        %vm1771 = vcmp.lt.s32.totalorder %v491, 1029
        %vm1772 = vcmp.lt.s32.totalorder %v492, 1029
        %vm1773 = vcmp.lt.s32.totalorder %v493, 1029
        %vm1774 = vcmp.lt.s32.totalorder %v494, 1029
        %vm1775 = vcmp.lt.s32.totalorder %v495, 1029
        %vm1776 = vcmp.lt.s32.totalorder %v496, 1029
        %vm1777 = vcmp.lt.s32.totalorder %v497, 1029
        %vm1778 = vcmp.lt.s32.totalorder %v498, 1029
        %vm1779 = vcmp.lt.s32.totalorder %v499, 1029
        %vm1780 = vcmp.lt.s32.totalorder %v500, 1029
        %vm1781 = vcmp.lt.s32.totalorder %v501, 1029
        %vm1782 = vcmp.lt.s32.totalorder %v502, 1029
        %vm1783 = vcmp.lt.s32.totalorder %v503, 1029
        %vm1784 = vcmp.lt.s32.totalorder %v504, 1029
        %vm1785 = vcmp.lt.s32.totalorder %v505, 1029
        %vm1786 = vcmp.lt.s32.totalorder %v506, 1029
        %vm1787 = vcmp.lt.s32.totalorder %v507, 1029
        %vm1788 = vcmp.lt.s32.totalorder %v508, 1029
        %vm1789 = vcmp.lt.s32.totalorder %v509, 1029
        %vm1790 = vcmp.lt.s32.totalorder %v510, 1029
        %vm1791 = vcmp.lt.s32.totalorder %v511, 1029
        %vm1792 = vcmp.lt.s32.totalorder %v512, 1029
        %vm1793 = vcmp.lt.s32.totalorder %v513, 1029
        %vm1794 = vcmp.lt.s32.totalorder %v514, 1029
        %vm1795 = vcmp.lt.s32.totalorder %v515, 1029
        %vm1796 = vcmp.lt.s32.totalorder %v516, 1029
        %vm1797 = vcmp.lt.s32.totalorder %v517, 1029
        %vm1798 = vcmp.lt.s32.totalorder %v518, 1029
        %vm1799 = vcmp.lt.s32.totalorder %v519, 1029
        %vm1800 = vcmp.lt.s32.totalorder %v520, 1029
        %vm1801 = vcmp.lt.s32.totalorder %v521, 1029
        %vm1802 = vcmp.lt.s32.totalorder %v522, 1029
        %vm1803 = vcmp.lt.s32.totalorder %v523, 1029
        %vm1804 = vcmp.lt.s32.totalorder %v524, 1029
        %vm1805 = vcmp.lt.s32.totalorder %v525, 1029
        %vm1806 = vcmp.lt.s32.totalorder %v526, 1029
        %vm1807 = vcmp.lt.s32.totalorder %v527, 1029
        %vm1808 = vcmp.lt.s32.totalorder %v528, 1029
        %vm1809 = vcmp.lt.s32.totalorder %v529, 1029
        %vm1810 = vcmp.lt.s32.totalorder %v530, 1029
        %vm1811 = vmand %vm1555, %vm1683
        %vm1812 = vmand %vm1556, %vm1684
        %vm1813 = vmand %vm1557, %vm1685
        %vm1814 = vmand %vm1558, %vm1686
        %vm1815 = vmand %vm1559, %vm1687
        %vm1816 = vmand %vm1560, %vm1688
        %vm1817 = vmand %vm1561, %vm1689
        %vm1818 = vmand %vm1562, %vm1690
        %vm1819 = vmand %vm1563, %vm1691
        %vm1820 = vmand %vm1564, %vm1692
        %vm1821 = vmand %vm1565, %vm1693
        %vm1822 = vmand %vm1566, %vm1694
        %vm1823 = vmand %vm1567, %vm1695
        %vm1824 = vmand %vm1568, %vm1696
        %vm1825 = vmand %vm1569, %vm1697
        %vm1826 = vmand %vm1570, %vm1698
        %vm1827 = vmand %vm1571, %vm1699
        %vm1828 = vmand %vm1572, %vm1700
        %vm1829 = vmand %vm1573, %vm1701
        %vm1830 = vmand %vm1574, %vm1702
        %vm1831 = vmand %vm1575, %vm1703
        %vm1832 = vmand %vm1576, %vm1704
        %vm1833 = vmand %vm1577, %vm1705
        %vm1834 = vmand %vm1578, %vm1706
        %vm1835 = vmand %vm1579, %vm1707
        %vm1836 = vmand %vm1580, %vm1708
        %vm1837 = vmand %vm1581, %vm1709
        %vm1838 = vmand %vm1582, %vm1710
        %vm1839 = vmand %vm1583, %vm1711
        %vm1840 = vmand %vm1584, %vm1712
        %vm1841 = vmand %vm1585, %vm1713
        %vm1842 = vmand %vm1586, %vm1714
        %vm1843 = vmand %vm1587, %vm1715
        %vm1844 = vmand %vm1588, %vm1716
        %vm1845 = vmand %vm1589, %vm1717
        %vm1846 = vmand %vm1590, %vm1718
        %vm1847 = vmand %vm1591, %vm1719
        %vm1848 = vmand %vm1592, %vm1720
        %vm1849 = vmand %vm1593, %vm1721
        %vm1850 = vmand %vm1594, %vm1722
        %vm1851 = vmand %vm1595, %vm1723
        %vm1852 = vmand %vm1596, %vm1724
        %vm1853 = vmand %vm1597, %vm1725
        %vm1854 = vmand %vm1598, %vm1726
        %vm1855 = vmand %vm1599, %vm1727
        %vm1856 = vmand %vm1600, %vm1728
        %vm1857 = vmand %vm1601, %vm1729
        %vm1858 = vmand %vm1602, %vm1730
        %vm1859 = vmand %vm1603, %vm1731
        %vm1860 = vmand %vm1604, %vm1732
        %vm1861 = vmand %vm1605, %vm1733
        %vm1862 = vmand %vm1606, %vm1734
        %vm1863 = vmand %vm1607, %vm1735
        %vm1864 = vmand %vm1608, %vm1736
        %vm1865 = vmand %vm1609, %vm1737
        %vm1866 = vmand %vm1610, %vm1738
        %vm1867 = vmand %vm1611, %vm1739
        %vm1868 = vmand %vm1612, %vm1740
        %vm1869 = vmand %vm1613, %vm1741
        %vm1870 = vmand %vm1614, %vm1742
        %vm1871 = vmand %vm1615, %vm1743
        %vm1872 = vmand %vm1616, %vm1744
        %vm1873 = vmand %vm1617, %vm1745
        %vm1874 = vmand %vm1618, %vm1746
        %vm1875 = vmand %vm1619, %vm1747
        %vm1876 = vmand %vm1620, %vm1748
        %vm1877 = vmand %vm1621, %vm1749
        %vm1878 = vmand %vm1622, %vm1750
        %vm1879 = vmand %vm1623, %vm1751
        %vm1880 = vmand %vm1624, %vm1752
        %vm1881 = vmand %vm1625, %vm1753
        %vm1882 = vmand %vm1626, %vm1754
        %vm1883 = vmand %vm1627, %vm1755
        %vm1884 = vmand %vm1628, %vm1756
        %vm1885 = vmand %vm1629, %vm1757
        %vm1886 = vmand %vm1630, %vm1758
        %vm1887 = vmand %vm1631, %vm1759
        %vm1888 = vmand %vm1632, %vm1760
        %vm1889 = vmand %vm1633, %vm1761
        %vm1890 = vmand %vm1634, %vm1762
        %vm1891 = vmand %vm1635, %vm1763
        %vm1892 = vmand %vm1636, %vm1764
        %vm1893 = vmand %vm1637, %vm1765
        %vm1894 = vmand %vm1638, %vm1766
        %vm1895 = vmand %vm1639, %vm1767
        %vm1896 = vmand %vm1640, %vm1768
        %vm1897 = vmand %vm1641, %vm1769
        %vm1898 = vmand %vm1642, %vm1770
        %vm1899 = vmand %vm1643, %vm1771
        %vm1900 = vmand %vm1644, %vm1772
        %vm1901 = vmand %vm1645, %vm1773
        %vm1902 = vmand %vm1646, %vm1774
        %vm1903 = vmand %vm1647, %vm1775
        %vm1904 = vmand %vm1648, %vm1776
        %vm1905 = vmand %vm1649, %vm1777
        %vm1906 = vmand %vm1650, %vm1778
        %vm1907 = vmand %vm1651, %vm1779
        %vm1908 = vmand %vm1652, %vm1780
        %vm1909 = vmand %vm1653, %vm1781
        %vm1910 = vmand %vm1654, %vm1782
        %vm1911 = vmand %vm1655, %vm1783
        %vm1912 = vmand %vm1656, %vm1784
        %vm1913 = vmand %vm1657, %vm1785
        %vm1914 = vmand %vm1658, %vm1786
        %vm1915 = vmand %vm1659, %vm1787
        %vm1916 = vmand %vm1660, %vm1788
        %vm1917 = vmand %vm1661, %vm1789
        %vm1918 = vmand %vm1662, %vm1790
        %vm1919 = vmand %vm1663, %vm1791
        %vm1920 = vmand %vm1664, %vm1792
        %vm1921 = vmand %vm1665, %vm1793
        %vm1922 = vmand %vm1666, %vm1794
        %vm1923 = vmand %vm1667, %vm1795
        %vm1924 = vmand %vm1668, %vm1796
        %vm1925 = vmand %vm1669, %vm1797
        %vm1926 = vmand %vm1670, %vm1798
        %vm1927 = vmand %vm1671, %vm1799
        %vm1928 = vmand %vm1672, %vm1800
        %vm1929 = vmand %vm1673, %vm1801
        %vm1930 = vmand %vm1674, %vm1802
        %vm1931 = vmand %vm1675, %vm1803
        %vm1932 = vmand %vm1676, %vm1804
        %vm1933 = vmand %vm1677, %vm1805
        %vm1934 = vmand %vm1678, %vm1806
        %vm1935 = vmand %vm1679, %vm1807
        %vm1936 = vmand %vm1680, %vm1808
        %vm1937 = vmand %vm1681, %vm1809
        %vm1938 = vmand %vm1682, %vm1810
        %v1939 = vsel %vm1811, 0.06666667, %v1427
        %v1940 = vsel %vm1812, 0.06666667, %v1428
        %v1941 = vsel %vm1813, 0.06666667, %v1429
        %v1942 = vsel %vm1814, 0.06666667, %v1430
        %v1943 = vsel %vm1815, 0.06666667, %v1431
        %v1944 = vsel %vm1816, 0.06666667, %v1432
        %v1945 = vsel %vm1817, 0.06666667, %v1433
        %v1946 = vsel %vm1818, 0.06666667, %v1434
        %v1947 = vsel %vm1819, 0.06666667, %v1435
        %v1948 = vsel %vm1820, 0.06666667, %v1436
        %v1949 = vsel %vm1821, 0.06666667, %v1437
        %v1950 = vsel %vm1822, 0.06666667, %v1438
        %v1951 = vsel %vm1823, 0.06666667, %v1439
        %v1952 = vsel %vm1824, 0.06666667, %v1440
        %v1953 = vsel %vm1825, 0.06666667, %v1441
        %v1954 = vsel %vm1826, 0.06666667, %v1442
        %v1955 = vsel %vm1827, 0.06666667, %v1443
        %v1956 = vsel %vm1828, 0.06666667, %v1444
        %v1957 = vsel %vm1829, 0.06666667, %v1445
        %v1958 = vsel %vm1830, 0.06666667, %v1446
        %v1959 = vsel %vm1831, 0.06666667, %v1447
        %v1960 = vsel %vm1832, 0.06666667, %v1448
        %v1961 = vsel %vm1833, 0.06666667, %v1449
        %v1962 = vsel %vm1834, 0.06666667, %v1450
        %v1963 = vsel %vm1835, 0.06666667, %v1451
        %v1964 = vsel %vm1836, 0.06666667, %v1452
        %v1965 = vsel %vm1837, 0.06666667, %v1453
        %v1966 = vsel %vm1838, 0.06666667, %v1454
        %v1967 = vsel %vm1839, 0.06666667, %v1455
        %v1968 = vsel %vm1840, 0.06666667, %v1456
        %v1969 = vsel %vm1841, 0.06666667, %v1457
        %v1970 = vsel %vm1842, 0.06666667, %v1458
        %v1971 = vsel %vm1843, 0.06666667, %v1459
        %v1972 = vsel %vm1844, 0.06666667, %v1460
        %v1973 = vsel %vm1845, 0.06666667, %v1461
        %v1974 = vsel %vm1846, 0.06666667, %v1462
        %v1975 = vsel %vm1847, 0.06666667, %v1463
        %v1976 = vsel %vm1848, 0.06666667, %v1464
        %v1977 = vsel %vm1849, 0.06666667, %v1465
        %v1978 = vsel %vm1850, 0.06666667, %v1466
        %v1979 = vsel %vm1851, 0.06666667, %v1467
        %v1980 = vsel %vm1852, 0.06666667, %v1468
        %v1981 = vsel %vm1853, 0.06666667, %v1469
        %v1982 = vsel %vm1854, 0.06666667, %v1470
        %v1983 = vsel %vm1855, 0.06666667, %v1471
        %v1984 = vsel %vm1856, 0.06666667, %v1472
        %v1985 = vsel %vm1857, 0.06666667, %v1473
        %v1986 = vsel %vm1858, 0.06666667, %v1474
        %v1987 = vsel %vm1859, 0.06666667, %v1475
        %v1988 = vsel %vm1860, 0.06666667, %v1476
        %v1989 = vsel %vm1861, 0.06666667, %v1477
        %v1990 = vsel %vm1862, 0.06666667, %v1478
        %v1991 = vsel %vm1863, 0.06666667, %v1479
        %v1992 = vsel %vm1864, 0.06666667, %v1480
        %v1993 = vsel %vm1865, 0.06666667, %v1481
        %v1994 = vsel %vm1866, 0.06666667, %v1482
        %v1995 = vsel %vm1867, 0.06666667, %v1483
        %v1996 = vsel %vm1868, 0.06666667, %v1484
        %v1997 = vsel %vm1869, 0.06666667, %v1485
        %v1998 = vsel %vm1870, 0.06666667, %v1486
        %v1999 = vsel %vm1871, 0.06666667, %v1487
        %v2000 = vsel %vm1872, 0.06666667, %v1488
        %v2001 = vsel %vm1873, 0.06666667, %v1489
        %v2002 = vsel %vm1874, 0.06666667, %v1490
        %v2003 = vsel %vm1875, 0.06666667, %v1491
        %v2004 = vsel %vm1876, 0.06666667, %v1492
        %v2005 = vsel %vm1877, 0.06666667, %v1493
        %v2006 = vsel %vm1878, 0.06666667, %v1494
        %v2007 = vsel %vm1879, 0.06666667, %v1495
        %v2008 = vsel %vm1880, 0.06666667, %v1496
        %v2009 = vsel %vm1881, 0.06666667, %v1497
        %v2010 = vsel %vm1882, 0.06666667, %v1498
        %v2011 = vsel %vm1883, 0.06666667, %v1499
        %v2012 = vsel %vm1884, 0.06666667, %v1500
        %v2013 = vsel %vm1885, 0.06666667, %v1501
        %v2014 = vsel %vm1886, 0.06666667, %v1502
        %v2015 = vsel %vm1887, 0.06666667, %v1503
        %v2016 = vsel %vm1888, 0.06666667, %v1504
        %v2017 = vsel %vm1889, 0.06666667, %v1505
        %v2018 = vsel %vm1890, 0.06666667, %v1506
        %v2019 = vsel %vm1891, 0.06666667, %v1507
        %v2020 = vsel %vm1892, 0.06666667, %v1508
        %v2021 = vsel %vm1893, 0.06666667, %v1509
        %v2022 = vsel %vm1894, 0.06666667, %v1510
        %v2023 = vsel %vm1895, 0.06666667, %v1511
        %v2024 = vsel %vm1896, 0.06666667, %v1512
        %v2025 = vsel %vm1897, 0.06666667, %v1513
        %v2026 = vsel %vm1898, 0.06666667, %v1514
        %v2027 = vsel %vm1899, 0.06666667, %v1515
        %v2028 = vsel %vm1900, 0.06666667, %v1516
        %v2029 = vsel %vm1901, 0.06666667, %v1517
        %v2030 = vsel %vm1902, 0.06666667, %v1518
        %v2031 = vsel %vm1903, 0.06666667, %v1519
        %v2032 = vsel %vm1904, 0.06666667, %v1520
        %v2033 = vsel %vm1905, 0.06666667, %v1521
        %v2034 = vsel %vm1906, 0.06666667, %v1522
        %v2035 = vsel %vm1907, 0.06666667, %v1523
        %v2036 = vsel %vm1908, 0.06666667, %v1524
        %v2037 = vsel %vm1909, 0.06666667, %v1525
        %v2038 = vsel %vm1910, 0.06666667, %v1526
        %v2039 = vsel %vm1911, 0.06666667, %v1527
        %v2040 = vsel %vm1912, 0.06666667, %v1528
        %v2041 = vsel %vm1913, 0.06666667, %v1529
        %v2042 = vsel %vm1914, 0.06666667, %v1530
        %v2043 = vsel %vm1915, 0.06666667, %v1531
        %v2044 = vsel %vm1916, 0.06666667, %v1532
        %v2045 = vsel %vm1917, 0.06666667, %v1533
        %v2046 = vsel %vm1918, 0.06666667, %v1534
        %v2047 = vsel %vm1919, 0.06666667, %v1535
        %v2048 = vsel %vm1920, 0.06666667, %v1536
        %v2049 = vsel %vm1921, 0.06666667, %v1537
        %v2050 = vsel %vm1922, 0.06666667, %v1538
        %v2051 = vsel %vm1923, 0.06666667, %v1539
        %v2052 = vsel %vm1924, 0.06666667, %v1540
        %v2053 = vsel %vm1925, 0.06666667, %v1541
        %v2054 = vsel %vm1926, 0.06666667, %v1542
        %v2055 = vsel %vm1927, 0.06666667, %v1543
        %v2056 = vsel %vm1928, 0.06666667, %v1544
        %v2057 = vsel %vm1929, 0.06666667, %v1545
        %v2058 = vsel %vm1930, 0.06666667, %v1546
        %v2059 = vsel %vm1931, 0.06666667, %v1547
        %v2060 = vsel %vm1932, 0.06666667, %v1548
        %v2061 = vsel %vm1933, 0.06666667, %v1549
        %v2062 = vsel %vm1934, 0.06666667, %v1550
        %v2063 = vsel %vm1935, 0.06666667, %v1551
        %v2064 = vsel %vm1936, 0.06666667, %v1552
        %v2065 = vsel %vm1937, 0.06666667, %v1553
        %v2066 = vsel %vm1938, 0.06666667, %v1554
        %v2067 = vld [vmem:[%s213] sm:$0xff]
        %v2068 = vld [vmem:[%s213 + $0x8] sm:$0xff]
        %v2069 = vld [vmem:[%s213 + $0x10] sm:$0xff]
        %v2070 = vld [vmem:[%s213 + $0x18] sm:$0xff]
        %v2071 = vld [vmem:[%s213 + $0x20] sm:$0xff]
        %v2072 = vld [vmem:[%s213 + $0x28] sm:$0xff]
        %v2073 = vld [vmem:[%s213 + $0x30] sm:$0xff]
        %v2074 = vld [vmem:[%s213 + $0x38] sm:$0xff]
        %v2075 = vld [vmem:[%s213 + $0x40] sm:$0xff]
        %v2076 = vld [vmem:[%s213 + $0x48] sm:$0xff]
        %v2077 = vld [vmem:[%s213 + $0x50] sm:$0xff]
        %v2078 = vld [vmem:[%s213 + $0x58] sm:$0xff]
        %v2079 = vld [vmem:[%s213 + $0x60] sm:$0xff]
        %v2080 = vld [vmem:[%s213 + $0x68] sm:$0xff]
        %v2081 = vld [vmem:[%s213 + $0x70] sm:$0xff]
        %v2082 = vld [vmem:[%s213 + $0x78] sm:$0xff]
        %v2083 = vld [vmem:[%s213 + $0x80] sm:$0xff]
        %v2084 = vld [vmem:[%s213 + $0x88] sm:$0xff]
        %v2085 = vld [vmem:[%s213 + $0x90] sm:$0xff]
        %v2086 = vld [vmem:[%s213 + $0x98] sm:$0xff]
        %v2087 = vld [vmem:[%s213 + $0xa0] sm:$0xff]
        %v2088 = vld [vmem:[%s213 + $0xa8] sm:$0xff]
        %v2089 = vld [vmem:[%s213 + $0xb0] sm:$0xff]
        %v2090 = vld [vmem:[%s213 + $0xb8] sm:$0xff]
        %v2091 = vld [vmem:[%s213 + $0xc0] sm:$0xff]
        %v2092 = vld [vmem:[%s213 + $0xc8] sm:$0xff]
        %v2093 = vld [vmem:[%s213 + $0xd0] sm:$0xff]
        %v2094 = vld [vmem:[%s213 + $0xd8] sm:$0xff]
        %v2095 = vld [vmem:[%s213 + $0xe0] sm:$0xff]
        %v2096 = vld [vmem:[%s213 + $0xe8] sm:$0xff]
        %v2097 = vld [vmem:[%s213 + $0xf0] sm:$0xff]
        %v2098 = vld [vmem:[%s213 + $0xf8] sm:$0xff]
        %v2099 = vld [vmem:[%s213 + $0x100] sm:$0xff]
        %v2100 = vld [vmem:[%s213 + $0x108] sm:$0xff]
        %v2101 = vld [vmem:[%s213 + $0x110] sm:$0xff]
        %v2102 = vld [vmem:[%s213 + $0x118] sm:$0xff]
        %v2103 = vld [vmem:[%s213 + $0x120] sm:$0xff]
        %v2104 = vld [vmem:[%s213 + $0x128] sm:$0xff]
        %v2105 = vld [vmem:[%s213 + $0x130] sm:$0xff]
        %v2106 = vld [vmem:[%s213 + $0x138] sm:$0xff]
        %v2107 = vld [vmem:[%s213 + $0x140] sm:$0xff]
        %v2108 = vld [vmem:[%s213 + $0x148] sm:$0xff]
        %v2109 = vld [vmem:[%s213 + $0x150] sm:$0xff]
        %v2110 = vld [vmem:[%s213 + $0x158] sm:$0xff]
        %v2111 = vld [vmem:[%s213 + $0x160] sm:$0xff]
        %v2112 = vld [vmem:[%s213 + $0x168] sm:$0xff]
        %v2113 = vld [vmem:[%s213 + $0x170] sm:$0xff]
        %v2114 = vld [vmem:[%s213 + $0x178] sm:$0xff]
        %v2115 = vld [vmem:[%s213 + $0x180] sm:$0xff]
        %v2116 = vld [vmem:[%s213 + $0x188] sm:$0xff]
        %v2117 = vld [vmem:[%s213 + $0x190] sm:$0xff]
        %v2118 = vld [vmem:[%s213 + $0x198] sm:$0xff]
        %v2119 = vld [vmem:[%s213 + $0x1a0] sm:$0xff]
        %v2120 = vld [vmem:[%s213 + $0x1a8] sm:$0xff]
        %v2121 = vld [vmem:[%s213 + $0x1b0] sm:$0xff]
        %v2122 = vld [vmem:[%s213 + $0x1b8] sm:$0xff]
        %v2123 = vld [vmem:[%s213 + $0x1c0] sm:$0xff]
        %v2124 = vld [vmem:[%s213 + $0x1c8] sm:$0xff]
        %v2125 = vld [vmem:[%s213 + $0x1d0] sm:$0xff]
        %v2126 = vld [vmem:[%s213 + $0x1d8] sm:$0xff]
        %v2127 = vld [vmem:[%s213 + $0x1e0] sm:$0xff]
        %v2128 = vld [vmem:[%s213 + $0x1e8] sm:$0xff]
        %v2129 = vld [vmem:[%s213 + $0x1f0] sm:$0xff]
        %v2130 = vld [vmem:[%s213 + $0x1f8] sm:$0xff]
        %v2131 = vld [vmem:[%s213 + $0x200] sm:$0xff]
        %v2132 = vld [vmem:[%s213 + $0x208] sm:$0xff]
        %v2133 = vld [vmem:[%s213 + $0x210] sm:$0xff]
        %v2134 = vld [vmem:[%s213 + $0x218] sm:$0xff]
        %v2135 = vld [vmem:[%s213 + $0x220] sm:$0xff]
        %v2136 = vld [vmem:[%s213 + $0x228] sm:$0xff]
        %v2137 = vld [vmem:[%s213 + $0x230] sm:$0xff]
        %v2138 = vld [vmem:[%s213 + $0x238] sm:$0xff]
        %v2139 = vld [vmem:[%s213 + $0x240] sm:$0xff]
        %v2140 = vld [vmem:[%s213 + $0x248] sm:$0xff]
        %v2141 = vld [vmem:[%s213 + $0x250] sm:$0xff]
        %v2142 = vld [vmem:[%s213 + $0x258] sm:$0xff]
        %v2143 = vld [vmem:[%s213 + $0x260] sm:$0xff]
        %v2144 = vld [vmem:[%s213 + $0x268] sm:$0xff]
        %v2145 = vld [vmem:[%s213 + $0x270] sm:$0xff]
        %v2146 = vld [vmem:[%s213 + $0x278] sm:$0xff]
        %v2147 = vld [vmem:[%s213 + $0x280] sm:$0xff]
        %v2148 = vld [vmem:[%s213 + $0x288] sm:$0xff]
        %v2149 = vld [vmem:[%s213 + $0x290] sm:$0xff]
        %v2150 = vld [vmem:[%s213 + $0x298] sm:$0xff]
        %v2151 = vld [vmem:[%s213 + $0x2a0] sm:$0xff]
        %v2152 = vld [vmem:[%s213 + $0x2a8] sm:$0xff]
        %v2153 = vld [vmem:[%s213 + $0x2b0] sm:$0xff]
        %v2154 = vld [vmem:[%s213 + $0x2b8] sm:$0xff]
        %v2155 = vld [vmem:[%s213 + $0x2c0] sm:$0xff]
        %v2156 = vld [vmem:[%s213 + $0x2c8] sm:$0xff]
        %v2157 = vld [vmem:[%s213 + $0x2d0] sm:$0xff]
        %v2158 = vld [vmem:[%s213 + $0x2d8] sm:$0xff]
        %v2159 = vld [vmem:[%s213 + $0x2e0] sm:$0xff]
        %v2160 = vld [vmem:[%s213 + $0x2e8] sm:$0xff]
        %v2161 = vld [vmem:[%s213 + $0x2f0] sm:$0xff]
        %v2162 = vld [vmem:[%s213 + $0x2f8] sm:$0xff]
        %v2163 = vld [vmem:[%s213 + $0x300] sm:$0xff]
        %v2164 = vld [vmem:[%s213 + $0x308] sm:$0xff]
        %v2165 = vld [vmem:[%s213 + $0x310] sm:$0xff]
        %v2166 = vld [vmem:[%s213 + $0x318] sm:$0xff]
        %v2167 = vld [vmem:[%s213 + $0x320] sm:$0xff]
        %v2168 = vld [vmem:[%s213 + $0x328] sm:$0xff]
        %v2169 = vld [vmem:[%s213 + $0x330] sm:$0xff]
        %v2170 = vld [vmem:[%s213 + $0x338] sm:$0xff]
        %v2171 = vld [vmem:[%s213 + $0x340] sm:$0xff]
        %v2172 = vld [vmem:[%s213 + $0x348] sm:$0xff]
        %v2173 = vld [vmem:[%s213 + $0x350] sm:$0xff]
        %v2174 = vld [vmem:[%s213 + $0x358] sm:$0xff]
        %v2175 = vld [vmem:[%s213 + $0x360] sm:$0xff]
        %v2176 = vld [vmem:[%s213 + $0x368] sm:$0xff]
        %v2177 = vld [vmem:[%s213 + $0x370] sm:$0xff]
        %v2178 = vld [vmem:[%s213 + $0x378] sm:$0xff]
        %v2179 = vld [vmem:[%s213 + $0x380] sm:$0xff]
        %v2180 = vld [vmem:[%s213 + $0x388] sm:$0xff]
        %v2181 = vld [vmem:[%s213 + $0x390] sm:$0xff]
        %v2182 = vld [vmem:[%s213 + $0x398] sm:$0xff]
        %v2183 = vld [vmem:[%s213 + $0x3a0] sm:$0xff]
        %v2184 = vld [vmem:[%s213 + $0x3a8] sm:$0xff]
        %v2185 = vld [vmem:[%s213 + $0x3b0] sm:$0xff]
        %v2186 = vld [vmem:[%s213 + $0x3b8] sm:$0xff]
        %v2187 = vld [vmem:[%s213 + $0x3c0] sm:$0xff]
        %v2188 = vld [vmem:[%s213 + $0x3c8] sm:$0xff]
        %v2189 = vld [vmem:[%s213 + $0x3d0] sm:$0xff]
        %v2190 = vld [vmem:[%s213 + $0x3d8] sm:$0xff]
        %v2191 = vld [vmem:[%s213 + $0x3e0] sm:$0xff]
        %v2192 = vld [vmem:[%s213 + $0x3e8] sm:$0xff]
        %v2193 = vld [vmem:[%s213 + $0x3f0] sm:$0xff]
        %v2194 = vld [vmem:[%s213 + $0x3f8] sm:$0xff]
        %v2195 = vld [vmem:[%s223] sm:$0xff]
        %v2196 = vld [vmem:[%s223 + $0x8] sm:$0xff]
        %v2197 = vld [vmem:[%s223 + $0x10] sm:$0xff]
        %v2198 = vld [vmem:[%s223 + $0x18] sm:$0xff]
        %v2199 = vld [vmem:[%s223 + $0x20] sm:$0xff]
        %v2200 = vld [vmem:[%s223 + $0x28] sm:$0xff]
        %v2201 = vld [vmem:[%s223 + $0x30] sm:$0xff]
        %v2202 = vld [vmem:[%s223 + $0x38] sm:$0xff]
        %v2203 = vld [vmem:[%s223 + $0x40] sm:$0xff]
        %v2204 = vld [vmem:[%s223 + $0x48] sm:$0xff]
        %v2205 = vld [vmem:[%s223 + $0x50] sm:$0xff]
        %v2206 = vld [vmem:[%s223 + $0x58] sm:$0xff]
        %v2207 = vld [vmem:[%s223 + $0x60] sm:$0xff]
        %v2208 = vld [vmem:[%s223 + $0x68] sm:$0xff]
        %v2209 = vld [vmem:[%s223 + $0x70] sm:$0xff]
        %v2210 = vld [vmem:[%s223 + $0x78] sm:$0xff]
        %v2211 = vld [vmem:[%s223 + $0x80] sm:$0xff]
        %v2212 = vld [vmem:[%s223 + $0x88] sm:$0xff]
        %v2213 = vld [vmem:[%s223 + $0x90] sm:$0xff]
        %v2214 = vld [vmem:[%s223 + $0x98] sm:$0xff]
        %v2215 = vld [vmem:[%s223 + $0xa0] sm:$0xff]
        %v2216 = vld [vmem:[%s223 + $0xa8] sm:$0xff]
        %v2217 = vld [vmem:[%s223 + $0xb0] sm:$0xff]
        %v2218 = vld [vmem:[%s223 + $0xb8] sm:$0xff]
        %v2219 = vld [vmem:[%s223 + $0xc0] sm:$0xff]
        %v2220 = vld [vmem:[%s223 + $0xc8] sm:$0xff]
        %v2221 = vld [vmem:[%s223 + $0xd0] sm:$0xff]
        %v2222 = vld [vmem:[%s223 + $0xd8] sm:$0xff]
        %v2223 = vld [vmem:[%s223 + $0xe0] sm:$0xff]
        %v2224 = vld [vmem:[%s223 + $0xe8] sm:$0xff]
        %v2225 = vld [vmem:[%s223 + $0xf0] sm:$0xff]
        %v2226 = vld [vmem:[%s223 + $0xf8] sm:$0xff]
        %v2227 = vld [vmem:[%s223 + $0x100] sm:$0xff]
        %v2228 = vld [vmem:[%s223 + $0x108] sm:$0xff]
        %v2229 = vld [vmem:[%s223 + $0x110] sm:$0xff]
        %v2230 = vld [vmem:[%s223 + $0x118] sm:$0xff]
        %v2231 = vld [vmem:[%s223 + $0x120] sm:$0xff]
        %v2232 = vld [vmem:[%s223 + $0x128] sm:$0xff]
        %v2233 = vld [vmem:[%s223 + $0x130] sm:$0xff]
        %v2234 = vld [vmem:[%s223 + $0x138] sm:$0xff]
        %v2235 = vld [vmem:[%s223 + $0x140] sm:$0xff]
        %v2236 = vld [vmem:[%s223 + $0x148] sm:$0xff]
        %v2237 = vld [vmem:[%s223 + $0x150] sm:$0xff]
        %v2238 = vld [vmem:[%s223 + $0x158] sm:$0xff]
        %v2239 = vld [vmem:[%s223 + $0x160] sm:$0xff]
        %v2240 = vld [vmem:[%s223 + $0x168] sm:$0xff]
        %v2241 = vld [vmem:[%s223 + $0x170] sm:$0xff]
        %v2242 = vld [vmem:[%s223 + $0x178] sm:$0xff]
        %v2243 = vld [vmem:[%s223 + $0x180] sm:$0xff]
        %v2244 = vld [vmem:[%s223 + $0x188] sm:$0xff]
        %v2245 = vld [vmem:[%s223 + $0x190] sm:$0xff]
        %v2246 = vld [vmem:[%s223 + $0x198] sm:$0xff]
        %v2247 = vld [vmem:[%s223 + $0x1a0] sm:$0xff]
        %v2248 = vld [vmem:[%s223 + $0x1a8] sm:$0xff]
        %v2249 = vld [vmem:[%s223 + $0x1b0] sm:$0xff]
        %v2250 = vld [vmem:[%s223 + $0x1b8] sm:$0xff]
        %v2251 = vld [vmem:[%s223 + $0x1c0] sm:$0xff]
        %v2252 = vld [vmem:[%s223 + $0x1c8] sm:$0xff]
        %v2253 = vld [vmem:[%s223 + $0x1d0] sm:$0xff]
        %v2254 = vld [vmem:[%s223 + $0x1d8] sm:$0xff]
        %v2255 = vld [vmem:[%s223 + $0x1e0] sm:$0xff]
        %v2256 = vld [vmem:[%s223 + $0x1e8] sm:$0xff]
        %v2257 = vld [vmem:[%s223 + $0x1f0] sm:$0xff]
        %v2258 = vld [vmem:[%s223 + $0x1f8] sm:$0xff]
        %v2259 = vld [vmem:[%s223 + $0x200] sm:$0xff]
        %v2260 = vld [vmem:[%s223 + $0x208] sm:$0xff]
        %v2261 = vld [vmem:[%s223 + $0x210] sm:$0xff]
        %v2262 = vld [vmem:[%s223 + $0x218] sm:$0xff]
        %v2263 = vld [vmem:[%s223 + $0x220] sm:$0xff]
        %v2264 = vld [vmem:[%s223 + $0x228] sm:$0xff]
        %v2265 = vld [vmem:[%s223 + $0x230] sm:$0xff]
        %v2266 = vld [vmem:[%s223 + $0x238] sm:$0xff]
        %v2267 = vld [vmem:[%s223 + $0x240] sm:$0xff]
        %v2268 = vld [vmem:[%s223 + $0x248] sm:$0xff]
        %v2269 = vld [vmem:[%s223 + $0x250] sm:$0xff]
        %v2270 = vld [vmem:[%s223 + $0x258] sm:$0xff]
        %v2271 = vld [vmem:[%s223 + $0x260] sm:$0xff]
        %v2272 = vld [vmem:[%s223 + $0x268] sm:$0xff]
        %v2273 = vld [vmem:[%s223 + $0x270] sm:$0xff]
        %v2274 = vld [vmem:[%s223 + $0x278] sm:$0xff]
        %v2275 = vld [vmem:[%s223 + $0x280] sm:$0xff]
        %v2276 = vld [vmem:[%s223 + $0x288] sm:$0xff]
        %v2277 = vld [vmem:[%s223 + $0x290] sm:$0xff]
        %v2278 = vld [vmem:[%s223 + $0x298] sm:$0xff]
        %v2279 = vld [vmem:[%s223 + $0x2a0] sm:$0xff]
        %v2280 = vld [vmem:[%s223 + $0x2a8] sm:$0xff]
        %v2281 = vld [vmem:[%s223 + $0x2b0] sm:$0xff]
        %v2282 = vld [vmem:[%s223 + $0x2b8] sm:$0xff]
        %v2283 = vld [vmem:[%s223 + $0x2c0] sm:$0xff]
        %v2284 = vld [vmem:[%s223 + $0x2c8] sm:$0xff]
        %v2285 = vld [vmem:[%s223 + $0x2d0] sm:$0xff]
        %v2286 = vld [vmem:[%s223 + $0x2d8] sm:$0xff]
        %v2287 = vld [vmem:[%s223 + $0x2e0] sm:$0xff]
        %v2288 = vld [vmem:[%s223 + $0x2e8] sm:$0xff]
        %v2289 = vld [vmem:[%s223 + $0x2f0] sm:$0xff]
        %v2290 = vld [vmem:[%s223 + $0x2f8] sm:$0xff]
        %v2291 = vld [vmem:[%s223 + $0x300] sm:$0xff]
        %v2292 = vld [vmem:[%s223 + $0x308] sm:$0xff]
        %v2293 = vld [vmem:[%s223 + $0x310] sm:$0xff]
        %v2294 = vld [vmem:[%s223 + $0x318] sm:$0xff]
        %v2295 = vld [vmem:[%s223 + $0x320] sm:$0xff]
        %v2296 = vld [vmem:[%s223 + $0x328] sm:$0xff]
        %v2297 = vld [vmem:[%s223 + $0x330] sm:$0xff]
        %v2298 = vld [vmem:[%s223 + $0x338] sm:$0xff]
        %v2299 = vld [vmem:[%s223 + $0x340] sm:$0xff]
        %v2300 = vld [vmem:[%s223 + $0x348] sm:$0xff]
        %v2301 = vld [vmem:[%s223 + $0x350] sm:$0xff]
        %v2302 = vld [vmem:[%s223 + $0x358] sm:$0xff]
        %v2303 = vld [vmem:[%s223 + $0x360] sm:$0xff]
        %v2304 = vld [vmem:[%s223 + $0x368] sm:$0xff]
        %v2305 = vld [vmem:[%s223 + $0x370] sm:$0xff]
        %v2306 = vld [vmem:[%s223 + $0x378] sm:$0xff]
        %v2307 = vld [vmem:[%s223 + $0x380] sm:$0xff]
        %v2308 = vld [vmem:[%s223 + $0x388] sm:$0xff]
        %v2309 = vld [vmem:[%s223 + $0x390] sm:$0xff]
        %v2310 = vld [vmem:[%s223 + $0x398] sm:$0xff]
        %v2311 = vld [vmem:[%s223 + $0x3a0] sm:$0xff]
        %v2312 = vld [vmem:[%s223 + $0x3a8] sm:$0xff]
        %v2313 = vld [vmem:[%s223 + $0x3b0] sm:$0xff]
        %v2314 = vld [vmem:[%s223 + $0x3b8] sm:$0xff]
        %v2315 = vld [vmem:[%s223 + $0x3c0] sm:$0xff]
        %v2316 = vld [vmem:[%s223 + $0x3c8] sm:$0xff]
        %v2317 = vld [vmem:[%s223 + $0x3d0] sm:$0xff]
        %v2318 = vld [vmem:[%s223 + $0x3d8] sm:$0xff]
        %v2319 = vld [vmem:[%s223 + $0x3e0] sm:$0xff]
        %v2320 = vld [vmem:[%s223 + $0x3e8] sm:$0xff]
        %v2321 = vld [vmem:[%s223 + $0x3f0] sm:$0xff]
        %v2322 = vld [vmem:[%s223 + $0x3f8] sm:$0xff]
        %v2323 = vsub.f32 %v2067, %v2195
        %v2324 = vsub.f32 %v2068, %v2196
        %v2325 = vsub.f32 %v2069, %v2197
        %v2326 = vsub.f32 %v2070, %v2198
        %v2327 = vsub.f32 %v2071, %v2199
        %v2328 = vsub.f32 %v2072, %v2200
        %v2329 = vsub.f32 %v2073, %v2201
        %v2330 = vsub.f32 %v2074, %v2202
        %v2331 = vsub.f32 %v2075, %v2203
        %v2332 = vsub.f32 %v2076, %v2204
        %v2333 = vsub.f32 %v2077, %v2205
        %v2334 = vsub.f32 %v2078, %v2206
        %v2335 = vsub.f32 %v2079, %v2207
        %v2336 = vsub.f32 %v2080, %v2208
        %v2337 = vsub.f32 %v2081, %v2209
        %v2338 = vsub.f32 %v2082, %v2210
        %v2339 = vsub.f32 %v2083, %v2211
        %v2340 = vsub.f32 %v2084, %v2212
        %v2341 = vsub.f32 %v2085, %v2213
        %v2342 = vsub.f32 %v2086, %v2214
        %v2343 = vsub.f32 %v2087, %v2215
        %v2344 = vsub.f32 %v2088, %v2216
        %v2345 = vsub.f32 %v2089, %v2217
        %v2346 = vsub.f32 %v2090, %v2218
        %v2347 = vsub.f32 %v2091, %v2219
        %v2348 = vsub.f32 %v2092, %v2220
        %v2349 = vsub.f32 %v2093, %v2221
        %v2350 = vsub.f32 %v2094, %v2222
        %v2351 = vsub.f32 %v2095, %v2223
        %v2352 = vsub.f32 %v2096, %v2224
        %v2353 = vsub.f32 %v2097, %v2225
        %v2354 = vsub.f32 %v2098, %v2226
        %v2355 = vsub.f32 %v2099, %v2227
        %v2356 = vsub.f32 %v2100, %v2228
        %v2357 = vsub.f32 %v2101, %v2229
        %v2358 = vsub.f32 %v2102, %v2230
        %v2359 = vsub.f32 %v2103, %v2231
        %v2360 = vsub.f32 %v2104, %v2232
        %v2361 = vsub.f32 %v2105, %v2233
        %v2362 = vsub.f32 %v2106, %v2234
        %v2363 = vsub.f32 %v2107, %v2235
        %v2364 = vsub.f32 %v2108, %v2236
        %v2365 = vsub.f32 %v2109, %v2237
        %v2366 = vsub.f32 %v2110, %v2238
        %v2367 = vsub.f32 %v2111, %v2239
        %v2368 = vsub.f32 %v2112, %v2240
        %v2369 = vsub.f32 %v2113, %v2241
        %v2370 = vsub.f32 %v2114, %v2242
        %v2371 = vsub.f32 %v2115, %v2243
        %v2372 = vsub.f32 %v2116, %v2244
        %v2373 = vsub.f32 %v2117, %v2245
        %v2374 = vsub.f32 %v2118, %v2246
        %v2375 = vsub.f32 %v2119, %v2247
        %v2376 = vsub.f32 %v2120, %v2248
        %v2377 = vsub.f32 %v2121, %v2249
        %v2378 = vsub.f32 %v2122, %v2250
        %v2379 = vsub.f32 %v2123, %v2251
        %v2380 = vsub.f32 %v2124, %v2252
        %v2381 = vsub.f32 %v2125, %v2253
        %v2382 = vsub.f32 %v2126, %v2254
        %v2383 = vsub.f32 %v2127, %v2255
        %v2384 = vsub.f32 %v2128, %v2256
        %v2385 = vsub.f32 %v2129, %v2257
        %v2386 = vsub.f32 %v2130, %v2258
        %v2387 = vsub.f32 %v2131, %v2259
        %v2388 = vsub.f32 %v2132, %v2260
        %v2389 = vsub.f32 %v2133, %v2261
        %v2390 = vsub.f32 %v2134, %v2262
        %v2391 = vsub.f32 %v2135, %v2263
        %v2392 = vsub.f32 %v2136, %v2264
        %v2393 = vsub.f32 %v2137, %v2265
        %v2394 = vsub.f32 %v2138, %v2266
        %v2395 = vsub.f32 %v2139, %v2267
        %v2396 = vsub.f32 %v2140, %v2268
        %v2397 = vsub.f32 %v2141, %v2269
        %v2398 = vsub.f32 %v2142, %v2270
        %v2399 = vsub.f32 %v2143, %v2271
        %v2400 = vsub.f32 %v2144, %v2272
        %v2401 = vsub.f32 %v2145, %v2273
        %v2402 = vsub.f32 %v2146, %v2274
        %v2403 = vsub.f32 %v2147, %v2275
        %v2404 = vsub.f32 %v2148, %v2276
        %v2405 = vsub.f32 %v2149, %v2277
        %v2406 = vsub.f32 %v2150, %v2278
        %v2407 = vsub.f32 %v2151, %v2279
        %v2408 = vsub.f32 %v2152, %v2280
        %v2409 = vsub.f32 %v2153, %v2281
        %v2410 = vsub.f32 %v2154, %v2282
        %v2411 = vsub.f32 %v2155, %v2283
        %v2412 = vsub.f32 %v2156, %v2284
        %v2413 = vsub.f32 %v2157, %v2285
        %v2414 = vsub.f32 %v2158, %v2286
        %v2415 = vsub.f32 %v2159, %v2287
        %v2416 = vsub.f32 %v2160, %v2288
        %v2417 = vsub.f32 %v2161, %v2289
        %v2418 = vsub.f32 %v2162, %v2290
        %v2419 = vsub.f32 %v2163, %v2291
        %v2420 = vsub.f32 %v2164, %v2292
        %v2421 = vsub.f32 %v2165, %v2293
        %v2422 = vsub.f32 %v2166, %v2294
        %v2423 = vsub.f32 %v2167, %v2295
        %v2424 = vsub.f32 %v2168, %v2296
        %v2425 = vsub.f32 %v2169, %v2297
        %v2426 = vsub.f32 %v2170, %v2298
        %v2427 = vsub.f32 %v2171, %v2299
        %v2428 = vsub.f32 %v2172, %v2300
        %v2429 = vsub.f32 %v2173, %v2301
        %v2430 = vsub.f32 %v2174, %v2302
        %v2431 = vsub.f32 %v2175, %v2303
        %v2432 = vsub.f32 %v2176, %v2304
        %v2433 = vsub.f32 %v2177, %v2305
        %v2434 = vsub.f32 %v2178, %v2306
        %v2435 = vsub.f32 %v2179, %v2307
        %v2436 = vsub.f32 %v2180, %v2308
        %v2437 = vsub.f32 %v2181, %v2309
        %v2438 = vsub.f32 %v2182, %v2310
        %v2439 = vsub.f32 %v2183, %v2311
        %v2440 = vsub.f32 %v2184, %v2312
        %v2441 = vsub.f32 %v2185, %v2313
        %v2442 = vsub.f32 %v2186, %v2314
        %v2443 = vsub.f32 %v2187, %v2315
        %v2444 = vsub.f32 %v2188, %v2316
        %v2445 = vsub.f32 %v2189, %v2317
        %v2446 = vsub.f32 %v2190, %v2318
        %v2447 = vsub.f32 %v2191, %v2319
        %v2448 = vsub.f32 %v2192, %v2320
        %v2449 = vsub.f32 %v2193, %v2321
        %v2450 = vsub.f32 %v2194, %v2322
        %v2451 = vmul.f32 %v2323, %v2323
        %v2452 = vmul.f32 %v2324, %v2324
        %v2453 = vmul.f32 %v2325, %v2325
        %v2454 = vmul.f32 %v2326, %v2326
        %v2455 = vmul.f32 %v2327, %v2327
        %v2456 = vmul.f32 %v2328, %v2328
        %v2457 = vmul.f32 %v2329, %v2329
        %v2458 = vmul.f32 %v2330, %v2330
        %v2459 = vmul.f32 %v2331, %v2331
        %v2460 = vmul.f32 %v2332, %v2332
        %v2461 = vmul.f32 %v2333, %v2333
        %v2462 = vmul.f32 %v2334, %v2334
        %v2463 = vmul.f32 %v2335, %v2335
        %v2464 = vmul.f32 %v2336, %v2336
        %v2465 = vmul.f32 %v2337, %v2337
        %v2466 = vmul.f32 %v2338, %v2338
        %v2467 = vmul.f32 %v2339, %v2339
        %v2468 = vmul.f32 %v2340, %v2340
        %v2469 = vmul.f32 %v2341, %v2341
        %v2470 = vmul.f32 %v2342, %v2342
        %v2471 = vmul.f32 %v2343, %v2343
        %v2472 = vmul.f32 %v2344, %v2344
        %v2473 = vmul.f32 %v2345, %v2345
        %v2474 = vmul.f32 %v2346, %v2346
        %v2475 = vmul.f32 %v2347, %v2347
        %v2476 = vmul.f32 %v2348, %v2348
        %v2477 = vmul.f32 %v2349, %v2349
        %v2478 = vmul.f32 %v2350, %v2350
        %v2479 = vmul.f32 %v2351, %v2351
        %v2480 = vmul.f32 %v2352, %v2352
        %v2481 = vmul.f32 %v2353, %v2353
        %v2482 = vmul.f32 %v2354, %v2354
        %v2483 = vmul.f32 %v2355, %v2355
        %v2484 = vmul.f32 %v2356, %v2356
        %v2485 = vmul.f32 %v2357, %v2357
        %v2486 = vmul.f32 %v2358, %v2358
        %v2487 = vmul.f32 %v2359, %v2359
        %v2488 = vmul.f32 %v2360, %v2360
        %v2489 = vmul.f32 %v2361, %v2361
        %v2490 = vmul.f32 %v2362, %v2362
        %v2491 = vmul.f32 %v2363, %v2363
        %v2492 = vmul.f32 %v2364, %v2364
        %v2493 = vmul.f32 %v2365, %v2365
        %v2494 = vmul.f32 %v2366, %v2366
        %v2495 = vmul.f32 %v2367, %v2367
        %v2496 = vmul.f32 %v2368, %v2368
        %v2497 = vmul.f32 %v2369, %v2369
        %v2498 = vmul.f32 %v2370, %v2370
        %v2499 = vmul.f32 %v2371, %v2371
        %v2500 = vmul.f32 %v2372, %v2372
        %v2501 = vmul.f32 %v2373, %v2373
        %v2502 = vmul.f32 %v2374, %v2374
        %v2503 = vmul.f32 %v2375, %v2375
        %v2504 = vmul.f32 %v2376, %v2376
        %v2505 = vmul.f32 %v2377, %v2377
        %v2506 = vmul.f32 %v2378, %v2378
        %v2507 = vmul.f32 %v2379, %v2379
        %v2508 = vmul.f32 %v2380, %v2380
        %v2509 = vmul.f32 %v2381, %v2381
        %v2510 = vmul.f32 %v2382, %v2382
        %v2511 = vmul.f32 %v2383, %v2383
        %v2512 = vmul.f32 %v2384, %v2384
        %v2513 = vmul.f32 %v2385, %v2385
        %v2514 = vmul.f32 %v2386, %v2386
        %v2515 = vmul.f32 %v2387, %v2387
        %v2516 = vmul.f32 %v2388, %v2388
        %v2517 = vmul.f32 %v2389, %v2389
        %v2518 = vmul.f32 %v2390, %v2390
        %v2519 = vmul.f32 %v2391, %v2391
        %v2520 = vmul.f32 %v2392, %v2392
        %v2521 = vmul.f32 %v2393, %v2393
        %v2522 = vmul.f32 %v2394, %v2394
        %v2523 = vmul.f32 %v2395, %v2395
        %v2524 = vmul.f32 %v2396, %v2396
        %v2525 = vmul.f32 %v2397, %v2397
        %v2526 = vmul.f32 %v2398, %v2398
        %v2527 = vmul.f32 %v2399, %v2399
        %v2528 = vmul.f32 %v2400, %v2400
        %v2529 = vmul.f32 %v2401, %v2401
        %v2530 = vmul.f32 %v2402, %v2402
        %v2531 = vmul.f32 %v2403, %v2403
        %v2532 = vmul.f32 %v2404, %v2404
        %v2533 = vmul.f32 %v2405, %v2405
        %v2534 = vmul.f32 %v2406, %v2406
        %v2535 = vmul.f32 %v2407, %v2407
        %v2536 = vmul.f32 %v2408, %v2408
        %v2537 = vmul.f32 %v2409, %v2409
        %v2538 = vmul.f32 %v2410, %v2410
        %v2539 = vmul.f32 %v2411, %v2411
        %v2540 = vmul.f32 %v2412, %v2412
        %v2541 = vmul.f32 %v2413, %v2413
        %v2542 = vmul.f32 %v2414, %v2414
        %v2543 = vmul.f32 %v2415, %v2415
        %v2544 = vmul.f32 %v2416, %v2416
        %v2545 = vmul.f32 %v2417, %v2417
        %v2546 = vmul.f32 %v2418, %v2418
        %v2547 = vmul.f32 %v2419, %v2419
        %v2548 = vmul.f32 %v2420, %v2420
        %v2549 = vmul.f32 %v2421, %v2421
        %v2550 = vmul.f32 %v2422, %v2422
        %v2551 = vmul.f32 %v2423, %v2423
        %v2552 = vmul.f32 %v2424, %v2424
        %v2553 = vmul.f32 %v2425, %v2425
        %v2554 = vmul.f32 %v2426, %v2426
        %v2555 = vmul.f32 %v2427, %v2427
        %v2556 = vmul.f32 %v2428, %v2428
        %v2557 = vmul.f32 %v2429, %v2429
        %v2558 = vmul.f32 %v2430, %v2430
        %v2559 = vmul.f32 %v2431, %v2431
        %v2560 = vmul.f32 %v2432, %v2432
        %v2561 = vmul.f32 %v2433, %v2433
        %v2562 = vmul.f32 %v2434, %v2434
        %v2563 = vmul.f32 %v2435, %v2435
        %v2564 = vmul.f32 %v2436, %v2436
        %v2565 = vmul.f32 %v2437, %v2437
        %v2566 = vmul.f32 %v2438, %v2438
        %v2567 = vmul.f32 %v2439, %v2439
        %v2568 = vmul.f32 %v2440, %v2440
        %v2569 = vmul.f32 %v2441, %v2441
        %v2570 = vmul.f32 %v2442, %v2442
        %v2571 = vmul.f32 %v2443, %v2443
        %v2572 = vmul.f32 %v2444, %v2444
        %v2573 = vmul.f32 %v2445, %v2445
        %v2574 = vmul.f32 %v2446, %v2446
        %v2575 = vmul.f32 %v2447, %v2447
        %v2576 = vmul.f32 %v2448, %v2448
        %v2577 = vmul.f32 %v2449, %v2449
        %v2578 = vmul.f32 %v2450, %v2450
        %v2579 = vmul.f32 %v1939, %v2451
        %v2580 = vmul.f32 %v1940, %v2452
        %v2581 = vmul.f32 %v1941, %v2453
        %v2582 = vmul.f32 %v1942, %v2454
        %v2583 = vmul.f32 %v1943, %v2455
        %v2584 = vmul.f32 %v1944, %v2456
        %v2585 = vmul.f32 %v1945, %v2457
        %v2586 = vmul.f32 %v1946, %v2458
        %v2587 = vmul.f32 %v1947, %v2459
        %v2588 = vmul.f32 %v1948, %v2460
        %v2589 = vmul.f32 %v1949, %v2461
        %v2590 = vmul.f32 %v1950, %v2462
        %v2591 = vmul.f32 %v1951, %v2463
        %v2592 = vmul.f32 %v1952, %v2464
        %v2593 = vmul.f32 %v1953, %v2465
        %v2594 = vmul.f32 %v1954, %v2466
        %v2595 = vmul.f32 %v1955, %v2467
        %v2596 = vmul.f32 %v1956, %v2468
        %v2597 = vmul.f32 %v1957, %v2469
        %v2598 = vmul.f32 %v1958, %v2470
        %v2599 = vmul.f32 %v1959, %v2471
        %v2600 = vmul.f32 %v1960, %v2472
        %v2601 = vmul.f32 %v1961, %v2473
        %v2602 = vmul.f32 %v1962, %v2474
        %v2603 = vmul.f32 %v1963, %v2475
        %v2604 = vmul.f32 %v1964, %v2476
        %v2605 = vmul.f32 %v1965, %v2477
        %v2606 = vmul.f32 %v1966, %v2478
        %v2607 = vmul.f32 %v1967, %v2479
        %v2608 = vmul.f32 %v1968, %v2480
        %v2609 = vmul.f32 %v1969, %v2481
        %v2610 = vmul.f32 %v1970, %v2482
        %v2611 = vmul.f32 %v1971, %v2483
        %v2612 = vmul.f32 %v1972, %v2484
        %v2613 = vmul.f32 %v1973, %v2485
        %v2614 = vmul.f32 %v1974, %v2486
        %v2615 = vmul.f32 %v1975, %v2487
        %v2616 = vmul.f32 %v1976, %v2488
        %v2617 = vmul.f32 %v1977, %v2489
        %v2618 = vmul.f32 %v1978, %v2490
        %v2619 = vmul.f32 %v1979, %v2491
        %v2620 = vmul.f32 %v1980, %v2492
        %v2621 = vmul.f32 %v1981, %v2493
        %v2622 = vmul.f32 %v1982, %v2494
        %v2623 = vmul.f32 %v1983, %v2495
        %v2624 = vmul.f32 %v1984, %v2496
        %v2625 = vmul.f32 %v1985, %v2497
        %v2626 = vmul.f32 %v1986, %v2498
        %v2627 = vmul.f32 %v1987, %v2499
        %v2628 = vmul.f32 %v1988, %v2500
        %v2629 = vmul.f32 %v1989, %v2501
        %v2630 = vmul.f32 %v1990, %v2502
        %v2631 = vmul.f32 %v1991, %v2503
        %v2632 = vmul.f32 %v1992, %v2504
        %v2633 = vmul.f32 %v1993, %v2505
        %v2634 = vmul.f32 %v1994, %v2506
        %v2635 = vmul.f32 %v1995, %v2507
        %v2636 = vmul.f32 %v1996, %v2508
        %v2637 = vmul.f32 %v1997, %v2509
        %v2638 = vmul.f32 %v1998, %v2510
        %v2639 = vmul.f32 %v1999, %v2511
        %v2640 = vmul.f32 %v2000, %v2512
        %v2641 = vmul.f32 %v2001, %v2513
        %v2642 = vmul.f32 %v2002, %v2514
        %v2643 = vmul.f32 %v2003, %v2515
        %v2644 = vmul.f32 %v2004, %v2516
        %v2645 = vmul.f32 %v2005, %v2517
        %v2646 = vmul.f32 %v2006, %v2518
        %v2647 = vmul.f32 %v2007, %v2519
        %v2648 = vmul.f32 %v2008, %v2520
        %v2649 = vmul.f32 %v2009, %v2521
        %v2650 = vmul.f32 %v2010, %v2522
        %v2651 = vmul.f32 %v2011, %v2523
        %v2652 = vmul.f32 %v2012, %v2524
        %v2653 = vmul.f32 %v2013, %v2525
        %v2654 = vmul.f32 %v2014, %v2526
        %v2655 = vmul.f32 %v2015, %v2527
        %v2656 = vmul.f32 %v2016, %v2528
        %v2657 = vmul.f32 %v2017, %v2529
        %v2658 = vmul.f32 %v2018, %v2530
        %v2659 = vmul.f32 %v2019, %v2531
        %v2660 = vmul.f32 %v2020, %v2532
        %v2661 = vmul.f32 %v2021, %v2533
        %v2662 = vmul.f32 %v2022, %v2534
        %v2663 = vmul.f32 %v2023, %v2535
        %v2664 = vmul.f32 %v2024, %v2536
        %v2665 = vmul.f32 %v2025, %v2537
        %v2666 = vmul.f32 %v2026, %v2538
        %v2667 = vmul.f32 %v2027, %v2539
        %v2668 = vmul.f32 %v2028, %v2540
        %v2669 = vmul.f32 %v2029, %v2541
        %v2670 = vmul.f32 %v2030, %v2542
        %v2671 = vmul.f32 %v2031, %v2543
        %v2672 = vmul.f32 %v2032, %v2544
        %v2673 = vmul.f32 %v2033, %v2545
        %v2674 = vmul.f32 %v2034, %v2546
        %v2675 = vmul.f32 %v2035, %v2547
        %v2676 = vmul.f32 %v2036, %v2548
        %v2677 = vmul.f32 %v2037, %v2549
        %v2678 = vmul.f32 %v2038, %v2550
        %v2679 = vmul.f32 %v2039, %v2551
        %v2680 = vmul.f32 %v2040, %v2552
        %v2681 = vmul.f32 %v2041, %v2553
        %v2682 = vmul.f32 %v2042, %v2554
        %v2683 = vmul.f32 %v2043, %v2555
        %v2684 = vmul.f32 %v2044, %v2556
        %v2685 = vmul.f32 %v2045, %v2557
        %v2686 = vmul.f32 %v2046, %v2558
        %v2687 = vmul.f32 %v2047, %v2559
        %v2688 = vmul.f32 %v2048, %v2560
        %v2689 = vmul.f32 %v2049, %v2561
        %v2690 = vmul.f32 %v2050, %v2562
        %v2691 = vmul.f32 %v2051, %v2563
        %v2692 = vmul.f32 %v2052, %v2564
        %v2693 = vmul.f32 %v2053, %v2565
        %v2694 = vmul.f32 %v2054, %v2566
        %v2695 = vmul.f32 %v2055, %v2567
        %v2696 = vmul.f32 %v2056, %v2568
        %v2697 = vmul.f32 %v2057, %v2569
        %v2698 = vmul.f32 %v2058, %v2570
        %v2699 = vmul.f32 %v2059, %v2571
        %v2700 = vmul.f32 %v2060, %v2572
        %v2701 = vmul.f32 %v2061, %v2573
        %v2702 = vmul.f32 %v2062, %v2574
        %v2703 = vmul.f32 %v2063, %v2575
        %v2704 = vmul.f32 %v2064, %v2576
        %v2705 = vmul.f32 %v2065, %v2577
        %v2706 = vmul.f32 %v2066, %v2578
        %v2707 = vsel %vm1683, 1, 0
        %v2708 = vsel %vm1684, 1, 0
        %v2709 = vsel %vm1685, 1, 0
        %v2710 = vsel %vm1686, 1, 0
        %v2711 = vsel %vm1687, 1, 0
        %v2712 = vsel %vm1688, 1, 0
        %v2713 = vsel %vm1689, 1, 0
        %v2714 = vsel %vm1690, 1, 0
        %v2715 = vsel %vm1691, 1, 0
        %v2716 = vsel %vm1692, 1, 0
        %v2717 = vsel %vm1693, 1, 0
        %v2718 = vsel %vm1694, 1, 0
        %v2719 = vsel %vm1695, 1, 0
        %v2720 = vsel %vm1696, 1, 0
        %v2721 = vsel %vm1697, 1, 0
        %v2722 = vsel %vm1698, 1, 0
        %v2723 = vsel %vm1699, 1, 0
        %v2724 = vsel %vm1700, 1, 0
        %v2725 = vsel %vm1701, 1, 0
        %v2726 = vsel %vm1702, 1, 0
        %v2727 = vsel %vm1703, 1, 0
        %v2728 = vsel %vm1704, 1, 0
        %v2729 = vsel %vm1705, 1, 0
        %v2730 = vsel %vm1706, 1, 0
        %v2731 = vsel %vm1707, 1, 0
        %v2732 = vsel %vm1708, 1, 0
        %v2733 = vsel %vm1709, 1, 0
        %v2734 = vsel %vm1710, 1, 0
        %v2735 = vsel %vm1711, 1, 0
        %v2736 = vsel %vm1712, 1, 0
        %v2737 = vsel %vm1713, 1, 0
        %v2738 = vsel %vm1714, 1, 0
        %v2739 = vsel %vm1715, 1, 0
        %v2740 = vsel %vm1716, 1, 0
        %v2741 = vsel %vm1717, 1, 0
        %v2742 = vsel %vm1718, 1, 0
        %v2743 = vsel %vm1719, 1, 0
        %v2744 = vsel %vm1720, 1, 0
        %v2745 = vsel %vm1721, 1, 0
        %v2746 = vsel %vm1722, 1, 0
        %v2747 = vsel %vm1723, 1, 0
        %v2748 = vsel %vm1724, 1, 0
        %v2749 = vsel %vm1725, 1, 0
        %v2750 = vsel %vm1726, 1, 0
        %v2751 = vsel %vm1727, 1, 0
        %v2752 = vsel %vm1728, 1, 0
        %v2753 = vsel %vm1729, 1, 0
        %v2754 = vsel %vm1730, 1, 0
        %v2755 = vsel %vm1731, 1, 0
        %v2756 = vsel %vm1732, 1, 0
        %v2757 = vsel %vm1733, 1, 0
        %v2758 = vsel %vm1734, 1, 0
        %v2759 = vsel %vm1735, 1, 0
        %v2760 = vsel %vm1736, 1, 0
        %v2761 = vsel %vm1737, 1, 0
        %v2762 = vsel %vm1738, 1, 0
        %v2763 = vsel %vm1739, 1, 0
        %v2764 = vsel %vm1740, 1, 0
        %v2765 = vsel %vm1741, 1, 0
        %v2766 = vsel %vm1742, 1, 0
        %v2767 = vsel %vm1743, 1, 0
        %v2768 = vsel %vm1744, 1, 0
        %v2769 = vsel %vm1745, 1, 0
        %v2770 = vsel %vm1746, 1, 0
        %v2771 = vsel %vm1747, 1, 0
        %v2772 = vsel %vm1748, 1, 0
        %v2773 = vsel %vm1749, 1, 0
        %v2774 = vsel %vm1750, 1, 0
        %v2775 = vsel %vm1751, 1, 0
        %v2776 = vsel %vm1752, 1, 0
        %v2777 = vsel %vm1753, 1, 0
        %v2778 = vsel %vm1754, 1, 0
        %v2779 = vsel %vm1755, 1, 0
        %v2780 = vsel %vm1756, 1, 0
        %v2781 = vsel %vm1757, 1, 0
        %v2782 = vsel %vm1758, 1, 0
        %v2783 = vsel %vm1759, 1, 0
        %v2784 = vsel %vm1760, 1, 0
        %v2785 = vsel %vm1761, 1, 0
        %v2786 = vsel %vm1762, 1, 0
        %v2787 = vsel %vm1763, 1, 0
        %v2788 = vsel %vm1764, 1, 0
        %v2789 = vsel %vm1765, 1, 0
        %v2790 = vsel %vm1766, 1, 0
        %v2791 = vsel %vm1767, 1, 0
        %v2792 = vsel %vm1768, 1, 0
        %v2793 = vsel %vm1769, 1, 0
        %v2794 = vsel %vm1770, 1, 0
        %v2795 = vsel %vm1771, 1, 0
        %v2796 = vsel %vm1772, 1, 0
        %v2797 = vsel %vm1773, 1, 0
        %v2798 = vsel %vm1774, 1, 0
        %v2799 = vsel %vm1775, 1, 0
        %v2800 = vsel %vm1776, 1, 0
        %v2801 = vsel %vm1777, 1, 0
        %v2802 = vsel %vm1778, 1, 0
        %v2803 = vsel %vm1779, 1, 0
        %v2804 = vsel %vm1780, 1, 0
        %v2805 = vsel %vm1781, 1, 0
        %v2806 = vsel %vm1782, 1, 0
        %v2807 = vsel %vm1783, 1, 0
        %v2808 = vsel %vm1784, 1, 0
        %v2809 = vsel %vm1785, 1, 0
        %v2810 = vsel %vm1786, 1, 0
        %v2811 = vsel %vm1787, 1, 0
        %v2812 = vsel %vm1788, 1, 0
        %v2813 = vsel %vm1789, 1, 0
        %v2814 = vsel %vm1790, 1, 0
        %v2815 = vsel %vm1791, 1, 0
        %v2816 = vsel %vm1792, 1, 0
        %v2817 = vsel %vm1793, 1, 0
        %v2818 = vsel %vm1794, 1, 0
        %v2819 = vsel %vm1795, 1, 0
        %v2820 = vsel %vm1796, 1, 0
        %v2821 = vsel %vm1797, 1, 0
        %v2822 = vsel %vm1798, 1, 0
        %v2823 = vsel %vm1799, 1, 0
        %v2824 = vsel %vm1800, 1, 0
        %v2825 = vsel %vm1801, 1, 0
        %v2826 = vsel %vm1802, 1, 0
        %v2827 = vsel %vm1803, 1, 0
        %v2828 = vsel %vm1804, 1, 0
        %v2829 = vsel %vm1805, 1, 0
        %v2830 = vsel %vm1806, 1, 0
        %v2831 = vsel %vm1807, 1, 0
        %v2832 = vsel %vm1808, 1, 0
        %v2833 = vsel %vm1809, 1, 0
        %v2834 = vsel %vm1810, 1, 0
        %vm2835 = vcmp.eq.s32.totalorder %v2707, 1
        %vm2836 = vcmp.eq.s32.totalorder %v2708, 1
        %vm2837 = vcmp.eq.s32.totalorder %v2709, 1
        %vm2838 = vcmp.eq.s32.totalorder %v2710, 1
        %vm2839 = vcmp.eq.s32.totalorder %v2711, 1
        %vm2840 = vcmp.eq.s32.totalorder %v2712, 1
        %vm2841 = vcmp.eq.s32.totalorder %v2713, 1
        %vm2842 = vcmp.eq.s32.totalorder %v2714, 1
        %vm2843 = vcmp.eq.s32.totalorder %v2715, 1
        %vm2844 = vcmp.eq.s32.totalorder %v2716, 1
        %vm2845 = vcmp.eq.s32.totalorder %v2717, 1
        %vm2846 = vcmp.eq.s32.totalorder %v2718, 1
        %vm2847 = vcmp.eq.s32.totalorder %v2719, 1
        %vm2848 = vcmp.eq.s32.totalorder %v2720, 1
        %vm2849 = vcmp.eq.s32.totalorder %v2721, 1
        %vm2850 = vcmp.eq.s32.totalorder %v2722, 1
        %vm2851 = vcmp.eq.s32.totalorder %v2723, 1
        %vm2852 = vcmp.eq.s32.totalorder %v2724, 1
        %vm2853 = vcmp.eq.s32.totalorder %v2725, 1
        %vm2854 = vcmp.eq.s32.totalorder %v2726, 1
        %vm2855 = vcmp.eq.s32.totalorder %v2727, 1
        %vm2856 = vcmp.eq.s32.totalorder %v2728, 1
        %vm2857 = vcmp.eq.s32.totalorder %v2729, 1
        %vm2858 = vcmp.eq.s32.totalorder %v2730, 1
        %vm2859 = vcmp.eq.s32.totalorder %v2731, 1
        %vm2860 = vcmp.eq.s32.totalorder %v2732, 1
        %vm2861 = vcmp.eq.s32.totalorder %v2733, 1
        %vm2862 = vcmp.eq.s32.totalorder %v2734, 1
        %vm2863 = vcmp.eq.s32.totalorder %v2735, 1
        %vm2864 = vcmp.eq.s32.totalorder %v2736, 1
        %vm2865 = vcmp.eq.s32.totalorder %v2737, 1
        %vm2866 = vcmp.eq.s32.totalorder %v2738, 1
        %vm2867 = vcmp.eq.s32.totalorder %v2739, 1
        %vm2868 = vcmp.eq.s32.totalorder %v2740, 1
        %vm2869 = vcmp.eq.s32.totalorder %v2741, 1
        %vm2870 = vcmp.eq.s32.totalorder %v2742, 1
        %vm2871 = vcmp.eq.s32.totalorder %v2743, 1
        %vm2872 = vcmp.eq.s32.totalorder %v2744, 1
        %vm2873 = vcmp.eq.s32.totalorder %v2745, 1
        %vm2874 = vcmp.eq.s32.totalorder %v2746, 1
        %vm2875 = vcmp.eq.s32.totalorder %v2747, 1
        %vm2876 = vcmp.eq.s32.totalorder %v2748, 1
        %vm2877 = vcmp.eq.s32.totalorder %v2749, 1
        %vm2878 = vcmp.eq.s32.totalorder %v2750, 1
        %vm2879 = vcmp.eq.s32.totalorder %v2751, 1
        %vm2880 = vcmp.eq.s32.totalorder %v2752, 1
        %vm2881 = vcmp.eq.s32.totalorder %v2753, 1
        %vm2882 = vcmp.eq.s32.totalorder %v2754, 1
        %vm2883 = vcmp.eq.s32.totalorder %v2755, 1
        %vm2884 = vcmp.eq.s32.totalorder %v2756, 1
        %vm2885 = vcmp.eq.s32.totalorder %v2757, 1
        %vm2886 = vcmp.eq.s32.totalorder %v2758, 1
        %vm2887 = vcmp.eq.s32.totalorder %v2759, 1
        %vm2888 = vcmp.eq.s32.totalorder %v2760, 1
        %vm2889 = vcmp.eq.s32.totalorder %v2761, 1
        %vm2890 = vcmp.eq.s32.totalorder %v2762, 1
        %vm2891 = vcmp.eq.s32.totalorder %v2763, 1
        %vm2892 = vcmp.eq.s32.totalorder %v2764, 1
        %vm2893 = vcmp.eq.s32.totalorder %v2765, 1
        %vm2894 = vcmp.eq.s32.totalorder %v2766, 1
        %vm2895 = vcmp.eq.s32.totalorder %v2767, 1
        %vm2896 = vcmp.eq.s32.totalorder %v2768, 1
        %vm2897 = vcmp.eq.s32.totalorder %v2769, 1
        %vm2898 = vcmp.eq.s32.totalorder %v2770, 1
        %vm2899 = vcmp.eq.s32.totalorder %v2771, 1
        %vm2900 = vcmp.eq.s32.totalorder %v2772, 1
        %vm2901 = vcmp.eq.s32.totalorder %v2773, 1
        %vm2902 = vcmp.eq.s32.totalorder %v2774, 1
        %vm2903 = vcmp.eq.s32.totalorder %v2775, 1
        %vm2904 = vcmp.eq.s32.totalorder %v2776, 1
        %vm2905 = vcmp.eq.s32.totalorder %v2777, 1
        %vm2906 = vcmp.eq.s32.totalorder %v2778, 1
        %vm2907 = vcmp.eq.s32.totalorder %v2779, 1
        %vm2908 = vcmp.eq.s32.totalorder %v2780, 1
        %vm2909 = vcmp.eq.s32.totalorder %v2781, 1
        %vm2910 = vcmp.eq.s32.totalorder %v2782, 1
        %vm2911 = vcmp.eq.s32.totalorder %v2783, 1
        %vm2912 = vcmp.eq.s32.totalorder %v2784, 1
        %vm2913 = vcmp.eq.s32.totalorder %v2785, 1
        %vm2914 = vcmp.eq.s32.totalorder %v2786, 1
        %vm2915 = vcmp.eq.s32.totalorder %v2787, 1
        %vm2916 = vcmp.eq.s32.totalorder %v2788, 1
        %vm2917 = vcmp.eq.s32.totalorder %v2789, 1
        %vm2918 = vcmp.eq.s32.totalorder %v2790, 1
        %vm2919 = vcmp.eq.s32.totalorder %v2791, 1
        %vm2920 = vcmp.eq.s32.totalorder %v2792, 1
        %vm2921 = vcmp.eq.s32.totalorder %v2793, 1
        %vm2922 = vcmp.eq.s32.totalorder %v2794, 1
        %vm2923 = vcmp.eq.s32.totalorder %v2795, 1
        %vm2924 = vcmp.eq.s32.totalorder %v2796, 1
        %vm2925 = vcmp.eq.s32.totalorder %v2797, 1
        %vm2926 = vcmp.eq.s32.totalorder %v2798, 1
        %vm2927 = vcmp.eq.s32.totalorder %v2799, 1
        %vm2928 = vcmp.eq.s32.totalorder %v2800, 1
        %vm2929 = vcmp.eq.s32.totalorder %v2801, 1
        %vm2930 = vcmp.eq.s32.totalorder %v2802, 1
        %vm2931 = vcmp.eq.s32.totalorder %v2803, 1
        %vm2932 = vcmp.eq.s32.totalorder %v2804, 1
        %vm2933 = vcmp.eq.s32.totalorder %v2805, 1
        %vm2934 = vcmp.eq.s32.totalorder %v2806, 1
        %vm2935 = vcmp.eq.s32.totalorder %v2807, 1
        %vm2936 = vcmp.eq.s32.totalorder %v2808, 1
        %vm2937 = vcmp.eq.s32.totalorder %v2809, 1
        %vm2938 = vcmp.eq.s32.totalorder %v2810, 1
        %vm2939 = vcmp.eq.s32.totalorder %v2811, 1
        %vm2940 = vcmp.eq.s32.totalorder %v2812, 1
        %vm2941 = vcmp.eq.s32.totalorder %v2813, 1
        %vm2942 = vcmp.eq.s32.totalorder %v2814, 1
        %vm2943 = vcmp.eq.s32.totalorder %v2815, 1
        %vm2944 = vcmp.eq.s32.totalorder %v2816, 1
        %vm2945 = vcmp.eq.s32.totalorder %v2817, 1
        %vm2946 = vcmp.eq.s32.totalorder %v2818, 1
        %vm2947 = vcmp.eq.s32.totalorder %v2819, 1
        %vm2948 = vcmp.eq.s32.totalorder %v2820, 1
        %vm2949 = vcmp.eq.s32.totalorder %v2821, 1
        %vm2950 = vcmp.eq.s32.totalorder %v2822, 1
        %vm2951 = vcmp.eq.s32.totalorder %v2823, 1
        %vm2952 = vcmp.eq.s32.totalorder %v2824, 1
        %vm2953 = vcmp.eq.s32.totalorder %v2825, 1
        %vm2954 = vcmp.eq.s32.totalorder %v2826, 1
        %vm2955 = vcmp.eq.s32.totalorder %v2827, 1
        %vm2956 = vcmp.eq.s32.totalorder %v2828, 1
        %vm2957 = vcmp.eq.s32.totalorder %v2829, 1
        %vm2958 = vcmp.eq.s32.totalorder %v2830, 1
        %vm2959 = vcmp.eq.s32.totalorder %v2831, 1
        %vm2960 = vcmp.eq.s32.totalorder %v2832, 1
        %vm2961 = vcmp.eq.s32.totalorder %v2833, 1
        %vm2962 = vcmp.eq.s32.totalorder %v2834, 1
        %v2963 = vsel %vm2835, %v2579, 0.0
        %v2964 = vsel %vm2836, %v2580, 0.0
        %v2965 = vsel %vm2837, %v2581, 0.0
        %v2966 = vsel %vm2838, %v2582, 0.0
        %v2967 = vsel %vm2839, %v2583, 0.0
        %v2968 = vsel %vm2840, %v2584, 0.0
        %v2969 = vsel %vm2841, %v2585, 0.0
        %v2970 = vsel %vm2842, %v2586, 0.0
        %v2971 = vsel %vm2843, %v2587, 0.0
        %v2972 = vsel %vm2844, %v2588, 0.0
        %v2973 = vsel %vm2845, %v2589, 0.0
        %v2974 = vsel %vm2846, %v2590, 0.0
        %v2975 = vsel %vm2847, %v2591, 0.0
        %v2976 = vsel %vm2848, %v2592, 0.0
        %v2977 = vsel %vm2849, %v2593, 0.0
        %v2978 = vsel %vm2850, %v2594, 0.0
        %v2979 = vsel %vm2851, %v2595, 0.0
        %v2980 = vsel %vm2852, %v2596, 0.0
        %v2981 = vsel %vm2853, %v2597, 0.0
        %v2982 = vsel %vm2854, %v2598, 0.0
        %v2983 = vsel %vm2855, %v2599, 0.0
        %v2984 = vsel %vm2856, %v2600, 0.0
        %v2985 = vsel %vm2857, %v2601, 0.0
        %v2986 = vsel %vm2858, %v2602, 0.0
        %v2987 = vsel %vm2859, %v2603, 0.0
        %v2988 = vsel %vm2860, %v2604, 0.0
        %v2989 = vsel %vm2861, %v2605, 0.0
        %v2990 = vsel %vm2862, %v2606, 0.0
        %v2991 = vsel %vm2863, %v2607, 0.0
        %v2992 = vsel %vm2864, %v2608, 0.0
        %v2993 = vsel %vm2865, %v2609, 0.0
        %v2994 = vsel %vm2866, %v2610, 0.0
        %v2995 = vsel %vm2867, %v2611, 0.0
        %v2996 = vsel %vm2868, %v2612, 0.0
        %v2997 = vsel %vm2869, %v2613, 0.0
        %v2998 = vsel %vm2870, %v2614, 0.0
        %v2999 = vsel %vm2871, %v2615, 0.0
        %v3000 = vsel %vm2872, %v2616, 0.0
        %v3001 = vsel %vm2873, %v2617, 0.0
        %v3002 = vsel %vm2874, %v2618, 0.0
        %v3003 = vsel %vm2875, %v2619, 0.0
        %v3004 = vsel %vm2876, %v2620, 0.0
        %v3005 = vsel %vm2877, %v2621, 0.0
        %v3006 = vsel %vm2878, %v2622, 0.0
        %v3007 = vsel %vm2879, %v2623, 0.0
        %v3008 = vsel %vm2880, %v2624, 0.0
        %v3009 = vsel %vm2881, %v2625, 0.0
        %v3010 = vsel %vm2882, %v2626, 0.0
        %v3011 = vsel %vm2883, %v2627, 0.0
        %v3012 = vsel %vm2884, %v2628, 0.0
        %v3013 = vsel %vm2885, %v2629, 0.0
        %v3014 = vsel %vm2886, %v2630, 0.0
        %v3015 = vsel %vm2887, %v2631, 0.0
        %v3016 = vsel %vm2888, %v2632, 0.0
        %v3017 = vsel %vm2889, %v2633, 0.0
        %v3018 = vsel %vm2890, %v2634, 0.0
        %v3019 = vsel %vm2891, %v2635, 0.0
        %v3020 = vsel %vm2892, %v2636, 0.0
        %v3021 = vsel %vm2893, %v2637, 0.0
        %v3022 = vsel %vm2894, %v2638, 0.0
        %v3023 = vsel %vm2895, %v2639, 0.0
        %v3024 = vsel %vm2896, %v2640, 0.0
        %v3025 = vsel %vm2897, %v2641, 0.0
        %v3026 = vsel %vm2898, %v2642, 0.0
        %v3027 = vsel %vm2899, %v2643, 0.0
        %v3028 = vsel %vm2900, %v2644, 0.0
        %v3029 = vsel %vm2901, %v2645, 0.0
        %v3030 = vsel %vm2902, %v2646, 0.0
        %v3031 = vsel %vm2903, %v2647, 0.0
        %v3032 = vsel %vm2904, %v2648, 0.0
        %v3033 = vsel %vm2905, %v2649, 0.0
        %v3034 = vsel %vm2906, %v2650, 0.0
        %v3035 = vsel %vm2907, %v2651, 0.0
        %v3036 = vsel %vm2908, %v2652, 0.0
        %v3037 = vsel %vm2909, %v2653, 0.0
        %v3038 = vsel %vm2910, %v2654, 0.0
        %v3039 = vsel %vm2911, %v2655, 0.0
        %v3040 = vsel %vm2912, %v2656, 0.0
        %v3041 = vsel %vm2913, %v2657, 0.0
        %v3042 = vsel %vm2914, %v2658, 0.0
        %v3043 = vsel %vm2915, %v2659, 0.0
        %v3044 = vsel %vm2916, %v2660, 0.0
        %v3045 = vsel %vm2917, %v2661, 0.0
        %v3046 = vsel %vm2918, %v2662, 0.0
        %v3047 = vsel %vm2919, %v2663, 0.0
        %v3048 = vsel %vm2920, %v2664, 0.0
        %v3049 = vsel %vm2921, %v2665, 0.0
        %v3050 = vsel %vm2922, %v2666, 0.0
        %v3051 = vsel %vm2923, %v2667, 0.0
        %v3052 = vsel %vm2924, %v2668, 0.0
        %v3053 = vsel %vm2925, %v2669, 0.0
        %v3054 = vsel %vm2926, %v2670, 0.0
        %v3055 = vsel %vm2927, %v2671, 0.0
        %v3056 = vsel %vm2928, %v2672, 0.0
        %v3057 = vsel %vm2929, %v2673, 0.0
        %v3058 = vsel %vm2930, %v2674, 0.0
        %v3059 = vsel %vm2931, %v2675, 0.0
        %v3060 = vsel %vm2932, %v2676, 0.0
        %v3061 = vsel %vm2933, %v2677, 0.0
        %v3062 = vsel %vm2934, %v2678, 0.0
        %v3063 = vsel %vm2935, %v2679, 0.0
        %v3064 = vsel %vm2936, %v2680, 0.0
        %v3065 = vsel %vm2937, %v2681, 0.0
        %v3066 = vsel %vm2938, %v2682, 0.0
        %v3067 = vsel %vm2939, %v2683, 0.0
        %v3068 = vsel %vm2940, %v2684, 0.0
        %v3069 = vsel %vm2941, %v2685, 0.0
        %v3070 = vsel %vm2942, %v2686, 0.0
        %v3071 = vsel %vm2943, %v2687, 0.0
        %v3072 = vsel %vm2944, %v2688, 0.0
        %v3073 = vsel %vm2945, %v2689, 0.0
        %v3074 = vsel %vm2946, %v2690, 0.0
        %v3075 = vsel %vm2947, %v2691, 0.0
        %v3076 = vsel %vm2948, %v2692, 0.0
        %v3077 = vsel %vm2949, %v2693, 0.0
        %v3078 = vsel %vm2950, %v2694, 0.0
        %v3079 = vsel %vm2951, %v2695, 0.0
        %v3080 = vsel %vm2952, %v2696, 0.0
        %v3081 = vsel %vm2953, %v2697, 0.0
        %v3082 = vsel %vm2954, %v2698, 0.0
        %v3083 = vsel %vm2955, %v2699, 0.0
        %v3084 = vsel %vm2956, %v2700, 0.0
        %v3085 = vsel %vm2957, %v2701, 0.0
        %v3086 = vsel %vm2958, %v2702, 0.0
        %v3087 = vsel %vm2959, %v2703, 0.0
        %v3088 = vsel %vm2960, %v2704, 0.0
        %v3089 = vsel %vm2961, %v2705, 0.0
        %v3090 = vsel %vm2962, %v2706, 0.0
        %v3091 = vld [vmem:[%s249] sm:$0xff]
        %v3092 = vadd.f32 %v2963, %v2964
        %v3093 = vadd.f32 %v3092, %v2965
        %v3094 = vadd.f32 %v3093, %v2966
        %v3095 = vadd.f32 %v3094, %v2967
        %v3096 = vadd.f32 %v3095, %v2968
        %v3097 = vadd.f32 %v3096, %v2969
        %v3098 = vadd.f32 %v3097, %v2970
        %v3099 = vadd.f32 %v3098, %v2971
        %v3100 = vadd.f32 %v3099, %v2972
        %v3101 = vadd.f32 %v3100, %v2973
        %v3102 = vadd.f32 %v3101, %v2974
        %v3103 = vadd.f32 %v3102, %v2975
        %v3104 = vadd.f32 %v3103, %v2976
        %v3105 = vadd.f32 %v3104, %v2977
        %v3106 = vadd.f32 %v3105, %v2978
        %v3107 = vadd.f32 %v3106, %v2979
        %v3108 = vadd.f32 %v3107, %v2980
        %v3109 = vadd.f32 %v3108, %v2981
        %v3110 = vadd.f32 %v3109, %v2982
        %v3111 = vadd.f32 %v3110, %v2983
        %v3112 = vadd.f32 %v3111, %v2984
        %v3113 = vadd.f32 %v3112, %v2985
        %v3114 = vadd.f32 %v3113, %v2986
        %v3115 = vadd.f32 %v3114, %v2987
        %v3116 = vadd.f32 %v3115, %v2988
        %v3117 = vadd.f32 %v3116, %v2989
        %v3118 = vadd.f32 %v3117, %v2990
        %v3119 = vadd.f32 %v3118, %v2991
        %v3120 = vadd.f32 %v3119, %v2992
        %v3121 = vadd.f32 %v3120, %v2993
        %v3122 = vadd.f32 %v3121, %v2994
        %v3123 = vadd.f32 %v3122, %v2995
        %v3124 = vadd.f32 %v3123, %v2996
        %v3125 = vadd.f32 %v3124, %v2997
        %v3126 = vadd.f32 %v3125, %v2998
        %v3127 = vadd.f32 %v3126, %v2999
        %v3128 = vadd.f32 %v3127, %v3000
        %v3129 = vadd.f32 %v3128, %v3001
        %v3130 = vadd.f32 %v3129, %v3002
        %v3131 = vadd.f32 %v3130, %v3003
        %v3132 = vadd.f32 %v3131, %v3004
        %v3133 = vadd.f32 %v3132, %v3005
        %v3134 = vadd.f32 %v3133, %v3006
        %v3135 = vadd.f32 %v3134, %v3007
        %v3136 = vadd.f32 %v3135, %v3008
        %v3137 = vadd.f32 %v3136, %v3009
        %v3138 = vadd.f32 %v3137, %v3010
        %v3139 = vadd.f32 %v3138, %v3011
        %v3140 = vadd.f32 %v3139, %v3012
        %v3141 = vadd.f32 %v3140, %v3013
        %v3142 = vadd.f32 %v3141, %v3014
        %v3143 = vadd.f32 %v3142, %v3015
        %v3144 = vadd.f32 %v3143, %v3016
        %v3145 = vadd.f32 %v3144, %v3017
        %v3146 = vadd.f32 %v3145, %v3018
        %v3147 = vadd.f32 %v3146, %v3019
        %v3148 = vadd.f32 %v3147, %v3020
        %v3149 = vadd.f32 %v3148, %v3021
        %v3150 = vadd.f32 %v3149, %v3022
        %v3151 = vadd.f32 %v3150, %v3023
        %v3152 = vadd.f32 %v3151, %v3024
        %v3153 = vadd.f32 %v3152, %v3025
        %v3154 = vadd.f32 %v3153, %v3026
        %v3155 = vadd.f32 %v3154, %v3027
        %v3156 = vadd.f32 %v3155, %v3028
        %v3157 = vadd.f32 %v3156, %v3029
        %v3158 = vadd.f32 %v3157, %v3030
        %v3159 = vadd.f32 %v3158, %v3031
        %v3160 = vadd.f32 %v3159, %v3032
        %v3161 = vadd.f32 %v3160, %v3033
        %v3162 = vadd.f32 %v3161, %v3034
        %v3163 = vadd.f32 %v3162, %v3035
        %v3164 = vadd.f32 %v3163, %v3036
        %v3165 = vadd.f32 %v3164, %v3037
        %v3166 = vadd.f32 %v3165, %v3038
        %v3167 = vadd.f32 %v3166, %v3039
        %v3168 = vadd.f32 %v3167, %v3040
        %v3169 = vadd.f32 %v3168, %v3041
        %v3170 = vadd.f32 %v3169, %v3042
        %v3171 = vadd.f32 %v3170, %v3043
        %v3172 = vadd.f32 %v3171, %v3044
        %v3173 = vadd.f32 %v3172, %v3045
        %v3174 = vadd.f32 %v3173, %v3046
        %v3175 = vadd.f32 %v3174, %v3047
        %v3176 = vadd.f32 %v3175, %v3048
        %v3177 = vadd.f32 %v3176, %v3049
        %v3178 = vadd.f32 %v3177, %v3050
        %v3179 = vadd.f32 %v3178, %v3051
        %v3180 = vadd.f32 %v3179, %v3052
        %v3181 = vadd.f32 %v3180, %v3053
        %v3182 = vadd.f32 %v3181, %v3054
        %v3183 = vadd.f32 %v3182, %v3055
        %v3184 = vadd.f32 %v3183, %v3056
        %v3185 = vadd.f32 %v3184, %v3057
        %v3186 = vadd.f32 %v3185, %v3058
        %v3187 = vadd.f32 %v3186, %v3059
        %v3188 = vadd.f32 %v3187, %v3060
        %v3189 = vadd.f32 %v3188, %v3061
        %v3190 = vadd.f32 %v3189, %v3062
        %v3191 = vadd.f32 %v3190, %v3063
        %v3192 = vadd.f32 %v3191, %v3064
        %v3193 = vadd.f32 %v3192, %v3065
        %v3194 = vadd.f32 %v3193, %v3066
        %v3195 = vadd.f32 %v3194, %v3067
        %v3196 = vadd.f32 %v3195, %v3068
        %v3197 = vadd.f32 %v3196, %v3069
        %v3198 = vadd.f32 %v3197, %v3070
        %v3199 = vadd.f32 %v3198, %v3071
        %v3200 = vadd.f32 %v3199, %v3072
        %v3201 = vadd.f32 %v3200, %v3073
        %v3202 = vadd.f32 %v3201, %v3074
        %v3203 = vadd.f32 %v3202, %v3075
        %v3204 = vadd.f32 %v3203, %v3076
        %v3205 = vadd.f32 %v3204, %v3077
        %v3206 = vadd.f32 %v3205, %v3078
        %v3207 = vadd.f32 %v3206, %v3079
        %v3208 = vadd.f32 %v3207, %v3080
        %v3209 = vadd.f32 %v3208, %v3081
        %v3210 = vadd.f32 %v3209, %v3082
        %v3211 = vadd.f32 %v3210, %v3083
        %v3212 = vadd.f32 %v3211, %v3084
        %v3213 = vadd.f32 %v3212, %v3085
        %v3214 = vadd.f32 %v3213, %v3086
        %v3215 = vadd.f32 %v3214, %v3087
        %v3216 = vadd.f32 %v3215, %v3088
        %v3217 = vadd.f32 %v3216, %v3089
        %v3218 = vadd.f32 %v3217, %v3090
        %v3219 = vadd.f32 %v3091, %v3218
        %3220 = vst [vmem:[%s249] sm:$0xff] %v3219
        %s3221 = sand.u32 %s106, 1
        %s3222 = scalar_lea.sflag [#allocation4], %s3221
        %s3223 = sand.u32 %s106, 1
        %s3224 = smul.addr %s3223, 8
        %s3225 = scalar_lea.vmem [#allocation7], %s3224
        // Predicated region
        $region41: #{tpu_custom_call.1} parent=27 // pred_check
          %p3226 = pneg %p116
        $region42: #{tpu_custom_call.1} parent=27 // pred_check_branch
          %3228 = sbr.rel (%p3226) target = $region44
        $region43: #{tpu_custom_call.1} parent=27 // pred_region
          %3230 = vsyncadd %s3222, 0
          %s3231 = smul.addr %s26, 8
          %s3232 = scalar_lea.hbm %s2, %s3231
          %s3234 = sshll.u32 %s3225, 4
          %s3235 = int_to_ptr.vmem [resolvable:$true] %s3234
          %s3236 = sshll.u32 %s3232, 4
          %s3237 = int_to_ptr.hbm [resolvable:$true] %s3236
          %3239 = dma.vmem_to_hbm [thread:$0]  %s3235, 128, %s3237, %s3222
        $region44: #{tpu_custom_call.1} parent=27 // pred_fallthru
          _
      $region28: #{tpu_custom_call.1} parent=5 // pred_fallthru
        _
      %p3240 = scmp.le.s32.totalorder 2, %s17
      // Predicated region
      $region45: #{tpu_custom_call.1} parent=5 // pred_check
        %p3241 = pneg %p3240
      $region46: #{tpu_custom_call.1} parent=5 // pred_check_branch
        %3243 = sbr.rel (%p3241) target = $region48
      $region47: #{tpu_custom_call.1} parent=5 // pred_region
        %s3244 = ssub.s32 %s17, 2
        // Predicated region
        $region49: #{tpu_custom_call.1} parent=47 // pred_check
          %p3245 = pneg %p122
        $region50: #{tpu_custom_call.1} parent=47 // pred_check_branch
          %3247 = sbr.rel (%p3245) target = $region52
        $region51: #{tpu_custom_call.1} parent=47 // pred_region
          %s3248 = sand.u32 %s107, 1
          %s3249 = scalar_lea.sflag [#allocation4], %s3248
          %s3250 = sand.u32 %s107, 1
          %s3251 = smul.addr %s3250, 8
          %s3252 = scalar_lea.vmem [#allocation7], %s3251
          %3254 = dma.done %s3249, 128
        $region52: #{tpu_custom_call.1} parent=47 // pred_fallthru
          _
      $region48: #{tpu_custom_call.1} parent=5 // pred_fallthru
        _
    $region6: #{tpu_custom_call.1} parent=1 // loop_footer
      %s21 = sadd.s32 1, %s17
    $region7: #{tpu_custom_call.1} parent=1 // loop_footer_branch
      %16 = sbr.rel target = $region3
    $region8: #{tpu_custom_call.1} parent=1 // loop_exit
      _
    %3255 = vsyncpa [#allocation3], 1
    %s3256 = scalar_lea.sflag [#allocation3], 1
    %3257 = vsyncpa %s3256, 1
    %3258 = vsyncpa [#allocation6], 1
    %s3259 = scalar_lea.sflag [#allocation6], 1
    %3260 = vsyncpa %s3259, 1
    %3261 = vsyncpa [#allocation4], 1
    %s3262 = scalar_lea.sflag [#allocation4], 1
    %3263 = vsyncpa %s3262, 1

</llo_original>
